<compile_context>
chip_gen: v7x
topology: tpu7x:2x2x1
jax: 0.10.0
libtpu: 0.0.40
codegen_flags: <defaults>
</compile_context>

<pallas_src>
import functools

import jax
import jax.numpy as jnp
from jax import lax
from jax.experimental import pallas as pl
from jax.experimental.pallas import tpu as pltpu


_SLACK_ROWS = 8  # spare rows in the expanded-tile scratch (see kernel comment)


# ----------------------------- fused kernel ----------------------------------


def _fused_kernel(x_ref, w1_ref, sh1_ref, w2_ref, sh2_ref, w3_ref, sh3_ref,
                  o_ref, e_ref, *, stride, tile_h, Wp, Wo, add_residual):
    """expand(1x1)+BN+ReLU6 -> depthwise(3x3)+BN+ReLU6 -> project(1x1)+BN [+res].

    x_ref : (1, Hp*Wp, Cin)  padded input image, spatial flattened (resident
                             across the row-tile grid axis, channels-last)
    w*_ref: folded conv weights (BN scale already multiplied in)
    sh*_ref: per-channel additive shifts (folded BN bias)
    o_ref : (1, Cout, tile_h*cols)  channels-major (flattened-NCHW) output tile
    e_ref : VMEM scratch for the expanded tile, (rows*Wp + slack, Cexp) f32
    """
    s = stride
    Cexp = w1_ref.shape[1]
    HpWp = x_ref.shape[1]
    Hp = HpWp // Wp
    rows = (tile_h - 1) * s + 3          # padded input rows covered by tile
    step = tile_h * s * Wp               # flat stride between row tiles

    # ---- load this tile's padded-input window ------------------------------
    if rows * Wp == HpWp:                # one tile per image: fully static
        win0 = 0
        xw = x_ref[0]
    else:
        win0 = pl.program_id(1) * step
        if step % 8 == 0:
            win0 = pl.multiple_of(win0, 8)
        xw = x_ref[0, pl.ds(win0, rows * Wp), :]
    xw = xw.astype(jnp.float32)          # (rows*Wp, Cin)

    # ---- stage 1: 1x1 expand (BN scale folded into w1) + shift + ReLU6 ------
    e = jnp.dot(xw, w1_ref[...], preferred_element_type=jnp.float32)
    e = jnp.clip(e + sh1_ref[...], 0.0, 6.0)

    # Re-impose the depthwise zero-padding ring in-kernel (expand(0) != 0, so
    # the ring must be exactly zero again).  Row test is a plain compare on the
    # flat index; column test uses an exact float floor-divide (values < 2^24),
    # so only iota / mul / floor / compare / select VPU ops are needed.
    flat_i = lax.broadcasted_iota(jnp.int32, (rows * Wp, 1), 0) + win0
    flat_f = flat_i.astype(jnp.float32)
    row_f = jnp.floor((flat_f + 0.5) * (1.0 / Wp))
    col_f = flat_f - row_f * Wp
    interior = ((flat_i >= Wp) & (flat_i < (Hp - 1) * Wp)
                & (col_f > 0.5) & (col_f < Wp - 1.5))
    e = jnp.where(interior, e, 0.0)

    e_ref[0:rows * Wp, :] = e
    # Keep the slack rows zero: stride-1 shifted tap reads run up to 2 entries
    # past rows*Wp; those products only land in discarded (junk) columns, but
    # the reads must stay deterministic.  (Invariant: rewritten every step.)
    e_ref[rows * Wp:rows * Wp + _SLACK_ROWS, :] = jnp.zeros(
        (_SLACK_ROWS, Cexp), jnp.float32)

    if s == 1:
        # ---- stage 2: depthwise 3x3 as 9 dense shifted reads over the slab --
        L = tile_h * Wp
        acc = jnp.zeros((L, Cexp), jnp.float32)
        for ki in range(3):
            for kj in range(3):
                off = ki * Wp + kj
                k = ki * 3 + kj
                acc = acc + e_ref[off:off + L, :] * w2_ref[k:k + 1, :]
        z = jnp.clip(acc + sh2_ref[...], 0.0, 6.0)

        # ---- stage 3: 1x1 project + shift [+ residual], ONE dense store -----
        y = jnp.dot(z, w3_ref[...], preferred_element_type=jnp.float32)
        y = y + sh3_ref[...]                                      # (L, Cout)
        if add_residual:
            # residual rows already sit inside the loaded window: one shifted
            # dense read, added on the VPU in f32 (exact).
            y = y + xw[Wp + 1:Wp + 1 + L, :]
        # lane-dense channels-major store (tiny XLU transpose of (L, Cout))
        o_ref[0] = jnp.transpose(y, (1, 0)).astype(o_ref.dtype)
    else:
        # ---- generic stride (>1): strided taps per row, single projection ---
        taps = [jnp.broadcast_to(w2_ref[k:k + 1, :], (Wo, Cexp))
                for k in range(9)]                   # hoisted tap broadcasts
        z_rows = []
        for r in range(tile_h):
            acc = jnp.zeros((Wo, Cexp), jnp.float32)
            for ki in range(3):
                for kj in range(3):
                    start = (r * s + ki) * Wp + kj
                    acc = acc + e_ref[pl.ds(start, Wo, s), :] * taps[ki * 3 + kj]
            z_rows.append(acc)
        z = jnp.clip(jnp.concatenate(z_rows, axis=0) + sh2_ref[...], 0.0, 6.0)
        y = jnp.dot(z, w3_ref[...], preferred_element_type=jnp.float32)
        y = y + sh3_ref[...]                                      # (tile_h*Wo, Cout)
        # no residual possible when stride != 1
        o_ref[0] = jnp.transpose(y, (1, 0)).astype(o_ref.dtype)


# ----------------------------- wrapper ---------------------------------------


def _ceil_to(v, m):
    return -(-v // m) * m


def _vmem_block_bytes(shape, itemsize=4):
    """VMEM footprint of one block, with (8,128) sublane/lane padding."""
    s = [int(d) for d in shape]
    if len(s) == 1:
        s = [1] + s
    lanes = _ceil_to(s[-1], 128)
    subl = _ceil_to(s[-2], 8)
    lead = 1
    for d in s[:-2]:
        lead *= d
    return lead * subl * lanes * itemsize


def _pick_tile_h(Ho, Wp, cols, Cexp, stride, budget_bytes=6 * 1024 * 1024):
    """Largest row tile whose expanded scratch fits the budget and whose output
    block keeps the lane dim either a multiple of 128 or the full row extent
    (hard BlockSpec (8,128) rule)."""
    lane_bytes = _ceil_to(max(Cexp, 1), 128) * 4
    for t in range(Ho, 0, -1):
        if Ho % t:
            continue
        rows = (t - 1) * stride + 3
        if (rows * Wp + _SLACK_ROWS) * lane_bytes > budget_bytes:
            continue
        if t == Ho or (t * cols) % 128 == 0:
            return t
    return Ho  # fall back: one tile per image is always spec-legal


def linear_bottleneck_forward(x_nchw, params, *, stride, in_channels,
                              out_channels):
    """Pallas implementation of LinearBottleNeck.forward (NCHW in / NCHW out)."""
    # TODO(synk): fuse this input transpose + pad (both on the small Cin
    # tensor) into the kernel for real MobileNet activation sizes.
    x = jnp.transpose(x_nchw, (0, 2, 3, 1))                      # NHWC
    N, H, W, Cin = x.shape
    Cexp = params["w1f"].shape[1]
    Cout = params["w3f"].shape[1]

    xp = jnp.pad(x, ((0, 0), (1, 1), (1, 1), (0, 0)))
    Hp, Wp = H + 2, W + 2
    Ho = (Hp - 3) // stride + 1
    Wo = (Wp - 3) // stride + 1
    xp_flat = xp.reshape(N, Hp * Wp, Cin)                        # free reshape

    add_residual = (stride == 1 and in_channels == out_channels)
    # stride==1 stores the full Wp-wide slab (2 junk cols/row, cropped below);
    # stride>1 stores compact Wo-wide rows.
    cols = Wp if stride == 1 else Wo
    tile_h = _pick_tile_h(Ho, Wp, cols, Cexp, stride)
    n_h = Ho // tile_h
    rows = (tile_h - 1) * stride + 3

    kernel = functools.partial(_fused_kernel, stride=stride, tile_h=tile_h,
                               Wp=Wp, Wo=Wo, add_residual=add_residual)

    # Explicit VMEM budget from actual block sizes (double-buffered), clamped
    # to v7x's 32 MiB scoped default.
    est = (2 * _vmem_block_bytes((1, Hp * Wp, Cin))
           + 2 * _vmem_block_bytes((1, Cout, tile_h * cols))
           + 2 * sum(_vmem_block_bytes(s) for s in
                     ((Cin, Cexp), (1, Cexp), (9, Cexp), (1, Cexp),
                      (Cexp, Cout), (1, Cout)))
           + _vmem_block_bytes((rows * Wp + _SLACK_ROWS, Cexp)))
    vmem_limit = int(min(32 * 1024 * 1024, max(8 * 1024 * 1024, 4 * est)))

    out_cm = pl.pallas_call(
        kernel,
        out_shape=jax.ShapeDtypeStruct((N, Cout, Ho * cols), x.dtype),
        grid=(N, n_h),
        in_specs=[
            # padded input image: resident across the row-tile axis
            pl.BlockSpec((1, Hp * Wp, Cin), lambda n, th: (n, 0, 0)),
            # folded weights / shifts: resident across the whole grid
            pl.BlockSpec((Cin, Cexp), lambda n, th: (0, 0)),
            pl.BlockSpec((1, Cexp), lambda n, th: (0, 0)),
            pl.BlockSpec((9, Cexp), lambda n, th: (0, 0)),
            pl.BlockSpec((1, Cexp), lambda n, th: (0, 0)),
            pl.BlockSpec((Cexp, Cout), lambda n, th: (0, 0)),
            pl.BlockSpec((1, Cout), lambda n, th: (0, 0)),
        ],
        # lane-dense channels-major output block (flattened NCHW)
        out_specs=pl.BlockSpec((1, Cout, tile_h * cols),
                               lambda n, th: (n, 0, th)),
        scratch_shapes=[
            pltpu.VMEM((rows * Wp + _SLACK_ROWS, Cexp), jnp.float32)],
        compiler_params=pltpu.CompilerParams(
            dimension_semantics=("parallel", "parallel"),
            vmem_limit_bytes=vmem_limit),
    )(xp_flat, params["w1f"], params["sh1"], params["w2f"], params["sh2"],
      params["w3f"], params["sh3"])

    out = out_cm.reshape(N, Cout, Ho, cols)
    if stride == 1:
        out = out[:, :, :, :Wo]          # crop the 2 junk columns per row
    return out                            # already NCHW


# ----------------------------- parameters -------------------------------------


def fold_bn(conv_bias, gamma, beta, mean, var, eps=1e-5):
    scale = gamma / jnp.sqrt(var + eps)
    shift = scale * (conv_bias - mean) + beta
    return scale, shift


def fold_params(raw, eps=1e-5):
    """Fold eval-mode BatchNorm into the conv weights (scale) and shifts."""
    (w1, b1, g1, bb1), (w2, b2, g2, bb2), (w3, b3, g3, bb3) = raw
    Cexp = w1.shape[0]
    Cout = w3.shape[0]
    rm_e, rv_e = jnp.zeros((Cexp,)), jnp.ones((Cexp,))
    rm_o, rv_o = jnp.zeros((Cout,)), jnp.ones((Cout,))
    s1, sh1 = fold_bn(b1, g1, bb1, rm_e, rv_e, eps)
    s2, sh2 = fold_bn(b2, g2, bb2, rm_e, rv_e, eps)
    s3, sh3 = fold_bn(b3, g3, bb3, rm_o, rv_o, eps)
    w1_2d = jnp.transpose(w1[:, :, 0, 0], (1, 0))                  # (Cin, Cexp)
    w2_taps = jnp.transpose(w2[:, 0], (1, 2, 0)).reshape(9, Cexp)  # (9, Cexp)
    w3_2d = jnp.transpose(w3[:, :, 0, 0], (1, 0))                  # (Cexp, Cout)
    return {
        "w1f": w1_2d * s1[None, :], "sh1": sh1.reshape(1, Cexp),
        "w2f": w2_taps * s2[None, :], "sh2": sh2.reshape(1, Cexp),
        "w3f": w3_2d * s3[None, :], "sh3": sh3.reshape(1, Cout),
    }


def make_raw_params(key, Cin, Cout, t):
    Cexp = Cin * t
    k = jax.random.split(key, 12)
    w1 = 0.1 * jax.random.normal(k[0], (Cexp, Cin, 1, 1), jnp.float32)
    b1 = 0.1 * jax.random.normal(k[1], (Cexp,), jnp.float32)
    g1 = 1.0 + 0.1 * jax.random.normal(k[2], (Cexp,), jnp.float32)
    bb1 = 0.1 * jax.random.normal(k[3], (Cexp,), jnp.float32)
    w2 = 0.1 * jax.random.normal(k[4], (Cexp, 1, 3, 3), jnp.float32)
    b2 = 0.1 * jax.random.normal(k[5], (Cexp,), jnp.float32)
    g2 = 1.0 + 0.1 * jax.random.normal(k[6], (Cexp,), jnp.float32)
    bb2 = 0.1 * jax.random.normal(k[7], (Cexp,), jnp.float32)
    w3 = 0.1 * jax.random.normal(k[8], (Cout, Cexp, 1, 1), jnp.float32)
    b3 = 0.1 * jax.random.normal(k[9], (Cout,), jnp.float32)
    g3 = 1.0 + 0.1 * jax.random.normal(k[10], (Cout,), jnp.float32)
    bb3 = 0.1 * jax.random.normal(k[11], (Cout,), jnp.float32)
    return ((w1, b1, g1, bb1), (w2, b2, g2, bb2), (w3, b3, g3, bb3))


# ----------------------------- reference (pure JAX) ---------------------------


def ref_forward(x, raw, *, stride, in_channels, out_channels, eps=1e-5):
    (w1, b1, g1, bb1), (w2, b2, g2, bb2), (w3, b3, g3, bb3) = raw

    def bn(y, gamma, beta):
        return gamma[None, :, None, None] * y / jnp.sqrt(1.0 + eps) \
            + beta[None, :, None, None]

    dn = ("NCHW", "OIHW", "NCHW")
    y = lax.conv_general_dilated(x, w1, (1, 1), "VALID", dimension_numbers=dn,
                                 precision=lax.Precision.HIGHEST)
    y = bn(y + b1[None, :, None, None], g1, bb1)
    y = jnp.clip(y, 0.0, 6.0)

    y = lax.conv_general_dilated(y, w2, (stride, stride), ((1, 1), (1, 1)),
                                 dimension_numbers=dn,
                                 feature_group_count=w2.shape[0],
                                 precision=lax.Precision.HIGHEST)
    y = bn(y + b2[None, :, None, None], g2, bb2)
    y = jnp.clip(y, 0.0, 6.0)

    y = lax.conv_general_dilated(y, w3, (1, 1), "VALID", dimension_numbers=dn,
                                 precision=lax.Precision.HIGHEST)
    y = bn(y + b3[None, :, None, None], g3, bb3)
    if stride == 1 and in_channels == out_channels:
        y = y + x
    return y


# ----------------------------- main -------------------------------------------


if __name__ == "__main__":
    cases = [
        # (name, N, Cin, H, W, stride, t, Cout)
        ("stride1_residual", 2, 4, 16, 16, 1, 6, 4),
        ("stride1_project", 2, 4, 16, 16, 1, 6, 8),
        ("stride2_downsample", 2, 4, 16, 16, 2, 6, 8),
    ]
    root = jax.random.PRNGKey(0)
    for name, N, Cin, H, W, stride, t, Cout in cases:
        root, kx, kp = jax.random.split(root, 3)
        x = jax.random.normal(kx, (N, Cin, H, W), jnp.float32)
        raw = make_raw_params(kp, Cin, Cout, t)
        p = fold_params(raw)

        out = linear_bottleneck_forward(x, p, stride=stride,
                                        in_channels=Cin, out_channels=Cout)
        out = jax.block_until_ready(out)

        ref = ref_forward(x, raw, stride=stride, in_channels=Cin,
                          out_channels=Cout)
        ref = jax.block_until_ready(ref)

        assert out.shape == (N, Cout, H // stride, W // stride), \
            (name, out.shape)
        # kernel matmuls use default MXU precision vs HIGHEST in the reference
        assert jnp.allclose(out, ref, atol=2e-3, rtol=2e-3), \
            (name, float(jnp.max(jnp.abs(out - ref))))
    print("KERNEL_OK")
</pallas_src>

<mosaic_0001>
module attributes {stable_mosaic.version = 11 : i64} {
  func.func @_fused_kernel(%arg0: i32, %arg1: i32, %arg2: memref<1x324x4xf32, #tpu.memory_space<vmem>>, %arg3: memref<4x24xf32, #tpu.memory_space<vmem>>, %arg4: memref<1x24xf32, #tpu.memory_space<vmem>>, %arg5: memref<9x24xf32, #tpu.memory_space<vmem>>, %arg6: memref<1x24xf32, #tpu.memory_space<vmem>>, %arg7: memref<24x4xf32, #tpu.memory_space<vmem>>, %arg8: memref<1x4xf32, #tpu.memory_space<vmem>>, %arg9: memref<1x4x288xf32, #tpu.memory_space<vmem>>, %arg10: memref<332x24xf32, #tpu.memory_space<vmem>>) attributes {dimension_semantics = [#tpu.dimension_semantics<parallel>, #tpu.dimension_semantics<parallel>], iteration_bounds = array<i64: 2, 1>, scalar_prefetch = 0 : i64, scratch_operands = 1 : i64, tpu.core_type = #tpu.core_type<tc>, window_params = [{transform_indices = @transform_0, window_bounds = array<i64: 1, 324, 4>}, {pipeline_mode = #tpu.pipeline_mode<synchronous>, transform_indices = @transform_1, window_bounds = array<i64: 4, 24>}, {pipeline_mode = #tpu.pipeline_mode<synchronous>, transform_indices = @transform_2, window_bounds = array<i64: 1, 24>}, {pipeline_mode = #tpu.pipeline_mode<synchronous>, transform_indices = @transform_3, window_bounds = array<i64: 9, 24>}, {pipeline_mode = #tpu.pipeline_mode<synchronous>, transform_indices = @transform_4, window_bounds = array<i64: 1, 24>}, {pipeline_mode = #tpu.pipeline_mode<synchronous>, transform_indices = @transform_5, window_bounds = array<i64: 24, 4>}, {pipeline_mode = #tpu.pipeline_mode<synchronous>, transform_indices = @transform_6, window_bounds = array<i64: 1, 4>}, {transform_indices = @transform_7, window_bounds = array<i64: 1, 4, 288>}]} {
    %c0 = arith.constant 0 : index
    %c0_0 = arith.constant 0 : index
    %c0_1 = arith.constant 0 : index
    %0 = vector.load %arg2[%c0, %c0_0, %c0_1] : memref<1x324x4xf32, #tpu.memory_space<vmem>>, vector<1x324x4xf32>
    %1 = vector.shape_cast %0 : vector<1x324x4xf32> to vector<324x4xf32>
    %c0_2 = arith.constant 0 : index
    %c0_3 = arith.constant 0 : index
    %2 = vector.load %arg3[%c0_2, %c0_3] : memref<4x24xf32, #tpu.memory_space<vmem>>, vector<4x24xf32>
    %cst = arith.constant dense<0.000000e+00> : vector<324x24xf32>
    %3 = tpu.matmul %1, %2, %cst {dimension_numbers = #tpu.dot_dimension_numbers<[1], [0], [0], [1], [0, 0, 1, 1], [], []>} : vector<324x4xf32>, vector<4x24xf32>, vector<324x24xf32> -> vector<324x24xf32>
    %c0_4 = arith.constant 0 : index
    %c0_5 = arith.constant 0 : index
    %4 = vector.load %arg4[%c0_4, %c0_5] : memref<1x24xf32, #tpu.memory_space<vmem>>, vector<1x24xf32>
    %5 = vector.broadcast %4 : vector<1x24xf32> to vector<324x24xf32>
    %6 = arith.addf %3, %5 : vector<324x24xf32>
    %cst_6 = arith.constant 0.000000e+00 : f32
    %cst_7 = arith.constant 6.000000e+00 : f32
    %7 = vector.broadcast %cst_6 : f32 to vector<324x24xf32>
    %8 = arith.maximumf %7, %6 : vector<324x24xf32>
    %9 = vector.broadcast %cst_7 : f32 to vector<324x24xf32>
    %10 = arith.minimumf %9, %8 : vector<324x24xf32>
    %11 = tpu.iota {dimensions = array<i32: 0>} : vector<324x1xi32>
    %c0_i32 = arith.constant 0 : i32
    %12 = vector.broadcast %c0_i32 : i32 to vector<324x1xi32>
    %13 = arith.addi %11, %12 : vector<324x1xi32>
    %14 = arith.sitofp %13 : vector<324x1xi32> to vector<324x1xf32>
    %cst_8 = arith.constant 5.000000e-01 : f32
    %15 = vector.broadcast %cst_8 : f32 to vector<324x1xf32>
    %16 = arith.addf %14, %15 : vector<324x1xf32>
    %cst_9 = arith.constant 0.055555556 : f32
    %17 = vector.broadcast %cst_9 : f32 to vector<324x1xf32>
    %18 = arith.mulf %16, %17 : vector<324x1xf32>
    %19 = math.floor %18 : vector<324x1xf32>
    %cst_10 = arith.constant 1.800000e+01 : f32
    %20 = vector.broadcast %cst_10 : f32 to vector<324x1xf32>
    %21 = arith.mulf %19, %20 : vector<324x1xf32>
    %22 = arith.subf %14, %21 : vector<324x1xf32>
    %c18_i32 = arith.constant 18 : i32
    %23 = vector.broadcast %c18_i32 : i32 to vector<324x1xi32>
    %24 = arith.cmpi sge, %13, %23 : vector<324x1xi32>
    %c306_i32 = arith.constant 306 : i32
    %25 = vector.broadcast %c306_i32 : i32 to vector<324x1xi32>
    %26 = arith.cmpi slt, %13, %25 : vector<324x1xi32>
    %27 = arith.andi %24, %26 : vector<324x1xi1>
    %cst_11 = arith.constant 5.000000e-01 : f32
    %28 = vector.broadcast %cst_11 : f32 to vector<324x1xf32>
    %29 = arith.cmpf ogt, %22, %28 : vector<324x1xf32>
    %30 = arith.andi %27, %29 : vector<324x1xi1>
    %cst_12 = arith.constant 1.650000e+01 : f32
    %31 = vector.broadcast %cst_12 : f32 to vector<324x1xf32>
    %32 = arith.cmpf olt, %22, %31 : vector<324x1xf32>
    %33 = arith.andi %30, %32 : vector<324x1xi1>
    %cst_13 = arith.constant 0.000000e+00 : f32
    %34 = vector.shape_cast %33 : vector<324x1xi1> to vector<324x1xi1>
    %35 = vector.broadcast %34 : vector<324x1xi1> to vector<324x24xi1>
    %36 = vector.broadcast %cst_13 : f32 to vector<324x24xf32>
    %37 = arith.select %35, %10, %36 : vector<324x24xi1>, vector<324x24xf32>
    %c0_14 = arith.constant 0 : index
    %c0_15 = arith.constant 0 : index
    %38 = vector.load %arg10[%c0_14, %c0_15] : memref<332x24xf32, #tpu.memory_space<vmem>>, vector<324x24xf32>
    tpu.vector_store %arg10[%c0_14, %c0_15], %37 {strides = array<i32>} : memref<332x24xf32, #tpu.memory_space<vmem>>, vector<324x24xf32>,
    %cst_16 = arith.constant 0.000000e+00 : f32
    %39 = vector.broadcast %cst_16 : f32 to vector<8x24xf32>
    %c324 = arith.constant 324 : index
    %c0_17 = arith.constant 0 : index
    %40 = vector.load %arg10[%c324, %c0_17] : memref<332x24xf32, #tpu.memory_space<vmem>>, vector<8x24xf32>
    tpu.vector_store %arg10[%c324, %c0_17], %39 {strides = array<i32>} : memref<332x24xf32, #tpu.memory_space<vmem>>, vector<8x24xf32>,
    %cst_18 = arith.constant 0.000000e+00 : f32
    %41 = vector.broadcast %cst_18 : f32 to vector<288x24xf32>
    %c0_19 = arith.constant 0 : index
    %c0_20 = arith.constant 0 : index
    %42 = vector.load %arg10[%c0_19, %c0_20] : memref<332x24xf32, #tpu.memory_space<vmem>>, vector<288x24xf32>
    %c0_21 = arith.constant 0 : index
    %c0_22 = arith.constant 0 : index
    %43 = vector.load %arg5[%c0_21, %c0_22] : memref<9x24xf32, #tpu.memory_space<vmem>>, vector<1x24xf32>
    %44 = vector.broadcast %43 : vector<1x24xf32> to vector<288x24xf32>
    %45 = arith.mulf %42, %44 : vector<288x24xf32>
    %46 = arith.addf %41, %45 : vector<288x24xf32>
    %c1 = arith.constant 1 : index
    %c0_23 = arith.constant 0 : index
    %47 = vector.load %arg10[%c1, %c0_23] : memref<332x24xf32, #tpu.memory_space<vmem>>, vector<288x24xf32>
    %c1_24 = arith.constant 1 : index
    %c0_25 = arith.constant 0 : index
    %48 = vector.load %arg5[%c1_24, %c0_25] : memref<9x24xf32, #tpu.memory_space<vmem>>, vector<1x24xf32>
    %49 = vector.broadcast %48 : vector<1x24xf32> to vector<288x24xf32>
    %50 = arith.mulf %47, %49 : vector<288x24xf32>
    %51 = arith.addf %46, %50 : vector<288x24xf32>
    %c2 = arith.constant 2 : index
    %c0_26 = arith.constant 0 : index
    %52 = vector.load %arg10[%c2, %c0_26] : memref<332x24xf32, #tpu.memory_space<vmem>>, vector<288x24xf32>
    %c2_27 = arith.constant 2 : index
    %c0_28 = arith.constant 0 : index
    %53 = vector.load %arg5[%c2_27, %c0_28] : memref<9x24xf32, #tpu.memory_space<vmem>>, vector<1x24xf32>
    %54 = vector.broadcast %53 : vector<1x24xf32> to vector<288x24xf32>
    %55 = arith.mulf %52, %54 : vector<288x24xf32>
    %56 = arith.addf %51, %55 : vector<288x24xf32>
    %c18 = arith.constant 18 : index
    %c0_29 = arith.constant 0 : index
    %57 = vector.load %arg10[%c18, %c0_29] : memref<332x24xf32, #tpu.memory_space<vmem>>, vector<288x24xf32>
    %c3 = arith.constant 3 : index
    %c0_30 = arith.constant 0 : index
    %58 = vector.load %arg5[%c3, %c0_30] : memref<9x24xf32, #tpu.memory_space<vmem>>, vector<1x24xf32>
    %59 = vector.broadcast %58 : vector<1x24xf32> to vector<288x24xf32>
    %60 = arith.mulf %57, %59 : vector<288x24xf32>
    %61 = arith.addf %56, %60 : vector<288x24xf32>
    %c19 = arith.constant 19 : index
    %c0_31 = arith.constant 0 : index
    %62 = vector.load %arg10[%c19, %c0_31] : memref<332x24xf32, #tpu.memory_space<vmem>>, vector<288x24xf32>
    %c4 = arith.constant 4 : index
    %c0_32 = arith.constant 0 : index
    %63 = vector.load %arg5[%c4, %c0_32] : memref<9x24xf32, #tpu.memory_space<vmem>>, vector<1x24xf32>
    %64 = vector.broadcast %63 : vector<1x24xf32> to vector<288x24xf32>
    %65 = arith.mulf %62, %64 : vector<288x24xf32>
    %66 = arith.addf %61, %65 : vector<288x24xf32>
    %c20 = arith.constant 20 : index
    %c0_33 = arith.constant 0 : index
    %67 = vector.load %arg10[%c20, %c0_33] : memref<332x24xf32, #tpu.memory_space<vmem>>, vector<288x24xf32>
    %c5 = arith.constant 5 : index
    %c0_34 = arith.constant 0 : index
    %68 = vector.load %arg5[%c5, %c0_34] : memref<9x24xf32, #tpu.memory_space<vmem>>, vector<1x24xf32>
    %69 = vector.broadcast %68 : vector<1x24xf32> to vector<288x24xf32>
    %70 = arith.mulf %67, %69 : vector<288x24xf32>
    %71 = arith.addf %66, %70 : vector<288x24xf32>
    %c36 = arith.constant 36 : index
    %c0_35 = arith.constant 0 : index
    %72 = vector.load %arg10[%c36, %c0_35] : memref<332x24xf32, #tpu.memory_space<vmem>>, vector<288x24xf32>
    %c6 = arith.constant 6 : index
    %c0_36 = arith.constant 0 : index
    %73 = vector.load %arg5[%c6, %c0_36] : memref<9x24xf32, #tpu.memory_space<vmem>>, vector<1x24xf32>
    %74 = vector.broadcast %73 : vector<1x24xf32> to vector<288x24xf32>
    %75 = arith.mulf %72, %74 : vector<288x24xf32>
    %76 = arith.addf %71, %75 : vector<288x24xf32>
    %c37 = arith.constant 37 : index
    %c0_37 = arith.constant 0 : index
    %77 = vector.load %arg10[%c37, %c0_37] : memref<332x24xf32, #tpu.memory_space<vmem>>, vector<288x24xf32>
    %c7 = arith.constant 7 : index
    %c0_38 = arith.constant 0 : index
    %78 = vector.load %arg5[%c7, %c0_38] : memref<9x24xf32, #tpu.memory_space<vmem>>, vector<1x24xf32>
    %79 = vector.broadcast %78 : vector<1x24xf32> to vector<288x24xf32>
    %80 = arith.mulf %77, %79 : vector<288x24xf32>
    %81 = arith.addf %76, %80 : vector<288x24xf32>
    %c38 = arith.constant 38 : index
    %c0_39 = arith.constant 0 : index
    %82 = vector.load %arg10[%c38, %c0_39] : memref<332x24xf32, #tpu.memory_space<vmem>>, vector<288x24xf32>
    %c8 = arith.constant 8 : index
    %c0_40 = arith.constant 0 : index
    %83 = vector.load %arg5[%c8, %c0_40] : memref<9x24xf32, #tpu.memory_space<vmem>>, vector<1x24xf32>
    %84 = vector.broadcast %83 : vector<1x24xf32> to vector<288x24xf32>
    %85 = arith.mulf %82, %84 : vector<288x24xf32>
    %86 = arith.addf %81, %85 : vector<288x24xf32>
    %c0_41 = arith.constant 0 : index
    %c0_42 = arith.constant 0 : index
    %87 = vector.load %arg6[%c0_41, %c0_42] : memref<1x24xf32, #tpu.memory_space<vmem>>, vector<1x24xf32>
    %88 = vector.broadcast %87 : vector<1x24xf32> to vector<288x24xf32>
    %89 = arith.addf %86, %88 : vector<288x24xf32>
    %cst_43 = arith.constant 0.000000e+00 : f32
    %cst_44 = arith.constant 6.000000e+00 : f32
    %90 = vector.broadcast %cst_43 : f32 to vector<288x24xf32>
    %91 = arith.maximumf %90, %89 : vector<288x24xf32>
    %92 = vector.broadcast %cst_44 : f32 to vector<288x24xf32>
    %93 = arith.minimumf %92, %91 : vector<288x24xf32>
    %c0_45 = arith.constant 0 : index
    %c0_46 = arith.constant 0 : index
    %94 = vector.load %arg7[%c0_45, %c0_46] : memref<24x4xf32, #tpu.memory_space<vmem>>, vector<24x4xf32>
    %cst_47 = arith.constant dense<0.000000e+00> : vector<288x4xf32>
    %95 = tpu.matmul %93, %94, %cst_47 {dimension_numbers = #tpu.dot_dimension_numbers<[1], [0], [0], [1], [0, 0, 1, 1], [], []>} : vector<288x24xf32>, vector<24x4xf32>, vector<288x4xf32> -> vector<288x4xf32>
    %c0_48 = arith.constant 0 : index
    %c0_49 = arith.constant 0 : index
    %96 = vector.load %arg8[%c0_48, %c0_49] : memref<1x4xf32, #tpu.memory_space<vmem>>, vector<1x4xf32>
    %97 = vector.broadcast %96 : vector<1x4xf32> to vector<288x4xf32>
    %98 = arith.addf %95, %97 : vector<288x4xf32>
    %99 = vector.extract_strided_slice %1 {offsets = [19, 0], sizes = [288, 4], strides = [1, 1]} : vector<324x4xf32> to vector<288x4xf32>
    %100 = arith.addf %98, %99 : vector<288x4xf32>
    %101 = tpu.transpose %100, [1, 0] : vector<288x4xf32> -> vector<4x288xf32>
    %c0_50 = arith.constant 0 : index
    %c0_51 = arith.constant 0 : index
    %c0_52 = arith.constant 0 : index
    %102 = vector.load %arg9[%c0_50, %c0_51, %c0_52] : memref<1x4x288xf32, #tpu.memory_space<vmem>>, vector<1x4x288xf32>
    %103 = vector.shape_cast %102 : vector<1x4x288xf32> to vector<4x288xf32>
    %104 = vector.shape_cast %101 : vector<4x288xf32> to vector<1x4x288xf32>
    tpu.vector_store %arg9[%c0_50, %c0_51, %c0_52], %104 {strides = array<i32>} : memref<1x4x288xf32, #tpu.memory_space<vmem>>, vector<1x4x288xf32>,
    return
  }
  func.func @transform_0(%arg0: i32, %arg1: i32) -> (i32, i32, i32) {
    %c0_i32 = arith.constant 0 : i32
    %c0_i32_0 = arith.constant 0 : i32
    %c0_i32_1 = arith.constant 0 : i32
    return %arg0, %c0_i32, %c0_i32_0 : i32, i32, i32
  }
  func.func @transform_1(%arg0: i32, %arg1: i32) -> (i32, i32) {
    %c0_i32 = arith.constant 0 : i32
    %c0_i32_0 = arith.constant 0 : i32
    %c0_i32_1 = arith.constant 0 : i32
    return %c0_i32, %c0_i32_0 : i32, i32
  }
  func.func @transform_2(%arg0: i32, %arg1: i32) -> (i32, i32) {
    %c0_i32 = arith.constant 0 : i32
    %c0_i32_0 = arith.constant 0 : i32
    %c0_i32_1 = arith.constant 0 : i32
    return %c0_i32, %c0_i32_0 : i32, i32
  }
  func.func @transform_3(%arg0: i32, %arg1: i32) -> (i32, i32) {
    %c0_i32 = arith.constant 0 : i32
    %c0_i32_0 = arith.constant 0 : i32
    %c0_i32_1 = arith.constant 0 : i32
    return %c0_i32, %c0_i32_0 : i32, i32
  }
  func.func @transform_4(%arg0: i32, %arg1: i32) -> (i32, i32) {
    %c0_i32 = arith.constant 0 : i32
    %c0_i32_0 = arith.constant 0 : i32
    %c0_i32_1 = arith.constant 0 : i32
    return %c0_i32, %c0_i32_0 : i32, i32
  }
  func.func @transform_5(%arg0: i32, %arg1: i32) -> (i32, i32) {
    %c0_i32 = arith.constant 0 : i32
    %c0_i32_0 = arith.constant 0 : i32
    %c0_i32_1 = arith.constant 0 : i32
    return %c0_i32, %c0_i32_0 : i32, i32
  }
  func.func @transform_6(%arg0: i32, %arg1: i32) -> (i32, i32) {
    %c0_i32 = arith.constant 0 : i32
    %c0_i32_0 = arith.constant 0 : i32
    %c0_i32_1 = arith.constant 0 : i32
    return %c0_i32, %c0_i32_0 : i32, i32
  }
  func.func @transform_7(%arg0: i32, %arg1: i32) -> (i32, i32, i32) {
    %c0_i32 = arith.constant 0 : i32
    %c0_i32_0 = arith.constant 0 : i32
    return %arg0, %c0_i32, %arg1 : i32, i32, i32
  }
}

</mosaic_0001>

<llo_original>
// kernel: tpu_custom_call.1
$region0: #{tpu_custom_call.1}
  #allocation0 [shape = 'u32[]', space=smem, size = 0x4, offset = 0x4, fixed_abs, tag = 'smem constant byte address 0x4 - core index']
  #allocation1 [shape = 'u32[144,128]{1,0:T(1,128)}', space=vmem, size = 0x12000, scoped, tag = 'internal scratch']
  #allocation2 [shape = 'f32[332,24]{1,0:T(8,128)}', space=vmem, size = 0x2a000, scoped, tag = 'scratch operand']
  %s0 = inlined_call_operand.vmem [shape: f32[2,324,4], index: 0, kind: input, shape index: {}]
  %s1 = inlined_call_operand.vmem [shape: f32[4,24], index: 1, kind: input, shape index: {}]
  %s2 = inlined_call_operand.vmem [shape: f32[1,24], index: 2, kind: input, shape index: {}]
  %s3 = inlined_call_operand.vmem [shape: f32[9,24], index: 3, kind: input, shape index: {}]
  %s4 = inlined_call_operand.vmem [shape: f32[1,24], index: 4, kind: input, shape index: {}]
  %s5 = inlined_call_operand.vmem [shape: f32[24,4], index: 5, kind: input, shape index: {}]
  %s6 = inlined_call_operand.vmem [shape: f32[1,4], index: 6, kind: input, shape index: {}]
  %s7 = inlined_call_operand.hbm [shape: f32[2,4,288], index: 7, kind: output, shape index: {}]
  %s8 = sld [smem:[#allocation0]]
  $region61: #{tpu_custom_call.1} parent=0
    _
  %s10 = ssub.s32 1, %s8
  %s11 = scalar_select 0, %s10, %s8
  $region1: #{tpu_custom_call.1} parent=0
    #allocation3 [shape = 'u8[12288]{0}', space=vmem, size = 0x3000, scoped, tag = 'output window, operand 0']
    #allocation4 [shape = 's32[2]{0}', space=sflag, size = 0x8, scoped, tag = 'scoped memory for tpu_custom_call.1']
    %12 = vsyncpa [#allocation4], 0
    %s13 = scalar_lea.sflag [#allocation4], 1
    %14 = vsyncpa %s13, 0
    loop: start=0, step=1, limit=4
    $region2: #{tpu_custom_call.1} parent=1 // loop_pre_header
      _
    $region3: #{tpu_custom_call.1} parent=1 // loop_header
      %s16 = sphi 0, %s20
      %p17 = scmp.ge.s32.totalorder %s16, 4
      %s23 = sphi 0, %s35
      %s24 = sphi 0, %s31
      %s25 = sphi 0, %s23
      %s26 = sphi 0, %s24
      %s27 = sphi 0, %s25
      %s28 = sphi 0, %s26
      %s38 = sphi 0, %s40
      %s41 = sphi 0, %s38
      %s42 = sphi 0, %s41
      %s58 = sphi 0, %s42
      %s62 = sphi 0, %s62
      %s64 = sphi 0, %s62
      %s65 = sphi 0, %s64
      %s79 = sphi 0, %s65
      %s83 = sphi 0, %s83
      %s85 = sphi 0, %s83
      %s86 = sphi 0, %s85
      %s100 = sphi 0, %s86
      %s104 = sphi 0, %s104
      %s106 = sphi 0, %s104
      %s107 = sphi 0, %s106
      %s121 = sphi 0, %s107
      %s125 = sphi 0, %s125
      %s127 = sphi 0, %s125
      %s128 = sphi 0, %s127
      %s142 = sphi 0, %s128
      %s146 = sphi 0, %s146
      %s148 = sphi 0, %s146
      %s149 = sphi 0, %s148
      %s163 = sphi 0, %s149
      %s167 = sphi 0, %s167
      %s169 = sphi 0, %s167
      %s170 = sphi 0, %s169
      %s184 = sphi 0, %s170
      %s192 = sphi 0, %s194
      %s195 = sphi 0, %s192
      %s196 = sphi 0, %s195
      %s212 = sphi 0, %s196
    $region4: #{tpu_custom_call.1} parent=1 // loop_header_branch
      %19 = sbr.rel (%p17) target = $region8
    $region5: #{tpu_custom_call.1} parent=1 // loop_body
      %s21 = ssub.s32 %s16, 1
      %s22 = ssub.s32 %s16, 2
      %s29 = sadd.s32 1, %s24
      %p30 = scmp.ge.s32.totalorder %s29, 1
      %s31 = scalar_select %p30, 0, %s29
      %s32 = sadd.s32 1, %s23
      %s33 = scalar_select %p30, %s32, %s23
      %p34 = scmp.ge.s32.totalorder %s33, 2
      %s35 = scalar_select %p34, 0, %s33
      %s36 = ssub.s32 %s23, %s35
      %p37 = scmp.eq.s32.totalorder %s36, 0
      %s39 = sadd.s32 %s38, 1
      %s40 = scalar_select %p37, %s38, %s39
      %p43 = pneg %p37
      %p44 = scmp.eq.s32.totalorder %s16, 1
      %p45 = por %p43, %p44
      %p46 = scmp.ne.s32.totalorder %s38, %s41
      %p47 = scmp.eq.s32.totalorder %s16, 0
      %p48 = por %p46, %p47
      %p49 = scmp.ne.s32.totalorder %s38, %s41
      %p50 = scmp.eq.s32.totalorder %s21, 1
      %p51 = por %p49, %p50
      %p52 = scmp.ne.s32.totalorder %s41, %s42
      %p53 = scmp.eq.s32.totalorder %s21, 0
      %p54 = por %p52, %p53
      %p55 = scmp.ne.s32.totalorder %s41, %s42
      %p56 = scmp.eq.s32.totalorder %s22, 1
      %p57 = por %p55, %p56
      %p59 = scmp.ne.s32.totalorder %s42, %s58
      %p60 = scmp.eq.s32.totalorder %s22, 0
      %p61 = por %p59, %p60
      %s63 = sadd.s32 %s62, 1
      %p66 = scmp.eq.s32.totalorder %s16, 1
      %p67 = scmp.ne.s32.totalorder %s62, %s64
      %p68 = scmp.eq.s32.totalorder %s16, 0
      %p69 = por %p67, %p68
      %p70 = scmp.ne.s32.totalorder %s62, %s64
      %p71 = scmp.eq.s32.totalorder %s21, 1
      %p72 = por %p70, %p71
      %p73 = scmp.ne.s32.totalorder %s64, %s65
      %p74 = scmp.eq.s32.totalorder %s21, 0
      %p75 = por %p73, %p74
      %p76 = scmp.ne.s32.totalorder %s64, %s65
      %p77 = scmp.eq.s32.totalorder %s22, 1
      %p78 = por %p76, %p77
      %p80 = scmp.ne.s32.totalorder %s65, %s79
      %p81 = scmp.eq.s32.totalorder %s22, 0
      %p82 = por %p80, %p81
      %s84 = sadd.s32 %s83, 1
      %p87 = scmp.eq.s32.totalorder %s16, 1
      %p88 = scmp.ne.s32.totalorder %s83, %s85
      %p89 = scmp.eq.s32.totalorder %s16, 0
      %p90 = por %p88, %p89
      %p91 = scmp.ne.s32.totalorder %s83, %s85
      %p92 = scmp.eq.s32.totalorder %s21, 1
      %p93 = por %p91, %p92
      %p94 = scmp.ne.s32.totalorder %s85, %s86
      %p95 = scmp.eq.s32.totalorder %s21, 0
      %p96 = por %p94, %p95
      %p97 = scmp.ne.s32.totalorder %s85, %s86
      %p98 = scmp.eq.s32.totalorder %s22, 1
      %p99 = por %p97, %p98
      %p101 = scmp.ne.s32.totalorder %s86, %s100
      %p102 = scmp.eq.s32.totalorder %s22, 0
      %p103 = por %p101, %p102
      %s105 = sadd.s32 %s104, 1
      %p108 = scmp.eq.s32.totalorder %s16, 1
      %p109 = scmp.ne.s32.totalorder %s104, %s106
      %p110 = scmp.eq.s32.totalorder %s16, 0
      %p111 = por %p109, %p110
      %p112 = scmp.ne.s32.totalorder %s104, %s106
      %p113 = scmp.eq.s32.totalorder %s21, 1
      %p114 = por %p112, %p113
      %p115 = scmp.ne.s32.totalorder %s106, %s107
      %p116 = scmp.eq.s32.totalorder %s21, 0
      %p117 = por %p115, %p116
      %p118 = scmp.ne.s32.totalorder %s106, %s107
      %p119 = scmp.eq.s32.totalorder %s22, 1
      %p120 = por %p118, %p119
      %p122 = scmp.ne.s32.totalorder %s107, %s121
      %p123 = scmp.eq.s32.totalorder %s22, 0
      %p124 = por %p122, %p123
      %s126 = sadd.s32 %s125, 1
      %p129 = scmp.eq.s32.totalorder %s16, 1
      %p130 = scmp.ne.s32.totalorder %s125, %s127
      %p131 = scmp.eq.s32.totalorder %s16, 0
      %p132 = por %p130, %p131
      %p133 = scmp.ne.s32.totalorder %s125, %s127
      %p134 = scmp.eq.s32.totalorder %s21, 1
      %p135 = por %p133, %p134
      %p136 = scmp.ne.s32.totalorder %s127, %s128
      %p137 = scmp.eq.s32.totalorder %s21, 0
      %p138 = por %p136, %p137
      %p139 = scmp.ne.s32.totalorder %s127, %s128
      %p140 = scmp.eq.s32.totalorder %s22, 1
      %p141 = por %p139, %p140
      %p143 = scmp.ne.s32.totalorder %s128, %s142
      %p144 = scmp.eq.s32.totalorder %s22, 0
      %p145 = por %p143, %p144
      %s147 = sadd.s32 %s146, 1
      %p150 = scmp.eq.s32.totalorder %s16, 1
      %p151 = scmp.ne.s32.totalorder %s146, %s148
      %p152 = scmp.eq.s32.totalorder %s16, 0
      %p153 = por %p151, %p152
      %p154 = scmp.ne.s32.totalorder %s146, %s148
      %p155 = scmp.eq.s32.totalorder %s21, 1
      %p156 = por %p154, %p155
      %p157 = scmp.ne.s32.totalorder %s148, %s149
      %p158 = scmp.eq.s32.totalorder %s21, 0
      %p159 = por %p157, %p158
      %p160 = scmp.ne.s32.totalorder %s148, %s149
      %p161 = scmp.eq.s32.totalorder %s22, 1
      %p162 = por %p160, %p161
      %p164 = scmp.ne.s32.totalorder %s149, %s163
      %p165 = scmp.eq.s32.totalorder %s22, 0
      %p166 = por %p164, %p165
      %s168 = sadd.s32 %s167, 1
      %p171 = scmp.eq.s32.totalorder %s16, 1
      %p172 = scmp.ne.s32.totalorder %s167, %s169
      %p173 = scmp.eq.s32.totalorder %s16, 0
      %p174 = por %p172, %p173
      %p175 = scmp.ne.s32.totalorder %s167, %s169
      %p176 = scmp.eq.s32.totalorder %s21, 1
      %p177 = por %p175, %p176
      %p178 = scmp.ne.s32.totalorder %s169, %s170
      %p179 = scmp.eq.s32.totalorder %s21, 0
      %p180 = por %p178, %p179
      %p181 = scmp.ne.s32.totalorder %s169, %s170
      %p182 = scmp.eq.s32.totalorder %s22, 1
      %p183 = por %p181, %p182
      %p185 = scmp.ne.s32.totalorder %s170, %s184
      %p186 = scmp.eq.s32.totalorder %s22, 0
      %p187 = por %p185, %p186
      %s188 = ssub.s32 %s23, %s35
      %s189 = ssub.s32 %s24, %s31
      %s190 = sor.u32 %s188, %s189
      %p191 = scmp.eq.s32.totalorder %s190, 0
      %s193 = sadd.s32 %s192, 1
      %s194 = scalar_select %p191, %s192, %s193
      %p197 = pneg %p191
      %p198 = scmp.eq.s32.totalorder %s16, 1
      %p199 = por %p197, %p198
      %p200 = scmp.ne.s32.totalorder %s192, %s195
      %p201 = scmp.eq.s32.totalorder %s16, 0
      %p202 = por %p200, %p201
      %p203 = scmp.ne.s32.totalorder %s192, %s195
      %p204 = scmp.eq.s32.totalorder %s21, 1
      %p205 = por %p203, %p204
      %p206 = scmp.ne.s32.totalorder %s195, %s196
      %p207 = scmp.eq.s32.totalorder %s21, 0
      %p208 = por %p206, %p207
      %p209 = scmp.ne.s32.totalorder %s195, %s196
      %p210 = scmp.eq.s32.totalorder %s22, 1
      %p211 = por %p209, %p210
      %p213 = scmp.ne.s32.totalorder %s196, %s212
      %p214 = scmp.eq.s32.totalorder %s22, 0
      %p215 = por %p213, %p214
      %p216 = scmp.le.s32.totalorder 1, %s16
      %p217 = scmp.lt.s32.totalorder %s16, 3
      %p218 = pnand %p216, %p217
      %p219 = pneg %p218
      // Predicated region
      $region9: #{tpu_custom_call.1} parent=5 // pred_check
        _
      $region10: #{tpu_custom_call.1} parent=5 // pred_check_branch
        %221 = sbr.rel (%p218) target = $region12
      $region11: #{tpu_custom_call.1} parent=5 // pred_region
        %s222 = ssub.s32 %s16, 1
        // Predicated region
        $region13: #{tpu_custom_call.1} parent=11 // pred_check
          %p223 = pneg %p75
        $region14: #{tpu_custom_call.1} parent=11 // pred_check_branch
          %225 = sbr.rel (%p223) target = $region16
        $region15: #{tpu_custom_call.1} parent=11 // pred_region
          _
        $region16: #{tpu_custom_call.1} parent=11 // pred_fallthru
          _
        // Predicated region
        $region17: #{tpu_custom_call.1} parent=11 // pred_check
          %p226 = pneg %p96
        $region18: #{tpu_custom_call.1} parent=11 // pred_check_branch
          %228 = sbr.rel (%p226) target = $region20
        $region19: #{tpu_custom_call.1} parent=11 // pred_region
          _
        $region20: #{tpu_custom_call.1} parent=11 // pred_fallthru
          _
        // Predicated region
        $region21: #{tpu_custom_call.1} parent=11 // pred_check
          %p229 = pneg %p117
        $region22: #{tpu_custom_call.1} parent=11 // pred_check_branch
          %231 = sbr.rel (%p229) target = $region24
        $region23: #{tpu_custom_call.1} parent=11 // pred_region
          _
        $region24: #{tpu_custom_call.1} parent=11 // pred_fallthru
          _
        // Predicated region
        $region25: #{tpu_custom_call.1} parent=11 // pred_check
          %p232 = pneg %p138
        $region26: #{tpu_custom_call.1} parent=11 // pred_check_branch
          %234 = sbr.rel (%p232) target = $region28
        $region27: #{tpu_custom_call.1} parent=11 // pred_region
          _
        $region28: #{tpu_custom_call.1} parent=11 // pred_fallthru
          _
        // Predicated region
        $region29: #{tpu_custom_call.1} parent=11 // pred_check
          %p235 = pneg %p159
        $region30: #{tpu_custom_call.1} parent=11 // pred_check_branch
          %237 = sbr.rel (%p235) target = $region32
        $region31: #{tpu_custom_call.1} parent=11 // pred_region
          _
        $region32: #{tpu_custom_call.1} parent=11 // pred_fallthru
          _
        // Predicated region
        $region33: #{tpu_custom_call.1} parent=11 // pred_check
          %p238 = pneg %p180
        $region34: #{tpu_custom_call.1} parent=11 // pred_check_branch
          %240 = sbr.rel (%p238) target = $region36
        $region35: #{tpu_custom_call.1} parent=11 // pred_region
          _
        $region36: #{tpu_custom_call.1} parent=11 // pred_fallthru
          _
      $region12: #{tpu_custom_call.1} parent=5 // pred_fallthru
        _
      %p241 = scmp.lt.s32.totalorder %s16, 2
      // Predicated region
      $region37: #{tpu_custom_call.1} parent=5 // pred_check
        %p242 = pneg %p241
      $region38: #{tpu_custom_call.1} parent=5 // pred_check_branch
        %244 = sbr.rel (%p242) target = $region40
      $region39: #{tpu_custom_call.1} parent=5 // pred_region
        // Predicated region
        $region41: #{tpu_custom_call.1} parent=39 // pred_check
          %p245 = pneg %p48
        $region42: #{tpu_custom_call.1} parent=39 // pred_check_branch
          %247 = sbr.rel (%p245) target = $region44
        $region43: #{tpu_custom_call.1} parent=39 // pred_region
          %p248 = scmp.lt.s32.totalorder %s23, 1
          %s249 = scalar_select %p248, %s23, 1
          %s250 = smul.addr %s249, 41
          %s251 = smul.addr %s250, 8
          %s252 = scalar_lea.vmem %s0, %s251
        $region44: #{tpu_custom_call.1} parent=39 // pred_fallthru
          _
      $region40: #{tpu_custom_call.1} parent=5 // pred_fallthru
        _
      %p253 = scmp.le.s32.totalorder 1, %s16
      %p254 = scmp.lt.s32.totalorder %s16, 3
      %p255 = pnand %p253, %p254
      %p256 = pneg %p255
      // Predicated region
      $region45: #{tpu_custom_call.1} parent=5 // pred_check
        _
      $region46: #{tpu_custom_call.1} parent=5 // pred_check_branch
        %258 = sbr.rel (%p255) target = $region48
      $region47: #{tpu_custom_call.1} parent=5 // pred_region
        %s259 = ssub.s32 %s16, 1
        %p260 = scmp.lt.s32.totalorder %s25, 1
        %s261 = scalar_select %p260, %s25, 1
        %s262 = smul.addr %s261, 41
        %s263 = smul.addr %s262, 8
        %s264 = scalar_lea.vmem %s0, %s263
        %p265 = pneg %p54
        %p266 = pneg %p51
        %p267 = pneg %p75
        %p268 = pneg %p72
        %p269 = pneg %p96
        %p270 = pneg %p93
        %p271 = pneg %p117
        %p272 = pneg %p114
        %p273 = pneg %p138
        %p274 = pneg %p135
        %p275 = pneg %p159
        %p276 = pneg %p156
        %p277 = pneg %p180
        %p278 = pneg %p177
        %p279 = pneg %p208
        %p280 = pneg %p205
        %s281 = sand.u32 %s195, 1
        %s282 = scalar_lea.sflag [#allocation4], %s281
        %s283 = sand.u32 %s195, 1
        %s284 = smul.addr %s283, 12
        %s285 = scalar_lea.vmem [#allocation3], %s284
        %p286 = scmp.lt.s32.totalorder %s25, 1
        %s287 = scalar_select %p286, %s25, 1
        %s288 = smul.addr %s287, 41
        %s289 = smul.addr %s288, 8
        %s290 = scalar_lea.vmem %s0, %s289
        %s291 = smul.u32 3, %s26
        %v292 = vld [vmem:[%s290] sm:$0xff]
        %v293 = vld [vmem:[%s290 + $0x8] sm:$0xff]
        %v294 = vld [vmem:[%s290 + $0x10] sm:$0xff]
        %v295 = vld [vmem:[%s290 + $0x18] sm:$0xff]
        %v296 = vld [vmem:[%s290 + $0x20] sm:$0xff]
        %v297 = vld [vmem:[%s290 + $0x28] sm:$0xff]
        %v298 = vld [vmem:[%s290 + $0x30] sm:$0xff]
        %v299 = vld [vmem:[%s290 + $0x38] sm:$0xff]
        %v300 = vld [vmem:[%s290 + $0x40] sm:$0xff]
        %v301 = vld [vmem:[%s290 + $0x48] sm:$0xff]
        %v302 = vld [vmem:[%s290 + $0x50] sm:$0xff]
        %v303 = vld [vmem:[%s290 + $0x58] sm:$0xff]
        %v304 = vld [vmem:[%s290 + $0x60] sm:$0xff]
        %v305 = vld [vmem:[%s290 + $0x68] sm:$0xff]
        %v306 = vld [vmem:[%s290 + $0x70] sm:$0xff]
        %v307 = vld [vmem:[%s290 + $0x78] sm:$0xff]
        %v308 = vld [vmem:[%s290 + $0x80] sm:$0xff]
        %v309 = vld [vmem:[%s290 + $0x88] sm:$0xff]
        %v310 = vld [vmem:[%s290 + $0x90] sm:$0xff]
        %v311 = vld [vmem:[%s290 + $0x98] sm:$0xff]
        %v312 = vld [vmem:[%s290 + $0xa0] sm:$0xff]
        %v313 = vld [vmem:[%s290 + $0xa8] sm:$0xff]
        %v314 = vld [vmem:[%s290 + $0xb0] sm:$0xff]
        %v315 = vld [vmem:[%s290 + $0xb8] sm:$0xff]
        %v316 = vld [vmem:[%s290 + $0xc0] sm:$0xff]
        %v317 = vld [vmem:[%s290 + $0xc8] sm:$0xff]
        %v318 = vld [vmem:[%s290 + $0xd0] sm:$0xff]
        %v319 = vld [vmem:[%s290 + $0xd8] sm:$0xff]
        %v320 = vld [vmem:[%s290 + $0xe0] sm:$0xff]
        %v321 = vld [vmem:[%s290 + $0xe8] sm:$0xff]
        %v322 = vld [vmem:[%s290 + $0xf0] sm:$0xff]
        %v323 = vld [vmem:[%s290 + $0xf8] sm:$0xff]
        %v324 = vld [vmem:[%s290 + $0x100] sm:$0xff]
        %v325 = vld [vmem:[%s290 + $0x108] sm:$0xff]
        %v326 = vld [vmem:[%s290 + $0x110] sm:$0xff]
        %v327 = vld [vmem:[%s290 + $0x118] sm:$0xff]
        %v328 = vld [vmem:[%s290 + $0x120] sm:$0xff]
        %v329 = vld [vmem:[%s290 + $0x128] sm:$0xff]
        %v330 = vld [vmem:[%s290 + $0x130] sm:$0xff]
        %v331 = vld [vmem:[%s290 + $0x138] sm:$0xff]
        %v332 = vld [vmem:[%s290 + $0x140] sm:$0xf]
        %v333 = vld [vmem:[%s1] sm:$0xf]
        %v334 = vld [vmem:[%s2] sm:$0x1]
        %v336 = vlaneseq
        %v337 = vshrl.u32 %v336, 7
        %v338 = vsub.s32 0, %v337
        %v339 = vrot.slane %v334, %v338
        %vm341 = vcmask 31744
        %v343 = vsel %vm341, %v292, 0
        %v346 = vsel %vm341, %v293, 0
        %v349 = vsel %vm341, %v294, 0
        %v352 = vsel %vm341, %v295, 0
        %v355 = vsel %vm341, %v296, 0
        %v358 = vsel %vm341, %v297, 0
        %v361 = vsel %vm341, %v298, 0
        %v364 = vsel %vm341, %v299, 0
        %v367 = vsel %vm341, %v300, 0
        %v370 = vsel %vm341, %v301, 0
        %v373 = vsel %vm341, %v302, 0
        %v376 = vsel %vm341, %v303, 0
        %v379 = vsel %vm341, %v304, 0
        %v382 = vsel %vm341, %v305, 0
        %v385 = vsel %vm341, %v306, 0
        %v388 = vsel %vm341, %v307, 0
        %v391 = vsel %vm341, %v308, 0
        %v394 = vsel %vm341, %v309, 0
        %v397 = vsel %vm341, %v310, 0
        %v400 = vsel %vm341, %v311, 0
        %v403 = vsel %vm341, %v312, 0
        %v406 = vsel %vm341, %v313, 0
        %v409 = vsel %vm341, %v314, 0
        %v412 = vsel %vm341, %v315, 0
        %v415 = vsel %vm341, %v316, 0
        %v418 = vsel %vm341, %v317, 0
        %v421 = vsel %vm341, %v318, 0
        %v424 = vsel %vm341, %v319, 0
        %v427 = vsel %vm341, %v320, 0
        %v430 = vsel %vm341, %v321, 0
        %v433 = vsel %vm341, %v322, 0
        %v436 = vsel %vm341, %v323, 0
        %v439 = vsel %vm341, %v324, 0
        %v442 = vsel %vm341, %v325, 0
        %v445 = vsel %vm341, %v326, 0
        %v448 = vsel %vm341, %v327, 0
        %v451 = vsel %vm341, %v328, 0
        %v454 = vsel %vm341, %v329, 0
        %v457 = vsel %vm341, %v330, 0
        %v460 = vsel %vm341, %v331, 0
        %v463 = vsel %vm341, %v332, 0
        %vm465 = vcmask 1043456
        %v467 = vsel %vm465, %v333, 0
        %469 = vmatprep.subr.mxu0 0.0
        %470 = vmatpush1.msra.mxu0 %v467
        %471 = vmatprep.subr.mxu0 0.0
        %472 = vmatpush1.msra.mxu0 0.0
        %473 = vmatprep.subr.mxu0 0.0
        %474 = vmatpush1.msra.mxu0 0.0
        %475 = vmatprep.subr.mxu0 0.0
        %476 = vmatpush1.msra.mxu0 0.0
        %477 = vmatprep.subr.mxu0 0.0
        %478 = vmatpush1.msra.mxu0 0.0
        %479 = vmatprep.subr.mxu0 0.0
        %480 = vmatpush1.msra.mxu0 0.0
        %481 = vmatprep.subr.mxu0 0.0
        %482 = vmatpush1.msra.mxu0 0.0
        %483 = vmatprep.subr.mxu0 0.0
        %484 = vmatpush1.msra.mxu0 0.0
        %485 = vmatprep.subr.mxu0 0.0
        %486 = vmatpush1.msra.mxu0 0.0
        %487 = vmatprep.subr.mxu0 0.0
        %488 = vmatpush1.msra.mxu0 0.0
        %489 = vmatprep.subr.mxu0 0.0
        %490 = vmatpush1.msra.mxu0 0.0
        %491 = vmatprep.subr.mxu0 0.0
        %492 = vmatpush1.msra.mxu0 0.0
        %493 = vmatprep.subr.mxu0 0.0
        %494 = vmatpush1.msra.mxu0 0.0
        %495 = vmatprep.subr.mxu0 0.0
        %496 = vmatpush1.msra.mxu0 0.0
        %497 = vmatprep.subr.mxu0 0.0
        %498 = vmatpush1.msra.mxu0 0.0
        %499 = vmatprep.subr.mxu0 0.0
        %500 = vmatpush1.msra.mxu0 0.0
        %501 = vmatprep.subr.mxu0 0.0
        %502 = vmatpush1.msra.mxu0 0.0
        %503 = vmatprep.subr.mxu0 0.0
        %504 = vmatpush1.msra.mxu0 0.0
        %505 = vmatprep.subr.mxu0 0.0
        %506 = vmatpush1.msra.mxu0 0.0
        %507 = vmatprep.subr.mxu0 0.0
        %508 = vmatpush1.msra.mxu0 0.0
        %509 = vmatprep.subr.mxu0 0.0
        %510 = vmatpush1.msra.mxu0 0.0
        %511 = vmatprep.subr.mxu0 0.0
        %512 = vmatpush1.msra.mxu0 0.0
        %513 = vmatprep.subr.mxu0 0.0
        %514 = vmatpush1.msra.mxu0 0.0
        %515 = vmatprep.subr.mxu0 0.0
        %516 = vmatpush1.msra.mxu0 0.0
        %517 = vmatprep.subr.mxu0 0.0
        %518 = vmatpush1.msra.mxu0 0.0
        %519 = vmatprep.subr.mxu0 0.0
        %520 = vmatpush1.msra.mxu0 0.0
        %521 = vmatprep.subr.mxu0 0.0
        %522 = vmatpush1.msra.mxu0 0.0
        %523 = vmatprep.subr.mxu0 0.0
        %524 = vmatpush1.msra.mxu0 0.0
        %525 = vmatprep.subr.mxu0 0.0
        %526 = vmatpush1.msra.mxu0 0.0
        %527 = vmatprep.subr.mxu0 0.0
        %528 = vmatpush1.msra.mxu0 0.0
        %529 = vmatprep.subr.mxu0 0.0
        %530 = vmatpush1.msra.mxu0 0.0
        %531 = vmatprep.subr.mxu0 0.0
        %532 = vmatpush1.msra.mxu0 0.0
        %533 = vmatprep.mubr.f32.mxu0 0.0
        %534 = vmatmul.mubr.f32.gmra.mrb[0].mxu0 %v343
        %v535 = vpop.f32.mrb[0].mxu0
        %v536 = vadd.f32 %v339, %v535
        %v537 = vpop.f32.mrb[0].mxu0
        %538 = vmatprep.mubr.f32.mxu0 0.0
        %539 = vmatmul.mubr.f32.gmra.mrb[0].mxu0 %v346
        %v540 = vpop.f32.mrb[0].mxu0
        %v541 = vadd.f32 %v339, %v540
        %v542 = vpop.f32.mrb[0].mxu0
        %543 = vmatprep.mubr.f32.mxu0 0.0
        %544 = vmatmul.mubr.f32.gmra.mrb[0].mxu0 %v349
        %v545 = vpop.f32.mrb[0].mxu0
        %v546 = vadd.f32 %v339, %v545
        %v547 = vpop.f32.mrb[0].mxu0
        %548 = vmatprep.mubr.f32.mxu0 0.0
        %549 = vmatmul.mubr.f32.gmra.mrb[0].mxu0 %v352
        %v550 = vpop.f32.mrb[0].mxu0
        %v551 = vadd.f32 %v339, %v550
        %v552 = vpop.f32.mrb[0].mxu0
        %553 = vmatprep.mubr.f32.mxu0 0.0
        %554 = vmatmul.mubr.f32.gmra.mrb[0].mxu0 %v355
        %v555 = vpop.f32.mrb[0].mxu0
        %v556 = vadd.f32 %v339, %v555
        %v557 = vpop.f32.mrb[0].mxu0
        %558 = vmatprep.mubr.f32.mxu0 0.0
        %559 = vmatmul.mubr.f32.gmra.mrb[0].mxu0 %v358
        %v560 = vpop.f32.mrb[0].mxu0
        %v561 = vadd.f32 %v339, %v560
        %v562 = vpop.f32.mrb[0].mxu0
        %563 = vmatprep.mubr.f32.mxu0 0.0
        %564 = vmatmul.mubr.f32.gmra.mrb[0].mxu0 %v361
        %v565 = vpop.f32.mrb[0].mxu0
        %v566 = vadd.f32 %v339, %v565
        %v567 = vpop.f32.mrb[0].mxu0
        %568 = vmatprep.mubr.f32.mxu0 0.0
        %569 = vmatmul.mubr.f32.gmra.mrb[0].mxu0 %v364
        %v570 = vpop.f32.mrb[0].mxu0
        %v571 = vadd.f32 %v339, %v570
        %v572 = vpop.f32.mrb[0].mxu0
        %573 = vmatprep.mubr.f32.mxu0 0.0
        %574 = vmatmul.mubr.f32.gmra.mrb[0].mxu0 %v367
        %v575 = vpop.f32.mrb[0].mxu0
        %v576 = vadd.f32 %v339, %v575
        %v577 = vpop.f32.mrb[0].mxu0
        %578 = vmatprep.mubr.f32.mxu0 0.0
        %579 = vmatmul.mubr.f32.gmra.mrb[0].mxu0 %v370
        %v580 = vpop.f32.mrb[0].mxu0
        %v581 = vadd.f32 %v339, %v580
        %v582 = vpop.f32.mrb[0].mxu0
        %583 = vmatprep.mubr.f32.mxu0 0.0
        %584 = vmatmul.mubr.f32.gmra.mrb[0].mxu0 %v373
        %v585 = vpop.f32.mrb[0].mxu0
        %v586 = vadd.f32 %v339, %v585
        %v587 = vpop.f32.mrb[0].mxu0
        %588 = vmatprep.mubr.f32.mxu0 0.0
        %589 = vmatmul.mubr.f32.gmra.mrb[0].mxu0 %v376
        %v590 = vpop.f32.mrb[0].mxu0
        %v591 = vadd.f32 %v339, %v590
        %v592 = vpop.f32.mrb[0].mxu0
        %593 = vmatprep.mubr.f32.mxu0 0.0
        %594 = vmatmul.mubr.f32.gmra.mrb[0].mxu0 %v379
        %v595 = vpop.f32.mrb[0].mxu0
        %v596 = vadd.f32 %v339, %v595
        %v597 = vpop.f32.mrb[0].mxu0
        %598 = vmatprep.mubr.f32.mxu0 0.0
        %599 = vmatmul.mubr.f32.gmra.mrb[0].mxu0 %v382
        %v600 = vpop.f32.mrb[0].mxu0
        %v601 = vadd.f32 %v339, %v600
        %v602 = vpop.f32.mrb[0].mxu0
        %603 = vmatprep.mubr.f32.mxu0 0.0
        %604 = vmatmul.mubr.f32.gmra.mrb[0].mxu0 %v385
        %v605 = vpop.f32.mrb[0].mxu0
        %v606 = vadd.f32 %v339, %v605
        %v607 = vpop.f32.mrb[0].mxu0
        %608 = vmatprep.mubr.f32.mxu0 0.0
        %609 = vmatmul.mubr.f32.gmra.mrb[0].mxu0 %v388
        %v610 = vpop.f32.mrb[0].mxu0
        %v611 = vadd.f32 %v339, %v610
        %v612 = vpop.f32.mrb[0].mxu0
        %613 = vmatprep.mubr.f32.mxu0 0.0
        %614 = vmatmul.mubr.f32.gmra.mrb[0].mxu0 %v391
        %v615 = vpop.f32.mrb[0].mxu0
        %v616 = vadd.f32 %v339, %v615
        %v617 = vpop.f32.mrb[0].mxu0
        %618 = vmatprep.mubr.f32.mxu0 0.0
        %619 = vmatmul.mubr.f32.gmra.mrb[0].mxu0 %v394
        %v620 = vpop.f32.mrb[0].mxu0
        %v621 = vadd.f32 %v339, %v620
        %v622 = vpop.f32.mrb[0].mxu0
        %623 = vmatprep.mubr.f32.mxu0 0.0
        %624 = vmatmul.mubr.f32.gmra.mrb[0].mxu0 %v397
        %v625 = vpop.f32.mrb[0].mxu0
        %v626 = vadd.f32 %v339, %v625
        %v627 = vpop.f32.mrb[0].mxu0
        %628 = vmatprep.mubr.f32.mxu0 0.0
        %629 = vmatmul.mubr.f32.gmra.mrb[0].mxu0 %v400
        %v630 = vpop.f32.mrb[0].mxu0
        %v631 = vadd.f32 %v339, %v630
        %v632 = vpop.f32.mrb[0].mxu0
        %633 = vmatprep.mubr.f32.mxu0 0.0
        %634 = vmatmul.mubr.f32.gmra.mrb[0].mxu0 %v403
        %v635 = vpop.f32.mrb[0].mxu0
        %v636 = vadd.f32 %v339, %v635
        %v637 = vpop.f32.mrb[0].mxu0
        %638 = vmatprep.mubr.f32.mxu0 0.0
        %639 = vmatmul.mubr.f32.gmra.mrb[0].mxu0 %v406
        %v640 = vpop.f32.mrb[0].mxu0
        %v641 = vadd.f32 %v339, %v640
        %v642 = vpop.f32.mrb[0].mxu0
        %643 = vmatprep.mubr.f32.mxu0 0.0
        %644 = vmatmul.mubr.f32.gmra.mrb[0].mxu0 %v409
        %v645 = vpop.f32.mrb[0].mxu0
        %v646 = vadd.f32 %v339, %v645
        %v647 = vpop.f32.mrb[0].mxu0
        %648 = vmatprep.mubr.f32.mxu0 0.0
        %649 = vmatmul.mubr.f32.gmra.mrb[0].mxu0 %v412
        %v650 = vpop.f32.mrb[0].mxu0
        %v651 = vadd.f32 %v339, %v650
        %v652 = vpop.f32.mrb[0].mxu0
        %653 = vmatprep.mubr.f32.mxu0 0.0
        %654 = vmatmul.mubr.f32.gmra.mrb[0].mxu0 %v415
        %v655 = vpop.f32.mrb[0].mxu0
        %v656 = vadd.f32 %v339, %v655
        %v657 = vpop.f32.mrb[0].mxu0
        %658 = vmatprep.mubr.f32.mxu0 0.0
        %659 = vmatmul.mubr.f32.gmra.mrb[0].mxu0 %v418
        %v660 = vpop.f32.mrb[0].mxu0
        %v661 = vadd.f32 %v339, %v660
        %v662 = vpop.f32.mrb[0].mxu0
        %663 = vmatprep.mubr.f32.mxu0 0.0
        %664 = vmatmul.mubr.f32.gmra.mrb[0].mxu0 %v421
        %v665 = vpop.f32.mrb[0].mxu0
        %v666 = vadd.f32 %v339, %v665
        %v667 = vpop.f32.mrb[0].mxu0
        %668 = vmatprep.mubr.f32.mxu0 0.0
        %669 = vmatmul.mubr.f32.gmra.mrb[0].mxu0 %v424
        %v670 = vpop.f32.mrb[0].mxu0
        %v671 = vadd.f32 %v339, %v670
        %v672 = vpop.f32.mrb[0].mxu0
        %673 = vmatprep.mubr.f32.mxu0 0.0
        %674 = vmatmul.mubr.f32.gmra.mrb[0].mxu0 %v427
        %v675 = vpop.f32.mrb[0].mxu0
        %v676 = vadd.f32 %v339, %v675
        %v677 = vpop.f32.mrb[0].mxu0
        %678 = vmatprep.mubr.f32.mxu0 0.0
        %679 = vmatmul.mubr.f32.gmra.mrb[0].mxu0 %v430
        %v680 = vpop.f32.mrb[0].mxu0
        %v681 = vadd.f32 %v339, %v680
        %v682 = vpop.f32.mrb[0].mxu0
        %683 = vmatprep.mubr.f32.mxu0 0.0
        %684 = vmatmul.mubr.f32.gmra.mrb[0].mxu0 %v433
        %v685 = vpop.f32.mrb[0].mxu0
        %v686 = vadd.f32 %v339, %v685
        %v687 = vpop.f32.mrb[0].mxu0
        %688 = vmatprep.mubr.f32.mxu0 0.0
        %689 = vmatmul.mubr.f32.gmra.mrb[0].mxu0 %v436
        %v690 = vpop.f32.mrb[0].mxu0
        %v691 = vadd.f32 %v339, %v690
        %v692 = vpop.f32.mrb[0].mxu0
        %693 = vmatprep.mubr.f32.mxu0 0.0
        %694 = vmatmul.mubr.f32.gmra.mrb[0].mxu0 %v439
        %v695 = vpop.f32.mrb[0].mxu0
        %v696 = vadd.f32 %v339, %v695
        %v697 = vpop.f32.mrb[0].mxu0
        %698 = vmatprep.mubr.f32.mxu0 0.0
        %699 = vmatmul.mubr.f32.gmra.mrb[0].mxu0 %v442
        %v700 = vpop.f32.mrb[0].mxu0
        %v701 = vadd.f32 %v339, %v700
        %v702 = vpop.f32.mrb[0].mxu0
        %703 = vmatprep.mubr.f32.mxu0 0.0
        %704 = vmatmul.mubr.f32.gmra.mrb[0].mxu0 %v445
        %v705 = vpop.f32.mrb[0].mxu0
        %v706 = vadd.f32 %v339, %v705
        %v707 = vpop.f32.mrb[0].mxu0
        %708 = vmatprep.mubr.f32.mxu0 0.0
        %709 = vmatmul.mubr.f32.gmra.mrb[0].mxu0 %v448
        %v710 = vpop.f32.mrb[0].mxu0
        %v711 = vadd.f32 %v339, %v710
        %v712 = vpop.f32.mrb[0].mxu0
        %713 = vmatprep.mubr.f32.mxu0 0.0
        %714 = vmatmul.mubr.f32.gmra.mrb[0].mxu0 %v451
        %v715 = vpop.f32.mrb[0].mxu0
        %v716 = vadd.f32 %v339, %v715
        %v717 = vpop.f32.mrb[0].mxu0
        %718 = vmatprep.mubr.f32.mxu0 0.0
        %719 = vmatmul.mubr.f32.gmra.mrb[0].mxu0 %v454
        %v720 = vpop.f32.mrb[0].mxu0
        %v721 = vadd.f32 %v339, %v720
        %v722 = vpop.f32.mrb[0].mxu0
        %723 = vmatprep.mubr.f32.mxu0 0.0
        %724 = vmatmul.mubr.f32.gmra.mrb[0].mxu0 %v457
        %v725 = vpop.f32.mrb[0].mxu0
        %v726 = vadd.f32 %v339, %v725
        %v727 = vpop.f32.mrb[0].mxu0
        %728 = vmatprep.mubr.f32.mxu0 0.0
        %729 = vmatmul.mubr.f32.gmra.mrb[0].mxu0 %v460
        %v730 = vpop.f32.mrb[0].mxu0
        %v731 = vadd.f32 %v339, %v730
        %v732 = vpop.f32.mrb[0].mxu0
        %733 = vmatprep.mubr.f32.mxu0 0.0
        %734 = vmatmul.mubr.f32.gmra.mrb[0].mxu0 %v463
        %v735 = vpop.f32.mrb[0].mxu0
        %v736 = vadd.f32 %v339, %v735
        %v737 = vpop.f32.mrb[0].mxu0
        %738 = vdwg.mxu0
        %v739 = vmax.f32 %v536, 0.0
        %v740 = vmax.f32 %v541, 0.0
        %v741 = vmax.f32 %v546, 0.0
        %v742 = vmax.f32 %v551, 0.0
        %v743 = vmax.f32 %v556, 0.0
        %v744 = vmax.f32 %v561, 0.0
        %v745 = vmax.f32 %v566, 0.0
        %v746 = vmax.f32 %v571, 0.0
        %v747 = vmax.f32 %v576, 0.0
        %v748 = vmax.f32 %v581, 0.0
        %v749 = vmax.f32 %v586, 0.0
        %v750 = vmax.f32 %v591, 0.0
        %v751 = vmax.f32 %v596, 0.0
        %v752 = vmax.f32 %v601, 0.0
        %v753 = vmax.f32 %v606, 0.0
        %v754 = vmax.f32 %v611, 0.0
        %v755 = vmax.f32 %v616, 0.0
        %v756 = vmax.f32 %v621, 0.0
        %v757 = vmax.f32 %v626, 0.0
        %v758 = vmax.f32 %v631, 0.0
        %v759 = vmax.f32 %v636, 0.0
        %v760 = vmax.f32 %v641, 0.0
        %v761 = vmax.f32 %v646, 0.0
        %v762 = vmax.f32 %v651, 0.0
        %v763 = vmax.f32 %v656, 0.0
        %v764 = vmax.f32 %v661, 0.0
        %v765 = vmax.f32 %v666, 0.0
        %v766 = vmax.f32 %v671, 0.0
        %v767 = vmax.f32 %v676, 0.0
        %v768 = vmax.f32 %v681, 0.0
        %v769 = vmax.f32 %v686, 0.0
        %v770 = vmax.f32 %v691, 0.0
        %v771 = vmax.f32 %v696, 0.0
        %v772 = vmax.f32 %v701, 0.0
        %v773 = vmax.f32 %v706, 0.0
        %v774 = vmax.f32 %v711, 0.0
        %v775 = vmax.f32 %v716, 0.0
        %v776 = vmax.f32 %v721, 0.0
        %v777 = vmax.f32 %v726, 0.0
        %v778 = vmax.f32 %v731, 0.0
        %v779 = vmax.f32 %v736, 0.0
        %v780 = vmin.f32 %v739, 6.0
        %v781 = vmin.f32 %v740, 6.0
        %v782 = vmin.f32 %v741, 6.0
        %v783 = vmin.f32 %v742, 6.0
        %v784 = vmin.f32 %v743, 6.0
        %v785 = vmin.f32 %v744, 6.0
        %v786 = vmin.f32 %v745, 6.0
        %v787 = vmin.f32 %v746, 6.0
        %v788 = vmin.f32 %v747, 6.0
        %v789 = vmin.f32 %v748, 6.0
        %v790 = vmin.f32 %v749, 6.0
        %v791 = vmin.f32 %v750, 6.0
        %v792 = vmin.f32 %v751, 6.0
        %v793 = vmin.f32 %v752, 6.0
        %v794 = vmin.f32 %v753, 6.0
        %v795 = vmin.f32 %v754, 6.0
        %v796 = vmin.f32 %v755, 6.0
        %v797 = vmin.f32 %v756, 6.0
        %v798 = vmin.f32 %v757, 6.0
        %v799 = vmin.f32 %v758, 6.0
        %v800 = vmin.f32 %v759, 6.0
        %v801 = vmin.f32 %v760, 6.0
        %v802 = vmin.f32 %v761, 6.0
        %v803 = vmin.f32 %v762, 6.0
        %v804 = vmin.f32 %v763, 6.0
        %v805 = vmin.f32 %v764, 6.0
        %v806 = vmin.f32 %v765, 6.0
        %v807 = vmin.f32 %v766, 6.0
        %v808 = vmin.f32 %v767, 6.0
        %v809 = vmin.f32 %v768, 6.0
        %v810 = vmin.f32 %v769, 6.0
        %v811 = vmin.f32 %v770, 6.0
        %v812 = vmin.f32 %v771, 6.0
        %v813 = vmin.f32 %v772, 6.0
        %v814 = vmin.f32 %v773, 6.0
        %v815 = vmin.f32 %v774, 6.0
        %v816 = vmin.f32 %v775, 6.0
        %v817 = vmin.f32 %v776, 6.0
        %v818 = vmin.f32 %v777, 6.0
        %v819 = vmin.f32 %v778, 6.0
        %v820 = vmin.f32 %v779, 6.0
        %v821 = vlaneseq
        %v822 = vshrl.u32 %v821, 7
        %v823 = vadd.s32 %v822, 8
        %v824 = vadd.s32 %v822, 16
        %v825 = vadd.s32 %v822, 24
        %v826 = vadd.s32 %v822, 32
        %v827 = vadd.s32 %v822, 40
        %v828 = vadd.s32 %v822, 48
        %v829 = vadd.s32 %v822, 56
        %v830 = vadd.s32 %v822, 64
        %v831 = vadd.s32 %v822, 72
        %v832 = vadd.s32 %v822, 80
        %v833 = vadd.s32 %v822, 88
        %v834 = vadd.s32 %v822, 96
        %v835 = vadd.s32 %v822, 104
        %v836 = vadd.s32 %v822, 112
        %v837 = vadd.s32 %v822, 120
        %v838 = vadd.s32 %v822, 128
        %v839 = vadd.s32 %v822, 136
        %v840 = vadd.s32 %v822, 144
        %v841 = vadd.s32 %v822, 152
        %v842 = vadd.s32 %v822, 160
        %v843 = vadd.s32 %v822, 168
        %v844 = vadd.s32 %v822, 176
        %v845 = vadd.s32 %v822, 184
        %v846 = vadd.s32 %v822, 192
        %v847 = vadd.s32 %v822, 200
        %v848 = vadd.s32 %v822, 208
        %v849 = vadd.s32 %v822, 216
        %v850 = vadd.s32 %v822, 224
        %v851 = vadd.s32 %v822, 232
        %v852 = vadd.s32 %v822, 240
        %v853 = vadd.s32 %v822, 248
        %v854 = vadd.s32 %v822, 256
        %v855 = vadd.s32 %v822, 264
        %v856 = vadd.s32 %v822, 272
        %v857 = vadd.s32 %v822, 280
        %v858 = vadd.s32 %v822, 288
        %v859 = vadd.s32 %v822, 296
        %v860 = vadd.s32 %v822, 304
        %v861 = vadd.s32 %v822, 312
        %v862 = vadd.s32 %v822, 320
        %v863 = vcvt.s32.f32 %v822
        %v864 = vcvt.s32.f32 %v823
        %v865 = vcvt.s32.f32 %v824
        %v866 = vcvt.s32.f32 %v825
        %v867 = vcvt.s32.f32 %v826
        %v868 = vcvt.s32.f32 %v827
        %v869 = vcvt.s32.f32 %v828
        %v870 = vcvt.s32.f32 %v829
        %v871 = vcvt.s32.f32 %v830
        %v872 = vcvt.s32.f32 %v831
        %v873 = vcvt.s32.f32 %v832
        %v874 = vcvt.s32.f32 %v833
        %v875 = vcvt.s32.f32 %v834
        %v876 = vcvt.s32.f32 %v835
        %v877 = vcvt.s32.f32 %v836
        %v878 = vcvt.s32.f32 %v837
        %v879 = vcvt.s32.f32 %v838
        %v880 = vcvt.s32.f32 %v839
        %v881 = vcvt.s32.f32 %v840
        %v882 = vcvt.s32.f32 %v841
        %v883 = vcvt.s32.f32 %v842
        %v884 = vcvt.s32.f32 %v843
        %v885 = vcvt.s32.f32 %v844
        %v886 = vcvt.s32.f32 %v845
        %v887 = vcvt.s32.f32 %v846
        %v888 = vcvt.s32.f32 %v847
        %v889 = vcvt.s32.f32 %v848
        %v890 = vcvt.s32.f32 %v849
        %v891 = vcvt.s32.f32 %v850
        %v892 = vcvt.s32.f32 %v851
        %v893 = vcvt.s32.f32 %v852
        %v894 = vcvt.s32.f32 %v853
        %v895 = vcvt.s32.f32 %v854
        %v896 = vcvt.s32.f32 %v855
        %v897 = vcvt.s32.f32 %v856
        %v898 = vcvt.s32.f32 %v857
        %v899 = vcvt.s32.f32 %v858
        %v900 = vcvt.s32.f32 %v859
        %v901 = vcvt.s32.f32 %v860
        %v902 = vcvt.s32.f32 %v861
        %v903 = vcvt.s32.f32 %v862
        %v904 = vadd.f32 %v863, 0.5
        %v905 = vadd.f32 %v864, 0.5
        %v906 = vadd.f32 %v865, 0.5
        %v907 = vadd.f32 %v866, 0.5
        %v908 = vadd.f32 %v867, 0.5
        %v909 = vadd.f32 %v868, 0.5
        %v910 = vadd.f32 %v869, 0.5
        %v911 = vadd.f32 %v870, 0.5
        %v912 = vadd.f32 %v871, 0.5
        %v913 = vadd.f32 %v872, 0.5
        %v914 = vadd.f32 %v873, 0.5
        %v915 = vadd.f32 %v874, 0.5
        %v916 = vadd.f32 %v875, 0.5
        %v917 = vadd.f32 %v876, 0.5
        %v918 = vadd.f32 %v877, 0.5
        %v919 = vadd.f32 %v878, 0.5
        %v920 = vadd.f32 %v879, 0.5
        %v921 = vadd.f32 %v880, 0.5
        %v922 = vadd.f32 %v881, 0.5
        %v923 = vadd.f32 %v882, 0.5
        %v924 = vadd.f32 %v883, 0.5
        %v925 = vadd.f32 %v884, 0.5
        %v926 = vadd.f32 %v885, 0.5
        %v927 = vadd.f32 %v886, 0.5
        %v928 = vadd.f32 %v887, 0.5
        %v929 = vadd.f32 %v888, 0.5
        %v930 = vadd.f32 %v889, 0.5
        %v931 = vadd.f32 %v890, 0.5
        %v932 = vadd.f32 %v891, 0.5
        %v933 = vadd.f32 %v892, 0.5
        %v934 = vadd.f32 %v893, 0.5
        %v935 = vadd.f32 %v894, 0.5
        %v936 = vadd.f32 %v895, 0.5
        %v937 = vadd.f32 %v896, 0.5
        %v938 = vadd.f32 %v897, 0.5
        %v939 = vadd.f32 %v898, 0.5
        %v940 = vadd.f32 %v899, 0.5
        %v941 = vadd.f32 %v900, 0.5
        %v942 = vadd.f32 %v901, 0.5
        %v943 = vadd.f32 %v902, 0.5
        %v944 = vadd.f32 %v903, 0.5
        %v945 = vmul.f32 %v904, 0.055555556
        %v946 = vmul.f32 %v905, 0.055555556
        %v947 = vmul.f32 %v906, 0.055555556
        %v948 = vmul.f32 %v907, 0.055555556
        %v949 = vmul.f32 %v908, 0.055555556
        %v950 = vmul.f32 %v909, 0.055555556
        %v951 = vmul.f32 %v910, 0.055555556
        %v952 = vmul.f32 %v911, 0.055555556
        %v953 = vmul.f32 %v912, 0.055555556
        %v954 = vmul.f32 %v913, 0.055555556
        %v955 = vmul.f32 %v914, 0.055555556
        %v956 = vmul.f32 %v915, 0.055555556
        %v957 = vmul.f32 %v916, 0.055555556
        %v958 = vmul.f32 %v917, 0.055555556
        %v959 = vmul.f32 %v918, 0.055555556
        %v960 = vmul.f32 %v919, 0.055555556
        %v961 = vmul.f32 %v920, 0.055555556
        %v962 = vmul.f32 %v921, 0.055555556
        %v963 = vmul.f32 %v922, 0.055555556
        %v964 = vmul.f32 %v923, 0.055555556
        %v965 = vmul.f32 %v924, 0.055555556
        %v966 = vmul.f32 %v925, 0.055555556
        %v967 = vmul.f32 %v926, 0.055555556
        %v968 = vmul.f32 %v927, 0.055555556
        %v969 = vmul.f32 %v928, 0.055555556
        %v970 = vmul.f32 %v929, 0.055555556
        %v971 = vmul.f32 %v930, 0.055555556
        %v972 = vmul.f32 %v931, 0.055555556
        %v973 = vmul.f32 %v932, 0.055555556
        %v974 = vmul.f32 %v933, 0.055555556
        %v975 = vmul.f32 %v934, 0.055555556
        %v976 = vmul.f32 %v935, 0.055555556
        %v977 = vmul.f32 %v936, 0.055555556
        %v978 = vmul.f32 %v937, 0.055555556
        %v979 = vmul.f32 %v938, 0.055555556
        %v980 = vmul.f32 %v939, 0.055555556
        %v981 = vmul.f32 %v940, 0.055555556
        %v982 = vmul.f32 %v941, 0.055555556
        %v983 = vmul.f32 %v942, 0.055555556
        %v984 = vmul.f32 %v943, 0.055555556
        %v985 = vmul.f32 %v944, 0.055555556
        %v986 = vfloor.f32 %v945
        %v987 = vfloor.f32 %v946
        %v988 = vfloor.f32 %v947
        %v989 = vfloor.f32 %v948
        %v990 = vfloor.f32 %v949
        %v991 = vfloor.f32 %v950
        %v992 = vfloor.f32 %v951
        %v993 = vfloor.f32 %v952
        %v994 = vfloor.f32 %v953
        %v995 = vfloor.f32 %v954
        %v996 = vfloor.f32 %v955
        %v997 = vfloor.f32 %v956
        %v998 = vfloor.f32 %v957
        %v999 = vfloor.f32 %v958
        %v1000 = vfloor.f32 %v959
        %v1001 = vfloor.f32 %v960
        %v1002 = vfloor.f32 %v961
        %v1003 = vfloor.f32 %v962
        %v1004 = vfloor.f32 %v963
        %v1005 = vfloor.f32 %v964
        %v1006 = vfloor.f32 %v965
        %v1007 = vfloor.f32 %v966
        %v1008 = vfloor.f32 %v967
        %v1009 = vfloor.f32 %v968
        %v1010 = vfloor.f32 %v969
        %v1011 = vfloor.f32 %v970
        %v1012 = vfloor.f32 %v971
        %v1013 = vfloor.f32 %v972
        %v1014 = vfloor.f32 %v973
        %v1015 = vfloor.f32 %v974
        %v1016 = vfloor.f32 %v975
        %v1017 = vfloor.f32 %v976
        %v1018 = vfloor.f32 %v977
        %v1019 = vfloor.f32 %v978
        %v1020 = vfloor.f32 %v979
        %v1021 = vfloor.f32 %v980
        %v1022 = vfloor.f32 %v981
        %v1023 = vfloor.f32 %v982
        %v1024 = vfloor.f32 %v983
        %v1025 = vfloor.f32 %v984
        %v1026 = vfloor.f32 %v985
        %v1027 = vmul.f32 %v986, 18.0
        %v1028 = vmul.f32 %v987, 18.0
        %v1029 = vmul.f32 %v988, 18.0
        %v1030 = vmul.f32 %v989, 18.0
        %v1031 = vmul.f32 %v990, 18.0
        %v1032 = vmul.f32 %v991, 18.0
        %v1033 = vmul.f32 %v992, 18.0
        %v1034 = vmul.f32 %v993, 18.0
        %v1035 = vmul.f32 %v994, 18.0
        %v1036 = vmul.f32 %v995, 18.0
        %v1037 = vmul.f32 %v996, 18.0
        %v1038 = vmul.f32 %v997, 18.0
        %v1039 = vmul.f32 %v998, 18.0
        %v1040 = vmul.f32 %v999, 18.0
        %v1041 = vmul.f32 %v1000, 18.0
        %v1042 = vmul.f32 %v1001, 18.0
        %v1043 = vmul.f32 %v1002, 18.0
        %v1044 = vmul.f32 %v1003, 18.0
        %v1045 = vmul.f32 %v1004, 18.0
        %v1046 = vmul.f32 %v1005, 18.0
        %v1047 = vmul.f32 %v1006, 18.0
        %v1048 = vmul.f32 %v1007, 18.0
        %v1049 = vmul.f32 %v1008, 18.0
        %v1050 = vmul.f32 %v1009, 18.0
        %v1051 = vmul.f32 %v1010, 18.0
        %v1052 = vmul.f32 %v1011, 18.0
        %v1053 = vmul.f32 %v1012, 18.0
        %v1054 = vmul.f32 %v1013, 18.0
        %v1055 = vmul.f32 %v1014, 18.0
        %v1056 = vmul.f32 %v1015, 18.0
        %v1057 = vmul.f32 %v1016, 18.0
        %v1058 = vmul.f32 %v1017, 18.0
        %v1059 = vmul.f32 %v1018, 18.0
        %v1060 = vmul.f32 %v1019, 18.0
        %v1061 = vmul.f32 %v1020, 18.0
        %v1062 = vmul.f32 %v1021, 18.0
        %v1063 = vmul.f32 %v1022, 18.0
        %v1064 = vmul.f32 %v1023, 18.0
        %v1065 = vmul.f32 %v1024, 18.0
        %v1066 = vmul.f32 %v1025, 18.0
        %v1067 = vmul.f32 %v1026, 18.0
        %v1068 = vsub.f32 %v863, %v1027
        %v1069 = vsub.f32 %v864, %v1028
        %v1070 = vsub.f32 %v865, %v1029
        %v1071 = vsub.f32 %v866, %v1030
        %v1072 = vsub.f32 %v867, %v1031
        %v1073 = vsub.f32 %v868, %v1032
        %v1074 = vsub.f32 %v869, %v1033
        %v1075 = vsub.f32 %v870, %v1034
        %v1076 = vsub.f32 %v871, %v1035
        %v1077 = vsub.f32 %v872, %v1036
        %v1078 = vsub.f32 %v873, %v1037
        %v1079 = vsub.f32 %v874, %v1038
        %v1080 = vsub.f32 %v875, %v1039
        %v1081 = vsub.f32 %v876, %v1040
        %v1082 = vsub.f32 %v877, %v1041
        %v1083 = vsub.f32 %v878, %v1042
        %v1084 = vsub.f32 %v879, %v1043
        %v1085 = vsub.f32 %v880, %v1044
        %v1086 = vsub.f32 %v881, %v1045
        %v1087 = vsub.f32 %v882, %v1046
        %v1088 = vsub.f32 %v883, %v1047
        %v1089 = vsub.f32 %v884, %v1048
        %v1090 = vsub.f32 %v885, %v1049
        %v1091 = vsub.f32 %v886, %v1050
        %v1092 = vsub.f32 %v887, %v1051
        %v1093 = vsub.f32 %v888, %v1052
        %v1094 = vsub.f32 %v889, %v1053
        %v1095 = vsub.f32 %v890, %v1054
        %v1096 = vsub.f32 %v891, %v1055
        %v1097 = vsub.f32 %v892, %v1056
        %v1098 = vsub.f32 %v893, %v1057
        %v1099 = vsub.f32 %v894, %v1058
        %v1100 = vsub.f32 %v895, %v1059
        %v1101 = vsub.f32 %v896, %v1060
        %v1102 = vsub.f32 %v897, %v1061
        %v1103 = vsub.f32 %v898, %v1062
        %v1104 = vsub.f32 %v899, %v1063
        %v1105 = vsub.f32 %v900, %v1064
        %v1106 = vsub.f32 %v901, %v1065
        %v1107 = vsub.f32 %v902, %v1066
        %v1108 = vsub.f32 %v903, %v1067
        %vm1109 = vcmp.ge.s32.totalorder %v822, 18
        %vm1110 = vcmp.ge.s32.totalorder %v823, 18
        %vm1111 = vcmp.ge.s32.totalorder %v824, 18
        %vm1112 = vcmp.ge.s32.totalorder %v825, 18
        %vm1113 = vcmp.ge.s32.totalorder %v826, 18
        %vm1114 = vcmp.ge.s32.totalorder %v827, 18
        %vm1115 = vcmp.ge.s32.totalorder %v828, 18
        %vm1116 = vcmp.ge.s32.totalorder %v829, 18
        %vm1117 = vcmp.ge.s32.totalorder %v830, 18
        %vm1118 = vcmp.ge.s32.totalorder %v831, 18
        %vm1119 = vcmp.ge.s32.totalorder %v832, 18
        %vm1120 = vcmp.ge.s32.totalorder %v833, 18
        %vm1121 = vcmp.ge.s32.totalorder %v834, 18
        %vm1122 = vcmp.ge.s32.totalorder %v835, 18
        %vm1123 = vcmp.ge.s32.totalorder %v836, 18
        %vm1124 = vcmp.ge.s32.totalorder %v837, 18
        %vm1125 = vcmp.ge.s32.totalorder %v838, 18
        %vm1126 = vcmp.ge.s32.totalorder %v839, 18
        %vm1127 = vcmp.ge.s32.totalorder %v840, 18
        %vm1128 = vcmp.ge.s32.totalorder %v841, 18
        %vm1129 = vcmp.ge.s32.totalorder %v842, 18
        %vm1130 = vcmp.ge.s32.totalorder %v843, 18
        %vm1131 = vcmp.ge.s32.totalorder %v844, 18
        %vm1132 = vcmp.ge.s32.totalorder %v845, 18
        %vm1133 = vcmp.ge.s32.totalorder %v846, 18
        %vm1134 = vcmp.ge.s32.totalorder %v847, 18
        %vm1135 = vcmp.ge.s32.totalorder %v848, 18
        %vm1136 = vcmp.ge.s32.totalorder %v849, 18
        %vm1137 = vcmp.ge.s32.totalorder %v850, 18
        %vm1138 = vcmp.ge.s32.totalorder %v851, 18
        %vm1139 = vcmp.ge.s32.totalorder %v852, 18
        %vm1140 = vcmp.ge.s32.totalorder %v853, 18
        %vm1141 = vcmp.ge.s32.totalorder %v854, 18
        %vm1142 = vcmp.ge.s32.totalorder %v855, 18
        %vm1143 = vcmp.ge.s32.totalorder %v856, 18
        %vm1144 = vcmp.ge.s32.totalorder %v857, 18
        %vm1145 = vcmp.ge.s32.totalorder %v858, 18
        %vm1146 = vcmp.ge.s32.totalorder %v859, 18
        %vm1147 = vcmp.ge.s32.totalorder %v860, 18
        %vm1148 = vcmp.ge.s32.totalorder %v861, 18
        %vm1149 = vcmp.ge.s32.totalorder %v862, 18
        %vm1150 = vcmp.lt.s32.totalorder %v822, 306
        %vm1151 = vcmp.lt.s32.totalorder %v823, 306
        %vm1152 = vcmp.lt.s32.totalorder %v824, 306
        %vm1153 = vcmp.lt.s32.totalorder %v825, 306
        %vm1154 = vcmp.lt.s32.totalorder %v826, 306
        %vm1155 = vcmp.lt.s32.totalorder %v827, 306
        %vm1156 = vcmp.lt.s32.totalorder %v828, 306
        %vm1157 = vcmp.lt.s32.totalorder %v829, 306
        %vm1158 = vcmp.lt.s32.totalorder %v830, 306
        %vm1159 = vcmp.lt.s32.totalorder %v831, 306
        %vm1160 = vcmp.lt.s32.totalorder %v832, 306
        %vm1161 = vcmp.lt.s32.totalorder %v833, 306
        %vm1162 = vcmp.lt.s32.totalorder %v834, 306
        %vm1163 = vcmp.lt.s32.totalorder %v835, 306
        %vm1164 = vcmp.lt.s32.totalorder %v836, 306
        %vm1165 = vcmp.lt.s32.totalorder %v837, 306
        %vm1166 = vcmp.lt.s32.totalorder %v838, 306
        %vm1167 = vcmp.lt.s32.totalorder %v839, 306
        %vm1168 = vcmp.lt.s32.totalorder %v840, 306
        %vm1169 = vcmp.lt.s32.totalorder %v841, 306
        %vm1170 = vcmp.lt.s32.totalorder %v842, 306
        %vm1171 = vcmp.lt.s32.totalorder %v843, 306
        %vm1172 = vcmp.lt.s32.totalorder %v844, 306
        %vm1173 = vcmp.lt.s32.totalorder %v845, 306
        %vm1174 = vcmp.lt.s32.totalorder %v846, 306
        %vm1175 = vcmp.lt.s32.totalorder %v847, 306
        %vm1176 = vcmp.lt.s32.totalorder %v848, 306
        %vm1177 = vcmp.lt.s32.totalorder %v849, 306
        %vm1178 = vcmp.lt.s32.totalorder %v850, 306
        %vm1179 = vcmp.lt.s32.totalorder %v851, 306
        %vm1180 = vcmp.lt.s32.totalorder %v852, 306
        %vm1181 = vcmp.lt.s32.totalorder %v853, 306
        %vm1182 = vcmp.lt.s32.totalorder %v854, 306
        %vm1183 = vcmp.lt.s32.totalorder %v855, 306
        %vm1184 = vcmp.lt.s32.totalorder %v856, 306
        %vm1185 = vcmp.lt.s32.totalorder %v857, 306
        %vm1186 = vcmp.lt.s32.totalorder %v858, 306
        %vm1187 = vcmp.lt.s32.totalorder %v859, 306
        %vm1188 = vcmp.lt.s32.totalorder %v860, 306
        %vm1189 = vcmp.lt.s32.totalorder %v861, 306
        %vm1190 = vcmp.lt.s32.totalorder %v862, 306
        %vm1191 = vmand %vm1109, %vm1150
        %vm1192 = vmand %vm1110, %vm1151
        %vm1193 = vmand %vm1111, %vm1152
        %vm1194 = vmand %vm1112, %vm1153
        %vm1195 = vmand %vm1113, %vm1154
        %vm1196 = vmand %vm1114, %vm1155
        %vm1197 = vmand %vm1115, %vm1156
        %vm1198 = vmand %vm1116, %vm1157
        %vm1199 = vmand %vm1117, %vm1158
        %vm1200 = vmand %vm1118, %vm1159
        %vm1201 = vmand %vm1119, %vm1160
        %vm1202 = vmand %vm1120, %vm1161
        %vm1203 = vmand %vm1121, %vm1162
        %vm1204 = vmand %vm1122, %vm1163
        %vm1205 = vmand %vm1123, %vm1164
        %vm1206 = vmand %vm1124, %vm1165
        %vm1207 = vmand %vm1125, %vm1166
        %vm1208 = vmand %vm1126, %vm1167
        %vm1209 = vmand %vm1127, %vm1168
        %vm1210 = vmand %vm1128, %vm1169
        %vm1211 = vmand %vm1129, %vm1170
        %vm1212 = vmand %vm1130, %vm1171
        %vm1213 = vmand %vm1131, %vm1172
        %vm1214 = vmand %vm1132, %vm1173
        %vm1215 = vmand %vm1133, %vm1174
        %vm1216 = vmand %vm1134, %vm1175
        %vm1217 = vmand %vm1135, %vm1176
        %vm1218 = vmand %vm1136, %vm1177
        %vm1219 = vmand %vm1137, %vm1178
        %vm1220 = vmand %vm1138, %vm1179
        %vm1221 = vmand %vm1139, %vm1180
        %vm1222 = vmand %vm1140, %vm1181
        %vm1223 = vmand %vm1141, %vm1182
        %vm1224 = vmand %vm1142, %vm1183
        %vm1225 = vmand %vm1143, %vm1184
        %vm1226 = vmand %vm1144, %vm1185
        %vm1227 = vmand %vm1145, %vm1186
        %vm1228 = vmand %vm1146, %vm1187
        %vm1229 = vmand %vm1147, %vm1188
        %vm1230 = vmand %vm1148, %vm1189
        %vm1231 = vmand %vm1149, %vm1190
        %vm1232 = vcmp.gt.f32.partialorder %v1068, 0.5
        %vm1233 = vcmp.gt.f32.partialorder %v1069, 0.5
        %vm1234 = vcmp.gt.f32.partialorder %v1070, 0.5
        %vm1235 = vcmp.gt.f32.partialorder %v1071, 0.5
        %vm1236 = vcmp.gt.f32.partialorder %v1072, 0.5
        %vm1237 = vcmp.gt.f32.partialorder %v1073, 0.5
        %vm1238 = vcmp.gt.f32.partialorder %v1074, 0.5
        %vm1239 = vcmp.gt.f32.partialorder %v1075, 0.5
        %vm1240 = vcmp.gt.f32.partialorder %v1076, 0.5
        %vm1241 = vcmp.gt.f32.partialorder %v1077, 0.5
        %vm1242 = vcmp.gt.f32.partialorder %v1078, 0.5
        %vm1243 = vcmp.gt.f32.partialorder %v1079, 0.5
        %vm1244 = vcmp.gt.f32.partialorder %v1080, 0.5
        %vm1245 = vcmp.gt.f32.partialorder %v1081, 0.5
        %vm1246 = vcmp.gt.f32.partialorder %v1082, 0.5
        %vm1247 = vcmp.gt.f32.partialorder %v1083, 0.5
        %vm1248 = vcmp.gt.f32.partialorder %v1084, 0.5
        %vm1249 = vcmp.gt.f32.partialorder %v1085, 0.5
        %vm1250 = vcmp.gt.f32.partialorder %v1086, 0.5
        %vm1251 = vcmp.gt.f32.partialorder %v1087, 0.5
        %vm1252 = vcmp.gt.f32.partialorder %v1088, 0.5
        %vm1253 = vcmp.gt.f32.partialorder %v1089, 0.5
        %vm1254 = vcmp.gt.f32.partialorder %v1090, 0.5
        %vm1255 = vcmp.gt.f32.partialorder %v1091, 0.5
        %vm1256 = vcmp.gt.f32.partialorder %v1092, 0.5
        %vm1257 = vcmp.gt.f32.partialorder %v1093, 0.5
        %vm1258 = vcmp.gt.f32.partialorder %v1094, 0.5
        %vm1259 = vcmp.gt.f32.partialorder %v1095, 0.5
        %vm1260 = vcmp.gt.f32.partialorder %v1096, 0.5
        %vm1261 = vcmp.gt.f32.partialorder %v1097, 0.5
        %vm1262 = vcmp.gt.f32.partialorder %v1098, 0.5
        %vm1263 = vcmp.gt.f32.partialorder %v1099, 0.5
        %vm1264 = vcmp.gt.f32.partialorder %v1100, 0.5
        %vm1265 = vcmp.gt.f32.partialorder %v1101, 0.5
        %vm1266 = vcmp.gt.f32.partialorder %v1102, 0.5
        %vm1267 = vcmp.gt.f32.partialorder %v1103, 0.5
        %vm1268 = vcmp.gt.f32.partialorder %v1104, 0.5
        %vm1269 = vcmp.gt.f32.partialorder %v1105, 0.5
        %vm1270 = vcmp.gt.f32.partialorder %v1106, 0.5
        %vm1271 = vcmp.gt.f32.partialorder %v1107, 0.5
        %vm1272 = vcmp.gt.f32.partialorder %v1108, 0.5
        %vm1273 = vmand %vm1191, %vm1232
        %vm1274 = vmand %vm1192, %vm1233
        %vm1275 = vmand %vm1193, %vm1234
        %vm1276 = vmand %vm1194, %vm1235
        %vm1277 = vmand %vm1195, %vm1236
        %vm1278 = vmand %vm1196, %vm1237
        %vm1279 = vmand %vm1197, %vm1238
        %vm1280 = vmand %vm1198, %vm1239
        %vm1281 = vmand %vm1199, %vm1240
        %vm1282 = vmand %vm1200, %vm1241
        %vm1283 = vmand %vm1201, %vm1242
        %vm1284 = vmand %vm1202, %vm1243
        %vm1285 = vmand %vm1203, %vm1244
        %vm1286 = vmand %vm1204, %vm1245
        %vm1287 = vmand %vm1205, %vm1246
        %vm1288 = vmand %vm1206, %vm1247
        %vm1289 = vmand %vm1207, %vm1248
        %vm1290 = vmand %vm1208, %vm1249
        %vm1291 = vmand %vm1209, %vm1250
        %vm1292 = vmand %vm1210, %vm1251
        %vm1293 = vmand %vm1211, %vm1252
        %vm1294 = vmand %vm1212, %vm1253
        %vm1295 = vmand %vm1213, %vm1254
        %vm1296 = vmand %vm1214, %vm1255
        %vm1297 = vmand %vm1215, %vm1256
        %vm1298 = vmand %vm1216, %vm1257
        %vm1299 = vmand %vm1217, %vm1258
        %vm1300 = vmand %vm1218, %vm1259
        %vm1301 = vmand %vm1219, %vm1260
        %vm1302 = vmand %vm1220, %vm1261
        %vm1303 = vmand %vm1221, %vm1262
        %vm1304 = vmand %vm1222, %vm1263
        %vm1305 = vmand %vm1223, %vm1264
        %vm1306 = vmand %vm1224, %vm1265
        %vm1307 = vmand %vm1225, %vm1266
        %vm1308 = vmand %vm1226, %vm1267
        %vm1309 = vmand %vm1227, %vm1268
        %vm1310 = vmand %vm1228, %vm1269
        %vm1311 = vmand %vm1229, %vm1270
        %vm1312 = vmand %vm1230, %vm1271
        %vm1313 = vmand %vm1231, %vm1272
        %vm1314 = vcmp.lt.f32.partialorder %v1068, 16.5
        %vm1315 = vcmp.lt.f32.partialorder %v1069, 16.5
        %vm1316 = vcmp.lt.f32.partialorder %v1070, 16.5
        %vm1317 = vcmp.lt.f32.partialorder %v1071, 16.5
        %vm1318 = vcmp.lt.f32.partialorder %v1072, 16.5
        %vm1319 = vcmp.lt.f32.partialorder %v1073, 16.5
        %vm1320 = vcmp.lt.f32.partialorder %v1074, 16.5
        %vm1321 = vcmp.lt.f32.partialorder %v1075, 16.5
        %vm1322 = vcmp.lt.f32.partialorder %v1076, 16.5
        %vm1323 = vcmp.lt.f32.partialorder %v1077, 16.5
        %vm1324 = vcmp.lt.f32.partialorder %v1078, 16.5
        %vm1325 = vcmp.lt.f32.partialorder %v1079, 16.5
        %vm1326 = vcmp.lt.f32.partialorder %v1080, 16.5
        %vm1327 = vcmp.lt.f32.partialorder %v1081, 16.5
        %vm1328 = vcmp.lt.f32.partialorder %v1082, 16.5
        %vm1329 = vcmp.lt.f32.partialorder %v1083, 16.5
        %vm1330 = vcmp.lt.f32.partialorder %v1084, 16.5
        %vm1331 = vcmp.lt.f32.partialorder %v1085, 16.5
        %vm1332 = vcmp.lt.f32.partialorder %v1086, 16.5
        %vm1333 = vcmp.lt.f32.partialorder %v1087, 16.5
        %vm1334 = vcmp.lt.f32.partialorder %v1088, 16.5
        %vm1335 = vcmp.lt.f32.partialorder %v1089, 16.5
        %vm1336 = vcmp.lt.f32.partialorder %v1090, 16.5
        %vm1337 = vcmp.lt.f32.partialorder %v1091, 16.5
        %vm1338 = vcmp.lt.f32.partialorder %v1092, 16.5
        %vm1339 = vcmp.lt.f32.partialorder %v1093, 16.5
        %vm1340 = vcmp.lt.f32.partialorder %v1094, 16.5
        %vm1341 = vcmp.lt.f32.partialorder %v1095, 16.5
        %vm1342 = vcmp.lt.f32.partialorder %v1096, 16.5
        %vm1343 = vcmp.lt.f32.partialorder %v1097, 16.5
        %vm1344 = vcmp.lt.f32.partialorder %v1098, 16.5
        %vm1345 = vcmp.lt.f32.partialorder %v1099, 16.5
        %vm1346 = vcmp.lt.f32.partialorder %v1100, 16.5
        %vm1347 = vcmp.lt.f32.partialorder %v1101, 16.5
        %vm1348 = vcmp.lt.f32.partialorder %v1102, 16.5
        %vm1349 = vcmp.lt.f32.partialorder %v1103, 16.5
        %vm1350 = vcmp.lt.f32.partialorder %v1104, 16.5
        %vm1351 = vcmp.lt.f32.partialorder %v1105, 16.5
        %vm1352 = vcmp.lt.f32.partialorder %v1106, 16.5
        %vm1353 = vcmp.lt.f32.partialorder %v1107, 16.5
        %vm1354 = vcmp.lt.f32.partialorder %v1108, 16.5
        %vm1355 = vmand %vm1273, %vm1314
        %vm1356 = vmand %vm1274, %vm1315
        %vm1357 = vmand %vm1275, %vm1316
        %vm1358 = vmand %vm1276, %vm1317
        %vm1359 = vmand %vm1277, %vm1318
        %vm1360 = vmand %vm1278, %vm1319
        %vm1361 = vmand %vm1279, %vm1320
        %vm1362 = vmand %vm1280, %vm1321
        %vm1363 = vmand %vm1281, %vm1322
        %vm1364 = vmand %vm1282, %vm1323
        %vm1365 = vmand %vm1283, %vm1324
        %vm1366 = vmand %vm1284, %vm1325
        %vm1367 = vmand %vm1285, %vm1326
        %vm1368 = vmand %vm1286, %vm1327
        %vm1369 = vmand %vm1287, %vm1328
        %vm1370 = vmand %vm1288, %vm1329
        %vm1371 = vmand %vm1289, %vm1330
        %vm1372 = vmand %vm1290, %vm1331
        %vm1373 = vmand %vm1291, %vm1332
        %vm1374 = vmand %vm1292, %vm1333
        %vm1375 = vmand %vm1293, %vm1334
        %vm1376 = vmand %vm1294, %vm1335
        %vm1377 = vmand %vm1295, %vm1336
        %vm1378 = vmand %vm1296, %vm1337
        %vm1379 = vmand %vm1297, %vm1338
        %vm1380 = vmand %vm1298, %vm1339
        %vm1381 = vmand %vm1299, %vm1340
        %vm1382 = vmand %vm1300, %vm1341
        %vm1383 = vmand %vm1301, %vm1342
        %vm1384 = vmand %vm1302, %vm1343
        %vm1385 = vmand %vm1303, %vm1344
        %vm1386 = vmand %vm1304, %vm1345
        %vm1387 = vmand %vm1305, %vm1346
        %vm1388 = vmand %vm1306, %vm1347
        %vm1389 = vmand %vm1307, %vm1348
        %vm1390 = vmand %vm1308, %vm1349
        %vm1391 = vmand %vm1309, %vm1350
        %vm1392 = vmand %vm1310, %vm1351
        %vm1393 = vmand %vm1311, %vm1352
        %vm1394 = vmand %vm1312, %vm1353
        %vm1395 = vmand %vm1313, %vm1354
        %v1396 = vsel %vm1355, 1, 0
        %v1397 = vsel %vm1356, 1, 0
        %v1398 = vsel %vm1357, 1, 0
        %v1399 = vsel %vm1358, 1, 0
        %v1400 = vsel %vm1359, 1, 0
        %v1401 = vsel %vm1360, 1, 0
        %v1402 = vsel %vm1361, 1, 0
        %v1403 = vsel %vm1362, 1, 0
        %v1404 = vsel %vm1363, 1, 0
        %v1405 = vsel %vm1364, 1, 0
        %v1406 = vsel %vm1365, 1, 0
        %v1407 = vsel %vm1366, 1, 0
        %v1408 = vsel %vm1367, 1, 0
        %v1409 = vsel %vm1368, 1, 0
        %v1410 = vsel %vm1369, 1, 0
        %v1411 = vsel %vm1370, 1, 0
        %v1412 = vsel %vm1371, 1, 0
        %v1413 = vsel %vm1372, 1, 0
        %v1414 = vsel %vm1373, 1, 0
        %v1415 = vsel %vm1374, 1, 0
        %v1416 = vsel %vm1375, 1, 0
        %v1417 = vsel %vm1376, 1, 0
        %v1418 = vsel %vm1377, 1, 0
        %v1419 = vsel %vm1378, 1, 0
        %v1420 = vsel %vm1379, 1, 0
        %v1421 = vsel %vm1380, 1, 0
        %v1422 = vsel %vm1381, 1, 0
        %v1423 = vsel %vm1382, 1, 0
        %v1424 = vsel %vm1383, 1, 0
        %v1425 = vsel %vm1384, 1, 0
        %v1426 = vsel %vm1385, 1, 0
        %v1427 = vsel %vm1386, 1, 0
        %v1428 = vsel %vm1387, 1, 0
        %v1429 = vsel %vm1388, 1, 0
        %v1430 = vsel %vm1389, 1, 0
        %v1431 = vsel %vm1390, 1, 0
        %v1432 = vsel %vm1391, 1, 0
        %v1433 = vsel %vm1392, 1, 0
        %v1434 = vsel %vm1393, 1, 0
        %v1435 = vsel %vm1394, 1, 0
        %v1436 = vsel %vm1395, 1, 0
        %vm1437 = vcmp.eq.s32.totalorder %v1396, 1
        %vm1438 = vcmp.eq.s32.totalorder %v1397, 1
        %vm1439 = vcmp.eq.s32.totalorder %v1398, 1
        %vm1440 = vcmp.eq.s32.totalorder %v1399, 1
        %vm1441 = vcmp.eq.s32.totalorder %v1400, 1
        %vm1442 = vcmp.eq.s32.totalorder %v1401, 1
        %vm1443 = vcmp.eq.s32.totalorder %v1402, 1
        %vm1444 = vcmp.eq.s32.totalorder %v1403, 1
        %vm1445 = vcmp.eq.s32.totalorder %v1404, 1
        %vm1446 = vcmp.eq.s32.totalorder %v1405, 1
        %vm1447 = vcmp.eq.s32.totalorder %v1406, 1
        %vm1448 = vcmp.eq.s32.totalorder %v1407, 1
        %vm1449 = vcmp.eq.s32.totalorder %v1408, 1
        %vm1450 = vcmp.eq.s32.totalorder %v1409, 1
        %vm1451 = vcmp.eq.s32.totalorder %v1410, 1
        %vm1452 = vcmp.eq.s32.totalorder %v1411, 1
        %vm1453 = vcmp.eq.s32.totalorder %v1412, 1
        %vm1454 = vcmp.eq.s32.totalorder %v1413, 1
        %vm1455 = vcmp.eq.s32.totalorder %v1414, 1
        %vm1456 = vcmp.eq.s32.totalorder %v1415, 1
        %vm1457 = vcmp.eq.s32.totalorder %v1416, 1
        %vm1458 = vcmp.eq.s32.totalorder %v1417, 1
        %vm1459 = vcmp.eq.s32.totalorder %v1418, 1
        %vm1460 = vcmp.eq.s32.totalorder %v1419, 1
        %vm1461 = vcmp.eq.s32.totalorder %v1420, 1
        %vm1462 = vcmp.eq.s32.totalorder %v1421, 1
        %vm1463 = vcmp.eq.s32.totalorder %v1422, 1
        %vm1464 = vcmp.eq.s32.totalorder %v1423, 1
        %vm1465 = vcmp.eq.s32.totalorder %v1424, 1
        %vm1466 = vcmp.eq.s32.totalorder %v1425, 1
        %vm1467 = vcmp.eq.s32.totalorder %v1426, 1
        %vm1468 = vcmp.eq.s32.totalorder %v1427, 1
        %vm1469 = vcmp.eq.s32.totalorder %v1428, 1
        %vm1470 = vcmp.eq.s32.totalorder %v1429, 1
        %vm1471 = vcmp.eq.s32.totalorder %v1430, 1
        %vm1472 = vcmp.eq.s32.totalorder %v1431, 1
        %vm1473 = vcmp.eq.s32.totalorder %v1432, 1
        %vm1474 = vcmp.eq.s32.totalorder %v1433, 1
        %vm1475 = vcmp.eq.s32.totalorder %v1434, 1
        %vm1476 = vcmp.eq.s32.totalorder %v1435, 1
        %vm1477 = vcmp.eq.s32.totalorder %v1436, 1
        %v1478 = vsel %vm1437, %v780, 0.0
        %v1479 = vsel %vm1438, %v781, 0.0
        %v1480 = vsel %vm1439, %v782, 0.0
        %v1481 = vsel %vm1440, %v783, 0.0
        %v1482 = vsel %vm1441, %v784, 0.0
        %v1483 = vsel %vm1442, %v785, 0.0
        %v1484 = vsel %vm1443, %v786, 0.0
        %v1485 = vsel %vm1444, %v787, 0.0
        %v1486 = vsel %vm1445, %v788, 0.0
        %v1487 = vsel %vm1446, %v789, 0.0
        %v1488 = vsel %vm1447, %v790, 0.0
        %v1489 = vsel %vm1448, %v791, 0.0
        %v1490 = vsel %vm1449, %v792, 0.0
        %v1491 = vsel %vm1450, %v793, 0.0
        %v1492 = vsel %vm1451, %v794, 0.0
        %v1493 = vsel %vm1452, %v795, 0.0
        %v1494 = vsel %vm1453, %v796, 0.0
        %v1495 = vsel %vm1454, %v797, 0.0
        %v1496 = vsel %vm1455, %v798, 0.0
        %v1497 = vsel %vm1456, %v799, 0.0
        %v1498 = vsel %vm1457, %v800, 0.0
        %v1499 = vsel %vm1458, %v801, 0.0
        %v1500 = vsel %vm1459, %v802, 0.0
        %v1501 = vsel %vm1460, %v803, 0.0
        %v1502 = vsel %vm1461, %v804, 0.0
        %v1503 = vsel %vm1462, %v805, 0.0
        %v1504 = vsel %vm1463, %v806, 0.0
        %v1505 = vsel %vm1464, %v807, 0.0
        %v1506 = vsel %vm1465, %v808, 0.0
        %v1507 = vsel %vm1466, %v809, 0.0
        %v1508 = vsel %vm1467, %v810, 0.0
        %v1509 = vsel %vm1468, %v811, 0.0
        %v1510 = vsel %vm1469, %v812, 0.0
        %v1511 = vsel %vm1470, %v813, 0.0
        %v1512 = vsel %vm1471, %v814, 0.0
        %v1513 = vsel %vm1472, %v815, 0.0
        %v1514 = vsel %vm1473, %v816, 0.0
        %v1515 = vsel %vm1474, %v817, 0.0
        %v1516 = vsel %vm1475, %v818, 0.0
        %v1517 = vsel %vm1476, %v819, 0.0
        %v1518 = vsel %vm1477, %v820, 0.0
        %vm1519 = vcmask 195584
        %1520 = vst.msk [vmem:[#allocation2] sm:$0xff] %vm1519, %v1478
        %1521 = vst.msk [vmem:[#allocation2 + $0x8] sm:$0xff] %vm1519, %v1479
        %1522 = vst.msk [vmem:[#allocation2 + $0x10] sm:$0xff] %vm1519, %v1480
        %1523 = vst.msk [vmem:[#allocation2 + $0x18] sm:$0xff] %vm1519, %v1481
        %1524 = vst.msk [vmem:[#allocation2 + $0x20] sm:$0xff] %vm1519, %v1482
        %1525 = vst.msk [vmem:[#allocation2 + $0x28] sm:$0xff] %vm1519, %v1483
        %1526 = vst.msk [vmem:[#allocation2 + $0x30] sm:$0xff] %vm1519, %v1484
        %1527 = vst.msk [vmem:[#allocation2 + $0x38] sm:$0xff] %vm1519, %v1485
        %1528 = vst.msk [vmem:[#allocation2 + $0x40] sm:$0xff] %vm1519, %v1486
        %1529 = vst.msk [vmem:[#allocation2 + $0x48] sm:$0xff] %vm1519, %v1487
        %1530 = vst.msk [vmem:[#allocation2 + $0x50] sm:$0xff] %vm1519, %v1488
        %1531 = vst.msk [vmem:[#allocation2 + $0x58] sm:$0xff] %vm1519, %v1489
        %1532 = vst.msk [vmem:[#allocation2 + $0x60] sm:$0xff] %vm1519, %v1490
        %1533 = vst.msk [vmem:[#allocation2 + $0x68] sm:$0xff] %vm1519, %v1491
        %1534 = vst.msk [vmem:[#allocation2 + $0x70] sm:$0xff] %vm1519, %v1492
        %1535 = vst.msk [vmem:[#allocation2 + $0x78] sm:$0xff] %vm1519, %v1493
        %1536 = vst.msk [vmem:[#allocation2 + $0x80] sm:$0xff] %vm1519, %v1494
        %1537 = vst.msk [vmem:[#allocation2 + $0x88] sm:$0xff] %vm1519, %v1495
        %1538 = vst.msk [vmem:[#allocation2 + $0x90] sm:$0xff] %vm1519, %v1496
        %1539 = vst.msk [vmem:[#allocation2 + $0x98] sm:$0xff] %vm1519, %v1497
        %1540 = vst.msk [vmem:[#allocation2 + $0xa0] sm:$0xff] %vm1519, %v1498
        %1541 = vst.msk [vmem:[#allocation2 + $0xa8] sm:$0xff] %vm1519, %v1499
        %1542 = vst.msk [vmem:[#allocation2 + $0xb0] sm:$0xff] %vm1519, %v1500
        %1543 = vst.msk [vmem:[#allocation2 + $0xb8] sm:$0xff] %vm1519, %v1501
        %1544 = vst.msk [vmem:[#allocation2 + $0xc0] sm:$0xff] %vm1519, %v1502
        %1545 = vst.msk [vmem:[#allocation2 + $0xc8] sm:$0xff] %vm1519, %v1503
        %1546 = vst.msk [vmem:[#allocation2 + $0xd0] sm:$0xff] %vm1519, %v1504
        %1547 = vst.msk [vmem:[#allocation2 + $0xd8] sm:$0xff] %vm1519, %v1505
        %1548 = vst.msk [vmem:[#allocation2 + $0xe0] sm:$0xff] %vm1519, %v1506
        %1549 = vst.msk [vmem:[#allocation2 + $0xe8] sm:$0xff] %vm1519, %v1507
        %1550 = vst.msk [vmem:[#allocation2 + $0xf0] sm:$0xff] %vm1519, %v1508
        %1551 = vst.msk [vmem:[#allocation2 + $0xf8] sm:$0xff] %vm1519, %v1509
        %1552 = vst.msk [vmem:[#allocation2 + $0x100] sm:$0xff] %vm1519, %v1510
        %1553 = vst.msk [vmem:[#allocation2 + $0x108] sm:$0xff] %vm1519, %v1511
        %1554 = vst.msk [vmem:[#allocation2 + $0x110] sm:$0xff] %vm1519, %v1512
        %1555 = vst.msk [vmem:[#allocation2 + $0x118] sm:$0xff] %vm1519, %v1513
        %1556 = vst.msk [vmem:[#allocation2 + $0x120] sm:$0xff] %vm1519, %v1514
        %1557 = vst.msk [vmem:[#allocation2 + $0x128] sm:$0xff] %vm1519, %v1515
        %1558 = vst.msk [vmem:[#allocation2 + $0x130] sm:$0xff] %vm1519, %v1516
        %1559 = vst.msk [vmem:[#allocation2 + $0x138] sm:$0xff] %vm1519, %v1517
        %vm1560 = vcmask 191488
        %1561 = vst.msk [vmem:[#allocation2 + $0x140] sm:$0xf] %vm1560, %v1518
        %1562 = vst.msk [vmem:[#allocation2 + $0x144] sm:$0xff] %vm1519, 0.0
        %v1563 = vld [vmem:[#allocation2] sm:$0xff]
        %v1564 = vld [vmem:[#allocation2 + $0x8] sm:$0xff]
        %v1565 = vld [vmem:[#allocation2 + $0x10] sm:$0xff]
        %v1566 = vld [vmem:[#allocation2 + $0x18] sm:$0xff]
        %v1567 = vld [vmem:[#allocation2 + $0x20] sm:$0xff]
        %v1568 = vld [vmem:[#allocation2 + $0x28] sm:$0xff]
        %v1569 = vld [vmem:[#allocation2 + $0x30] sm:$0xff]
        %v1570 = vld [vmem:[#allocation2 + $0x38] sm:$0xff]
        %v1571 = vld [vmem:[#allocation2 + $0x40] sm:$0xff]
        %v1572 = vld [vmem:[#allocation2 + $0x48] sm:$0xff]
        %v1573 = vld [vmem:[#allocation2 + $0x50] sm:$0xff]
        %v1574 = vld [vmem:[#allocation2 + $0x58] sm:$0xff]
        %v1575 = vld [vmem:[#allocation2 + $0x60] sm:$0xff]
        %v1576 = vld [vmem:[#allocation2 + $0x68] sm:$0xff]
        %v1577 = vld [vmem:[#allocation2 + $0x70] sm:$0xff]
        %v1578 = vld [vmem:[#allocation2 + $0x78] sm:$0xff]
        %v1579 = vld [vmem:[#allocation2 + $0x80] sm:$0xff]
        %v1580 = vld [vmem:[#allocation2 + $0x88] sm:$0xff]
        %v1581 = vld [vmem:[#allocation2 + $0x90] sm:$0xff]
        %v1582 = vld [vmem:[#allocation2 + $0x98] sm:$0xff]
        %v1583 = vld [vmem:[#allocation2 + $0xa0] sm:$0xff]
        %v1584 = vld [vmem:[#allocation2 + $0xa8] sm:$0xff]
        %v1585 = vld [vmem:[#allocation2 + $0xb0] sm:$0xff]
        %v1586 = vld [vmem:[#allocation2 + $0xb8] sm:$0xff]
        %v1587 = vld [vmem:[#allocation2 + $0xc0] sm:$0xff]
        %v1588 = vld [vmem:[#allocation2 + $0xc8] sm:$0xff]
        %v1589 = vld [vmem:[#allocation2 + $0xd0] sm:$0xff]
        %v1590 = vld [vmem:[#allocation2 + $0xd8] sm:$0xff]
        %v1591 = vld [vmem:[#allocation2 + $0xe0] sm:$0xff]
        %v1592 = vld [vmem:[#allocation2 + $0xe8] sm:$0xff]
        %v1593 = vld [vmem:[#allocation2 + $0xf0] sm:$0xff]
        %v1594 = vld [vmem:[#allocation2 + $0xf8] sm:$0xff]
        %v1595 = vld [vmem:[#allocation2 + $0x100] sm:$0xff]
        %v1596 = vld [vmem:[#allocation2 + $0x108] sm:$0xff]
        %v1597 = vld [vmem:[#allocation2 + $0x110] sm:$0xff]
        %v1598 = vld [vmem:[#allocation2 + $0x118] sm:$0xff]
        %v1599 = vld [vmem:[%s3] sm:$0x1]
        %v1600 = vlaneseq
        %v1601 = vshrl.u32 %v1600, 7
        %v1602 = vsub.s32 0, %v1601
        %v1603 = vrot.slane %v1599, %v1602
        %v1604 = vmul.f32 %v1563, %v1603
        %v1605 = vmul.f32 %v1564, %v1603
        %v1606 = vmul.f32 %v1565, %v1603
        %v1607 = vmul.f32 %v1566, %v1603
        %v1608 = vmul.f32 %v1567, %v1603
        %v1609 = vmul.f32 %v1568, %v1603
        %v1610 = vmul.f32 %v1569, %v1603
        %v1611 = vmul.f32 %v1570, %v1603
        %v1612 = vmul.f32 %v1571, %v1603
        %v1613 = vmul.f32 %v1572, %v1603
        %v1614 = vmul.f32 %v1573, %v1603
        %v1615 = vmul.f32 %v1574, %v1603
        %v1616 = vmul.f32 %v1575, %v1603
        %v1617 = vmul.f32 %v1576, %v1603
        %v1618 = vmul.f32 %v1577, %v1603
        %v1619 = vmul.f32 %v1578, %v1603
        %v1620 = vmul.f32 %v1579, %v1603
        %v1621 = vmul.f32 %v1580, %v1603
        %v1622 = vmul.f32 %v1581, %v1603
        %v1623 = vmul.f32 %v1582, %v1603
        %v1624 = vmul.f32 %v1583, %v1603
        %v1625 = vmul.f32 %v1584, %v1603
        %v1626 = vmul.f32 %v1585, %v1603
        %v1627 = vmul.f32 %v1586, %v1603
        %v1628 = vmul.f32 %v1587, %v1603
        %v1629 = vmul.f32 %v1588, %v1603
        %v1630 = vmul.f32 %v1589, %v1603
        %v1631 = vmul.f32 %v1590, %v1603
        %v1632 = vmul.f32 %v1591, %v1603
        %v1633 = vmul.f32 %v1592, %v1603
        %v1634 = vmul.f32 %v1593, %v1603
        %v1635 = vmul.f32 %v1594, %v1603
        %v1636 = vmul.f32 %v1595, %v1603
        %v1637 = vmul.f32 %v1596, %v1603
        %v1638 = vmul.f32 %v1597, %v1603
        %v1639 = vmul.f32 %v1598, %v1603
        %v1640 = vadd.f32 %v1604, 0.0
        %v1641 = vadd.f32 %v1605, 0.0
        %v1642 = vadd.f32 %v1606, 0.0
        %v1643 = vadd.f32 %v1607, 0.0
        %v1644 = vadd.f32 %v1608, 0.0
        %v1645 = vadd.f32 %v1609, 0.0
        %v1646 = vadd.f32 %v1610, 0.0
        %v1647 = vadd.f32 %v1611, 0.0
        %v1648 = vadd.f32 %v1612, 0.0
        %v1649 = vadd.f32 %v1613, 0.0
        %v1650 = vadd.f32 %v1614, 0.0
        %v1651 = vadd.f32 %v1615, 0.0
        %v1652 = vadd.f32 %v1616, 0.0
        %v1653 = vadd.f32 %v1617, 0.0
        %v1654 = vadd.f32 %v1618, 0.0
        %v1655 = vadd.f32 %v1619, 0.0
        %v1656 = vadd.f32 %v1620, 0.0
        %v1657 = vadd.f32 %v1621, 0.0
        %v1658 = vadd.f32 %v1622, 0.0
        %v1659 = vadd.f32 %v1623, 0.0
        %v1660 = vadd.f32 %v1624, 0.0
        %v1661 = vadd.f32 %v1625, 0.0
        %v1662 = vadd.f32 %v1626, 0.0
        %v1663 = vadd.f32 %v1627, 0.0
        %v1664 = vadd.f32 %v1628, 0.0
        %v1665 = vadd.f32 %v1629, 0.0
        %v1666 = vadd.f32 %v1630, 0.0
        %v1667 = vadd.f32 %v1631, 0.0
        %v1668 = vadd.f32 %v1632, 0.0
        %v1669 = vadd.f32 %v1633, 0.0
        %v1670 = vadd.f32 %v1634, 0.0
        %v1671 = vadd.f32 %v1635, 0.0
        %v1672 = vadd.f32 %v1636, 0.0
        %v1673 = vadd.f32 %v1637, 0.0
        %v1674 = vadd.f32 %v1638, 0.0
        %v1675 = vadd.f32 %v1639, 0.0
        %v1676 = vld [vmem:[#allocation2 + $0x1] sm:$0xff]
        %v1677 = vld [vmem:[#allocation2 + $0x9] sm:$0xff]
        %v1678 = vld [vmem:[#allocation2 + $0x11] sm:$0xff]
        %v1679 = vld [vmem:[#allocation2 + $0x19] sm:$0xff]
        %v1680 = vld [vmem:[#allocation2 + $0x21] sm:$0xff]
        %v1681 = vld [vmem:[#allocation2 + $0x29] sm:$0xff]
        %v1682 = vld [vmem:[#allocation2 + $0x31] sm:$0xff]
        %v1683 = vld [vmem:[#allocation2 + $0x39] sm:$0xff]
        %v1684 = vld [vmem:[#allocation2 + $0x41] sm:$0xff]
        %v1685 = vld [vmem:[#allocation2 + $0x49] sm:$0xff]
        %v1686 = vld [vmem:[#allocation2 + $0x51] sm:$0xff]
        %v1687 = vld [vmem:[#allocation2 + $0x59] sm:$0xff]
        %v1688 = vld [vmem:[#allocation2 + $0x61] sm:$0xff]
        %v1689 = vld [vmem:[#allocation2 + $0x69] sm:$0xff]
        %v1690 = vld [vmem:[#allocation2 + $0x71] sm:$0xff]
        %v1691 = vld [vmem:[#allocation2 + $0x79] sm:$0xff]
        %v1692 = vld [vmem:[#allocation2 + $0x81] sm:$0xff]
        %v1693 = vld [vmem:[#allocation2 + $0x89] sm:$0xff]
        %v1694 = vld [vmem:[#allocation2 + $0x91] sm:$0xff]
        %v1695 = vld [vmem:[#allocation2 + $0x99] sm:$0xff]
        %v1696 = vld [vmem:[#allocation2 + $0xa1] sm:$0xff]
        %v1697 = vld [vmem:[#allocation2 + $0xa9] sm:$0xff]
        %v1698 = vld [vmem:[#allocation2 + $0xb1] sm:$0xff]
        %v1699 = vld [vmem:[#allocation2 + $0xb9] sm:$0xff]
        %v1700 = vld [vmem:[#allocation2 + $0xc1] sm:$0xff]
        %v1701 = vld [vmem:[#allocation2 + $0xc9] sm:$0xff]
        %v1702 = vld [vmem:[#allocation2 + $0xd1] sm:$0xff]
        %v1703 = vld [vmem:[#allocation2 + $0xd9] sm:$0xff]
        %v1704 = vld [vmem:[#allocation2 + $0xe1] sm:$0xff]
        %v1705 = vld [vmem:[#allocation2 + $0xe9] sm:$0xff]
        %v1706 = vld [vmem:[#allocation2 + $0xf1] sm:$0xff]
        %v1707 = vld [vmem:[#allocation2 + $0xf9] sm:$0xff]
        %v1708 = vld [vmem:[#allocation2 + $0x101] sm:$0xff]
        %v1709 = vld [vmem:[#allocation2 + $0x109] sm:$0xff]
        %v1710 = vld [vmem:[#allocation2 + $0x111] sm:$0xff]
        %v1711 = vld [vmem:[#allocation2 + $0x119] sm:$0xff]
        %v1712 = vld [vmem:[%s3 + $0x1] sm:$0x1]
        %v1713 = vlaneseq
        %v1714 = vshrl.u32 %v1713, 7
        %v1715 = vsub.s32 0, %v1714
        %v1716 = vrot.slane %v1712, %v1715
        %v1717 = vmul.f32 %v1676, %v1716
        %v1718 = vmul.f32 %v1677, %v1716
        %v1719 = vmul.f32 %v1678, %v1716
        %v1720 = vmul.f32 %v1679, %v1716
        %v1721 = vmul.f32 %v1680, %v1716
        %v1722 = vmul.f32 %v1681, %v1716
        %v1723 = vmul.f32 %v1682, %v1716
        %v1724 = vmul.f32 %v1683, %v1716
        %v1725 = vmul.f32 %v1684, %v1716
        %v1726 = vmul.f32 %v1685, %v1716
        %v1727 = vmul.f32 %v1686, %v1716
        %v1728 = vmul.f32 %v1687, %v1716
        %v1729 = vmul.f32 %v1688, %v1716
        %v1730 = vmul.f32 %v1689, %v1716
        %v1731 = vmul.f32 %v1690, %v1716
        %v1732 = vmul.f32 %v1691, %v1716
        %v1733 = vmul.f32 %v1692, %v1716
        %v1734 = vmul.f32 %v1693, %v1716
        %v1735 = vmul.f32 %v1694, %v1716
        %v1736 = vmul.f32 %v1695, %v1716
        %v1737 = vmul.f32 %v1696, %v1716
        %v1738 = vmul.f32 %v1697, %v1716
        %v1739 = vmul.f32 %v1698, %v1716
        %v1740 = vmul.f32 %v1699, %v1716
        %v1741 = vmul.f32 %v1700, %v1716
        %v1742 = vmul.f32 %v1701, %v1716
        %v1743 = vmul.f32 %v1702, %v1716
        %v1744 = vmul.f32 %v1703, %v1716
        %v1745 = vmul.f32 %v1704, %v1716
        %v1746 = vmul.f32 %v1705, %v1716
        %v1747 = vmul.f32 %v1706, %v1716
        %v1748 = vmul.f32 %v1707, %v1716
        %v1749 = vmul.f32 %v1708, %v1716
        %v1750 = vmul.f32 %v1709, %v1716
        %v1751 = vmul.f32 %v1710, %v1716
        %v1752 = vmul.f32 %v1711, %v1716
        %v1753 = vadd.f32 %v1640, %v1717
        %v1754 = vadd.f32 %v1641, %v1718
        %v1755 = vadd.f32 %v1642, %v1719
        %v1756 = vadd.f32 %v1643, %v1720
        %v1757 = vadd.f32 %v1644, %v1721
        %v1758 = vadd.f32 %v1645, %v1722
        %v1759 = vadd.f32 %v1646, %v1723
        %v1760 = vadd.f32 %v1647, %v1724
        %v1761 = vadd.f32 %v1648, %v1725
        %v1762 = vadd.f32 %v1649, %v1726
        %v1763 = vadd.f32 %v1650, %v1727
        %v1764 = vadd.f32 %v1651, %v1728
        %v1765 = vadd.f32 %v1652, %v1729
        %v1766 = vadd.f32 %v1653, %v1730
        %v1767 = vadd.f32 %v1654, %v1731
        %v1768 = vadd.f32 %v1655, %v1732
        %v1769 = vadd.f32 %v1656, %v1733
        %v1770 = vadd.f32 %v1657, %v1734
        %v1771 = vadd.f32 %v1658, %v1735
        %v1772 = vadd.f32 %v1659, %v1736
        %v1773 = vadd.f32 %v1660, %v1737
        %v1774 = vadd.f32 %v1661, %v1738
        %v1775 = vadd.f32 %v1662, %v1739
        %v1776 = vadd.f32 %v1663, %v1740
        %v1777 = vadd.f32 %v1664, %v1741
        %v1778 = vadd.f32 %v1665, %v1742
        %v1779 = vadd.f32 %v1666, %v1743
        %v1780 = vadd.f32 %v1667, %v1744
        %v1781 = vadd.f32 %v1668, %v1745
        %v1782 = vadd.f32 %v1669, %v1746
        %v1783 = vadd.f32 %v1670, %v1747
        %v1784 = vadd.f32 %v1671, %v1748
        %v1785 = vadd.f32 %v1672, %v1749
        %v1786 = vadd.f32 %v1673, %v1750
        %v1787 = vadd.f32 %v1674, %v1751
        %v1788 = vadd.f32 %v1675, %v1752
        %v1789 = vld [vmem:[#allocation2 + $0x2] sm:$0xff]
        %v1790 = vld [vmem:[#allocation2 + $0xa] sm:$0xff]
        %v1791 = vld [vmem:[#allocation2 + $0x12] sm:$0xff]
        %v1792 = vld [vmem:[#allocation2 + $0x1a] sm:$0xff]
        %v1793 = vld [vmem:[#allocation2 + $0x22] sm:$0xff]
        %v1794 = vld [vmem:[#allocation2 + $0x2a] sm:$0xff]
        %v1795 = vld [vmem:[#allocation2 + $0x32] sm:$0xff]
        %v1796 = vld [vmem:[#allocation2 + $0x3a] sm:$0xff]
        %v1797 = vld [vmem:[#allocation2 + $0x42] sm:$0xff]
        %v1798 = vld [vmem:[#allocation2 + $0x4a] sm:$0xff]
        %v1799 = vld [vmem:[#allocation2 + $0x52] sm:$0xff]
        %v1800 = vld [vmem:[#allocation2 + $0x5a] sm:$0xff]
        %v1801 = vld [vmem:[#allocation2 + $0x62] sm:$0xff]
        %v1802 = vld [vmem:[#allocation2 + $0x6a] sm:$0xff]
        %v1803 = vld [vmem:[#allocation2 + $0x72] sm:$0xff]
        %v1804 = vld [vmem:[#allocation2 + $0x7a] sm:$0xff]
        %v1805 = vld [vmem:[#allocation2 + $0x82] sm:$0xff]
        %v1806 = vld [vmem:[#allocation2 + $0x8a] sm:$0xff]
        %v1807 = vld [vmem:[#allocation2 + $0x92] sm:$0xff]
        %v1808 = vld [vmem:[#allocation2 + $0x9a] sm:$0xff]
        %v1809 = vld [vmem:[#allocation2 + $0xa2] sm:$0xff]
        %v1810 = vld [vmem:[#allocation2 + $0xaa] sm:$0xff]
        %v1811 = vld [vmem:[#allocation2 + $0xb2] sm:$0xff]
        %v1812 = vld [vmem:[#allocation2 + $0xba] sm:$0xff]
        %v1813 = vld [vmem:[#allocation2 + $0xc2] sm:$0xff]
        %v1814 = vld [vmem:[#allocation2 + $0xca] sm:$0xff]
        %v1815 = vld [vmem:[#allocation2 + $0xd2] sm:$0xff]
        %v1816 = vld [vmem:[#allocation2 + $0xda] sm:$0xff]
        %v1817 = vld [vmem:[#allocation2 + $0xe2] sm:$0xff]
        %v1818 = vld [vmem:[#allocation2 + $0xea] sm:$0xff]
        %v1819 = vld [vmem:[#allocation2 + $0xf2] sm:$0xff]
        %v1820 = vld [vmem:[#allocation2 + $0xfa] sm:$0xff]
        %v1821 = vld [vmem:[#allocation2 + $0x102] sm:$0xff]
        %v1822 = vld [vmem:[#allocation2 + $0x10a] sm:$0xff]
        %v1823 = vld [vmem:[#allocation2 + $0x112] sm:$0xff]
        %v1824 = vld [vmem:[#allocation2 + $0x11a] sm:$0xff]
        %v1825 = vld [vmem:[%s3 + $0x2] sm:$0x1]
        %v1826 = vlaneseq
        %v1827 = vshrl.u32 %v1826, 7
        %v1828 = vsub.s32 0, %v1827
        %v1829 = vrot.slane %v1825, %v1828
        %v1830 = vmul.f32 %v1789, %v1829
        %v1831 = vmul.f32 %v1790, %v1829
        %v1832 = vmul.f32 %v1791, %v1829
        %v1833 = vmul.f32 %v1792, %v1829
        %v1834 = vmul.f32 %v1793, %v1829
        %v1835 = vmul.f32 %v1794, %v1829
        %v1836 = vmul.f32 %v1795, %v1829
        %v1837 = vmul.f32 %v1796, %v1829
        %v1838 = vmul.f32 %v1797, %v1829
        %v1839 = vmul.f32 %v1798, %v1829
        %v1840 = vmul.f32 %v1799, %v1829
        %v1841 = vmul.f32 %v1800, %v1829
        %v1842 = vmul.f32 %v1801, %v1829
        %v1843 = vmul.f32 %v1802, %v1829
        %v1844 = vmul.f32 %v1803, %v1829
        %v1845 = vmul.f32 %v1804, %v1829
        %v1846 = vmul.f32 %v1805, %v1829
        %v1847 = vmul.f32 %v1806, %v1829
        %v1848 = vmul.f32 %v1807, %v1829
        %v1849 = vmul.f32 %v1808, %v1829
        %v1850 = vmul.f32 %v1809, %v1829
        %v1851 = vmul.f32 %v1810, %v1829
        %v1852 = vmul.f32 %v1811, %v1829
        %v1853 = vmul.f32 %v1812, %v1829
        %v1854 = vmul.f32 %v1813, %v1829
        %v1855 = vmul.f32 %v1814, %v1829
        %v1856 = vmul.f32 %v1815, %v1829
        %v1857 = vmul.f32 %v1816, %v1829
        %v1858 = vmul.f32 %v1817, %v1829
        %v1859 = vmul.f32 %v1818, %v1829
        %v1860 = vmul.f32 %v1819, %v1829
        %v1861 = vmul.f32 %v1820, %v1829
        %v1862 = vmul.f32 %v1821, %v1829
        %v1863 = vmul.f32 %v1822, %v1829
        %v1864 = vmul.f32 %v1823, %v1829
        %v1865 = vmul.f32 %v1824, %v1829
        %v1866 = vadd.f32 %v1753, %v1830
        %v1867 = vadd.f32 %v1754, %v1831
        %v1868 = vadd.f32 %v1755, %v1832
        %v1869 = vadd.f32 %v1756, %v1833
        %v1870 = vadd.f32 %v1757, %v1834
        %v1871 = vadd.f32 %v1758, %v1835
        %v1872 = vadd.f32 %v1759, %v1836
        %v1873 = vadd.f32 %v1760, %v1837
        %v1874 = vadd.f32 %v1761, %v1838
        %v1875 = vadd.f32 %v1762, %v1839
        %v1876 = vadd.f32 %v1763, %v1840
        %v1877 = vadd.f32 %v1764, %v1841
        %v1878 = vadd.f32 %v1765, %v1842
        %v1879 = vadd.f32 %v1766, %v1843
        %v1880 = vadd.f32 %v1767, %v1844
        %v1881 = vadd.f32 %v1768, %v1845
        %v1882 = vadd.f32 %v1769, %v1846
        %v1883 = vadd.f32 %v1770, %v1847
        %v1884 = vadd.f32 %v1771, %v1848
        %v1885 = vadd.f32 %v1772, %v1849
        %v1886 = vadd.f32 %v1773, %v1850
        %v1887 = vadd.f32 %v1774, %v1851
        %v1888 = vadd.f32 %v1775, %v1852
        %v1889 = vadd.f32 %v1776, %v1853
        %v1890 = vadd.f32 %v1777, %v1854
        %v1891 = vadd.f32 %v1778, %v1855
        %v1892 = vadd.f32 %v1779, %v1856
        %v1893 = vadd.f32 %v1780, %v1857
        %v1894 = vadd.f32 %v1781, %v1858
        %v1895 = vadd.f32 %v1782, %v1859
        %v1896 = vadd.f32 %v1783, %v1860
        %v1897 = vadd.f32 %v1784, %v1861
        %v1898 = vadd.f32 %v1785, %v1862
        %v1899 = vadd.f32 %v1786, %v1863
        %v1900 = vadd.f32 %v1787, %v1864
        %v1901 = vadd.f32 %v1788, %v1865
        %v1902 = vld [vmem:[#allocation2 + $0x122] sm:$0xff]
        %v1903 = vld [vmem:[#allocation2 + $0x12a] sm:$0xff]
        %v1904 = vld [vmem:[%s3 + $0x3] sm:$0x1]
        %v1905 = vlaneseq
        %v1906 = vshrl.u32 %v1905, 7
        %v1907 = vsub.s32 0, %v1906
        %v1908 = vrot.slane %v1904, %v1907
        %v1909 = vmul.f32 %v1791, %v1908
        %v1910 = vmul.f32 %v1792, %v1908
        %v1911 = vmul.f32 %v1793, %v1908
        %v1912 = vmul.f32 %v1794, %v1908
        %v1913 = vmul.f32 %v1795, %v1908
        %v1914 = vmul.f32 %v1796, %v1908
        %v1915 = vmul.f32 %v1797, %v1908
        %v1916 = vmul.f32 %v1798, %v1908
        %v1917 = vmul.f32 %v1799, %v1908
        %v1918 = vmul.f32 %v1800, %v1908
        %v1919 = vmul.f32 %v1801, %v1908
        %v1920 = vmul.f32 %v1802, %v1908
        %v1921 = vmul.f32 %v1803, %v1908
        %v1922 = vmul.f32 %v1804, %v1908
        %v1923 = vmul.f32 %v1805, %v1908
        %v1924 = vmul.f32 %v1806, %v1908
        %v1925 = vmul.f32 %v1807, %v1908
        %v1926 = vmul.f32 %v1808, %v1908
        %v1927 = vmul.f32 %v1809, %v1908
        %v1928 = vmul.f32 %v1810, %v1908
        %v1929 = vmul.f32 %v1811, %v1908
        %v1930 = vmul.f32 %v1812, %v1908
        %v1931 = vmul.f32 %v1813, %v1908
        %v1932 = vmul.f32 %v1814, %v1908
        %v1933 = vmul.f32 %v1815, %v1908
        %v1934 = vmul.f32 %v1816, %v1908
        %v1935 = vmul.f32 %v1817, %v1908
        %v1936 = vmul.f32 %v1818, %v1908
        %v1937 = vmul.f32 %v1819, %v1908
        %v1938 = vmul.f32 %v1820, %v1908
        %v1939 = vmul.f32 %v1821, %v1908
        %v1940 = vmul.f32 %v1822, %v1908
        %v1941 = vmul.f32 %v1823, %v1908
        %v1942 = vmul.f32 %v1824, %v1908
        %v1943 = vmul.f32 %v1902, %v1908
        %v1944 = vmul.f32 %v1903, %v1908
        %v1945 = vadd.f32 %v1866, %v1909
        %v1946 = vadd.f32 %v1867, %v1910
        %v1947 = vadd.f32 %v1868, %v1911
        %v1948 = vadd.f32 %v1869, %v1912
        %v1949 = vadd.f32 %v1870, %v1913
        %v1950 = vadd.f32 %v1871, %v1914
        %v1951 = vadd.f32 %v1872, %v1915
        %v1952 = vadd.f32 %v1873, %v1916
        %v1953 = vadd.f32 %v1874, %v1917
        %v1954 = vadd.f32 %v1875, %v1918
        %v1955 = vadd.f32 %v1876, %v1919
        %v1956 = vadd.f32 %v1877, %v1920
        %v1957 = vadd.f32 %v1878, %v1921
        %v1958 = vadd.f32 %v1879, %v1922
        %v1959 = vadd.f32 %v1880, %v1923
        %v1960 = vadd.f32 %v1881, %v1924
        %v1961 = vadd.f32 %v1882, %v1925
        %v1962 = vadd.f32 %v1883, %v1926
        %v1963 = vadd.f32 %v1884, %v1927
        %v1964 = vadd.f32 %v1885, %v1928
        %v1965 = vadd.f32 %v1886, %v1929
        %v1966 = vadd.f32 %v1887, %v1930
        %v1967 = vadd.f32 %v1888, %v1931
        %v1968 = vadd.f32 %v1889, %v1932
        %v1969 = vadd.f32 %v1890, %v1933
        %v1970 = vadd.f32 %v1891, %v1934
        %v1971 = vadd.f32 %v1892, %v1935
        %v1972 = vadd.f32 %v1893, %v1936
        %v1973 = vadd.f32 %v1894, %v1937
        %v1974 = vadd.f32 %v1895, %v1938
        %v1975 = vadd.f32 %v1896, %v1939
        %v1976 = vadd.f32 %v1897, %v1940
        %v1977 = vadd.f32 %v1898, %v1941
        %v1978 = vadd.f32 %v1899, %v1942
        %v1979 = vadd.f32 %v1900, %v1943
        %v1980 = vadd.f32 %v1901, %v1944
        %v1981 = vld [vmem:[#allocation2 + $0x13] sm:$0xff]
        %v1982 = vld [vmem:[#allocation2 + $0x1b] sm:$0xff]
        %v1983 = vld [vmem:[#allocation2 + $0x23] sm:$0xff]
        %v1984 = vld [vmem:[#allocation2 + $0x2b] sm:$0xff]
        %v1985 = vld [vmem:[#allocation2 + $0x33] sm:$0xff]
        %v1986 = vld [vmem:[#allocation2 + $0x3b] sm:$0xff]
        %v1987 = vld [vmem:[#allocation2 + $0x43] sm:$0xff]
        %v1988 = vld [vmem:[#allocation2 + $0x4b] sm:$0xff]
        %v1989 = vld [vmem:[#allocation2 + $0x53] sm:$0xff]
        %v1990 = vld [vmem:[#allocation2 + $0x5b] sm:$0xff]
        %v1991 = vld [vmem:[#allocation2 + $0x63] sm:$0xff]
        %v1992 = vld [vmem:[#allocation2 + $0x6b] sm:$0xff]
        %v1993 = vld [vmem:[#allocation2 + $0x73] sm:$0xff]
        %v1994 = vld [vmem:[#allocation2 + $0x7b] sm:$0xff]
        %v1995 = vld [vmem:[#allocation2 + $0x83] sm:$0xff]
        %v1996 = vld [vmem:[#allocation2 + $0x8b] sm:$0xff]
        %v1997 = vld [vmem:[#allocation2 + $0x93] sm:$0xff]
        %v1998 = vld [vmem:[#allocation2 + $0x9b] sm:$0xff]
        %v1999 = vld [vmem:[#allocation2 + $0xa3] sm:$0xff]
        %v2000 = vld [vmem:[#allocation2 + $0xab] sm:$0xff]
        %v2001 = vld [vmem:[#allocation2 + $0xb3] sm:$0xff]
        %v2002 = vld [vmem:[#allocation2 + $0xbb] sm:$0xff]
        %v2003 = vld [vmem:[#allocation2 + $0xc3] sm:$0xff]
        %v2004 = vld [vmem:[#allocation2 + $0xcb] sm:$0xff]
        %v2005 = vld [vmem:[#allocation2 + $0xd3] sm:$0xff]
        %v2006 = vld [vmem:[#allocation2 + $0xdb] sm:$0xff]
        %v2007 = vld [vmem:[#allocation2 + $0xe3] sm:$0xff]
        %v2008 = vld [vmem:[#allocation2 + $0xeb] sm:$0xff]
        %v2009 = vld [vmem:[#allocation2 + $0xf3] sm:$0xff]
        %v2010 = vld [vmem:[#allocation2 + $0xfb] sm:$0xff]
        %v2011 = vld [vmem:[#allocation2 + $0x103] sm:$0xff]
        %v2012 = vld [vmem:[#allocation2 + $0x10b] sm:$0xff]
        %v2013 = vld [vmem:[#allocation2 + $0x113] sm:$0xff]
        %v2014 = vld [vmem:[#allocation2 + $0x11b] sm:$0xff]
        %v2015 = vld [vmem:[#allocation2 + $0x123] sm:$0xff]
        %v2016 = vld [vmem:[#allocation2 + $0x12b] sm:$0xff]
        %v2017 = vld [vmem:[%s3 + $0x4] sm:$0x1]
        %v2018 = vlaneseq
        %v2019 = vshrl.u32 %v2018, 7
        %v2020 = vsub.s32 0, %v2019
        %v2021 = vrot.slane %v2017, %v2020
        %v2022 = vmul.f32 %v1981, %v2021
        %v2023 = vmul.f32 %v1982, %v2021
        %v2024 = vmul.f32 %v1983, %v2021
        %v2025 = vmul.f32 %v1984, %v2021
        %v2026 = vmul.f32 %v1985, %v2021
        %v2027 = vmul.f32 %v1986, %v2021
        %v2028 = vmul.f32 %v1987, %v2021
        %v2029 = vmul.f32 %v1988, %v2021
        %v2030 = vmul.f32 %v1989, %v2021
        %v2031 = vmul.f32 %v1990, %v2021
        %v2032 = vmul.f32 %v1991, %v2021
        %v2033 = vmul.f32 %v1992, %v2021
        %v2034 = vmul.f32 %v1993, %v2021
        %v2035 = vmul.f32 %v1994, %v2021
        %v2036 = vmul.f32 %v1995, %v2021
        %v2037 = vmul.f32 %v1996, %v2021
        %v2038 = vmul.f32 %v1997, %v2021
        %v2039 = vmul.f32 %v1998, %v2021
        %v2040 = vmul.f32 %v1999, %v2021
        %v2041 = vmul.f32 %v2000, %v2021
        %v2042 = vmul.f32 %v2001, %v2021
        %v2043 = vmul.f32 %v2002, %v2021
        %v2044 = vmul.f32 %v2003, %v2021
        %v2045 = vmul.f32 %v2004, %v2021
        %v2046 = vmul.f32 %v2005, %v2021
        %v2047 = vmul.f32 %v2006, %v2021
        %v2048 = vmul.f32 %v2007, %v2021
        %v2049 = vmul.f32 %v2008, %v2021
        %v2050 = vmul.f32 %v2009, %v2021
        %v2051 = vmul.f32 %v2010, %v2021
        %v2052 = vmul.f32 %v2011, %v2021
        %v2053 = vmul.f32 %v2012, %v2021
        %v2054 = vmul.f32 %v2013, %v2021
        %v2055 = vmul.f32 %v2014, %v2021
        %v2056 = vmul.f32 %v2015, %v2021
        %v2057 = vmul.f32 %v2016, %v2021
        %v2058 = vadd.f32 %v1945, %v2022
        %v2059 = vadd.f32 %v1946, %v2023
        %v2060 = vadd.f32 %v1947, %v2024
        %v2061 = vadd.f32 %v1948, %v2025
        %v2062 = vadd.f32 %v1949, %v2026
        %v2063 = vadd.f32 %v1950, %v2027
        %v2064 = vadd.f32 %v1951, %v2028
        %v2065 = vadd.f32 %v1952, %v2029
        %v2066 = vadd.f32 %v1953, %v2030
        %v2067 = vadd.f32 %v1954, %v2031
        %v2068 = vadd.f32 %v1955, %v2032
        %v2069 = vadd.f32 %v1956, %v2033
        %v2070 = vadd.f32 %v1957, %v2034
        %v2071 = vadd.f32 %v1958, %v2035
        %v2072 = vadd.f32 %v1959, %v2036
        %v2073 = vadd.f32 %v1960, %v2037
        %v2074 = vadd.f32 %v1961, %v2038
        %v2075 = vadd.f32 %v1962, %v2039
        %v2076 = vadd.f32 %v1963, %v2040
        %v2077 = vadd.f32 %v1964, %v2041
        %v2078 = vadd.f32 %v1965, %v2042
        %v2079 = vadd.f32 %v1966, %v2043
        %v2080 = vadd.f32 %v1967, %v2044
        %v2081 = vadd.f32 %v1968, %v2045
        %v2082 = vadd.f32 %v1969, %v2046
        %v2083 = vadd.f32 %v1970, %v2047
        %v2084 = vadd.f32 %v1971, %v2048
        %v2085 = vadd.f32 %v1972, %v2049
        %v2086 = vadd.f32 %v1973, %v2050
        %v2087 = vadd.f32 %v1974, %v2051
        %v2088 = vadd.f32 %v1975, %v2052
        %v2089 = vadd.f32 %v1976, %v2053
        %v2090 = vadd.f32 %v1977, %v2054
        %v2091 = vadd.f32 %v1978, %v2055
        %v2092 = vadd.f32 %v1979, %v2056
        %v2093 = vadd.f32 %v1980, %v2057
        %v2094 = vld [vmem:[#allocation2 + $0x14] sm:$0xff]
        %v2095 = vld [vmem:[#allocation2 + $0x1c] sm:$0xff]
        %v2096 = vld [vmem:[#allocation2 + $0x24] sm:$0xff]
        %v2097 = vld [vmem:[#allocation2 + $0x2c] sm:$0xff]
        %v2098 = vld [vmem:[#allocation2 + $0x34] sm:$0xff]
        %v2099 = vld [vmem:[#allocation2 + $0x3c] sm:$0xff]
        %v2100 = vld [vmem:[#allocation2 + $0x44] sm:$0xff]
        %v2101 = vld [vmem:[#allocation2 + $0x4c] sm:$0xff]
        %v2102 = vld [vmem:[#allocation2 + $0x54] sm:$0xff]
        %v2103 = vld [vmem:[#allocation2 + $0x5c] sm:$0xff]
        %v2104 = vld [vmem:[#allocation2 + $0x64] sm:$0xff]
        %v2105 = vld [vmem:[#allocation2 + $0x6c] sm:$0xff]
        %v2106 = vld [vmem:[#allocation2 + $0x74] sm:$0xff]
        %v2107 = vld [vmem:[#allocation2 + $0x7c] sm:$0xff]
        %v2108 = vld [vmem:[#allocation2 + $0x84] sm:$0xff]
        %v2109 = vld [vmem:[#allocation2 + $0x8c] sm:$0xff]
        %v2110 = vld [vmem:[#allocation2 + $0x94] sm:$0xff]
        %v2111 = vld [vmem:[#allocation2 + $0x9c] sm:$0xff]
        %v2112 = vld [vmem:[#allocation2 + $0xa4] sm:$0xff]
        %v2113 = vld [vmem:[#allocation2 + $0xac] sm:$0xff]
        %v2114 = vld [vmem:[#allocation2 + $0xb4] sm:$0xff]
        %v2115 = vld [vmem:[#allocation2 + $0xbc] sm:$0xff]
        %v2116 = vld [vmem:[#allocation2 + $0xc4] sm:$0xff]
        %v2117 = vld [vmem:[#allocation2 + $0xcc] sm:$0xff]
        %v2118 = vld [vmem:[#allocation2 + $0xd4] sm:$0xff]
        %v2119 = vld [vmem:[#allocation2 + $0xdc] sm:$0xff]
        %v2120 = vld [vmem:[#allocation2 + $0xe4] sm:$0xff]
        %v2121 = vld [vmem:[#allocation2 + $0xec] sm:$0xff]
        %v2122 = vld [vmem:[#allocation2 + $0xf4] sm:$0xff]
        %v2123 = vld [vmem:[#allocation2 + $0xfc] sm:$0xff]
        %v2124 = vld [vmem:[#allocation2 + $0x104] sm:$0xff]
        %v2125 = vld [vmem:[#allocation2 + $0x10c] sm:$0xff]
        %v2126 = vld [vmem:[#allocation2 + $0x114] sm:$0xff]
        %v2127 = vld [vmem:[#allocation2 + $0x11c] sm:$0xff]
        %v2128 = vld [vmem:[#allocation2 + $0x124] sm:$0xff]
        %v2129 = vld [vmem:[#allocation2 + $0x12c] sm:$0xff]
        %v2130 = vld [vmem:[%s3 + $0x5] sm:$0x1]
        %v2131 = vlaneseq
        %v2132 = vshrl.u32 %v2131, 7
        %v2133 = vsub.s32 0, %v2132
        %v2134 = vrot.slane %v2130, %v2133
        %v2135 = vmul.f32 %v2094, %v2134
        %v2136 = vmul.f32 %v2095, %v2134
        %v2137 = vmul.f32 %v2096, %v2134
        %v2138 = vmul.f32 %v2097, %v2134
        %v2139 = vmul.f32 %v2098, %v2134
        %v2140 = vmul.f32 %v2099, %v2134
        %v2141 = vmul.f32 %v2100, %v2134
        %v2142 = vmul.f32 %v2101, %v2134
        %v2143 = vmul.f32 %v2102, %v2134
        %v2144 = vmul.f32 %v2103, %v2134
        %v2145 = vmul.f32 %v2104, %v2134
        %v2146 = vmul.f32 %v2105, %v2134
        %v2147 = vmul.f32 %v2106, %v2134
        %v2148 = vmul.f32 %v2107, %v2134
        %v2149 = vmul.f32 %v2108, %v2134
        %v2150 = vmul.f32 %v2109, %v2134
        %v2151 = vmul.f32 %v2110, %v2134
        %v2152 = vmul.f32 %v2111, %v2134
        %v2153 = vmul.f32 %v2112, %v2134
        %v2154 = vmul.f32 %v2113, %v2134
        %v2155 = vmul.f32 %v2114, %v2134
        %v2156 = vmul.f32 %v2115, %v2134
        %v2157 = vmul.f32 %v2116, %v2134
        %v2158 = vmul.f32 %v2117, %v2134
        %v2159 = vmul.f32 %v2118, %v2134
        %v2160 = vmul.f32 %v2119, %v2134
        %v2161 = vmul.f32 %v2120, %v2134
        %v2162 = vmul.f32 %v2121, %v2134
        %v2163 = vmul.f32 %v2122, %v2134
        %v2164 = vmul.f32 %v2123, %v2134
        %v2165 = vmul.f32 %v2124, %v2134
        %v2166 = vmul.f32 %v2125, %v2134
        %v2167 = vmul.f32 %v2126, %v2134
        %v2168 = vmul.f32 %v2127, %v2134
        %v2169 = vmul.f32 %v2128, %v2134
        %v2170 = vmul.f32 %v2129, %v2134
        %v2171 = vadd.f32 %v2058, %v2135
        %v2172 = vadd.f32 %v2059, %v2136
        %v2173 = vadd.f32 %v2060, %v2137
        %v2174 = vadd.f32 %v2061, %v2138
        %v2175 = vadd.f32 %v2062, %v2139
        %v2176 = vadd.f32 %v2063, %v2140
        %v2177 = vadd.f32 %v2064, %v2141
        %v2178 = vadd.f32 %v2065, %v2142
        %v2179 = vadd.f32 %v2066, %v2143
        %v2180 = vadd.f32 %v2067, %v2144
        %v2181 = vadd.f32 %v2068, %v2145
        %v2182 = vadd.f32 %v2069, %v2146
        %v2183 = vadd.f32 %v2070, %v2147
        %v2184 = vadd.f32 %v2071, %v2148
        %v2185 = vadd.f32 %v2072, %v2149
        %v2186 = vadd.f32 %v2073, %v2150
        %v2187 = vadd.f32 %v2074, %v2151
        %v2188 = vadd.f32 %v2075, %v2152
        %v2189 = vadd.f32 %v2076, %v2153
        %v2190 = vadd.f32 %v2077, %v2154
        %v2191 = vadd.f32 %v2078, %v2155
        %v2192 = vadd.f32 %v2079, %v2156
        %v2193 = vadd.f32 %v2080, %v2157
        %v2194 = vadd.f32 %v2081, %v2158
        %v2195 = vadd.f32 %v2082, %v2159
        %v2196 = vadd.f32 %v2083, %v2160
        %v2197 = vadd.f32 %v2084, %v2161
        %v2198 = vadd.f32 %v2085, %v2162
        %v2199 = vadd.f32 %v2086, %v2163
        %v2200 = vadd.f32 %v2087, %v2164
        %v2201 = vadd.f32 %v2088, %v2165
        %v2202 = vadd.f32 %v2089, %v2166
        %v2203 = vadd.f32 %v2090, %v2167
        %v2204 = vadd.f32 %v2091, %v2168
        %v2205 = vadd.f32 %v2092, %v2169
        %v2206 = vadd.f32 %v2093, %v2170
        %v2207 = vld [vmem:[#allocation2 + $0x134] sm:$0xff]
        %v2208 = vld [vmem:[#allocation2 + $0x13c] sm:$0xff]
        %v2209 = vld [vmem:[%s3 + $0x6] sm:$0x1]
        %v2210 = vlaneseq
        %v2211 = vshrl.u32 %v2210, 7
        %v2212 = vsub.s32 0, %v2211
        %v2213 = vrot.slane %v2209, %v2212
        %v2214 = vmul.f32 %v2096, %v2213
        %v2215 = vmul.f32 %v2097, %v2213
        %v2216 = vmul.f32 %v2098, %v2213
        %v2217 = vmul.f32 %v2099, %v2213
        %v2218 = vmul.f32 %v2100, %v2213
        %v2219 = vmul.f32 %v2101, %v2213
        %v2220 = vmul.f32 %v2102, %v2213
        %v2221 = vmul.f32 %v2103, %v2213
        %v2222 = vmul.f32 %v2104, %v2213
        %v2223 = vmul.f32 %v2105, %v2213
        %v2224 = vmul.f32 %v2106, %v2213
        %v2225 = vmul.f32 %v2107, %v2213
        %v2226 = vmul.f32 %v2108, %v2213
        %v2227 = vmul.f32 %v2109, %v2213
        %v2228 = vmul.f32 %v2110, %v2213
        %v2229 = vmul.f32 %v2111, %v2213
        %v2230 = vmul.f32 %v2112, %v2213
        %v2231 = vmul.f32 %v2113, %v2213
        %v2232 = vmul.f32 %v2114, %v2213
        %v2233 = vmul.f32 %v2115, %v2213
        %v2234 = vmul.f32 %v2116, %v2213
        %v2235 = vmul.f32 %v2117, %v2213
        %v2236 = vmul.f32 %v2118, %v2213
        %v2237 = vmul.f32 %v2119, %v2213
        %v2238 = vmul.f32 %v2120, %v2213
        %v2239 = vmul.f32 %v2121, %v2213
        %v2240 = vmul.f32 %v2122, %v2213
        %v2241 = vmul.f32 %v2123, %v2213
        %v2242 = vmul.f32 %v2124, %v2213
        %v2243 = vmul.f32 %v2125, %v2213
        %v2244 = vmul.f32 %v2126, %v2213
        %v2245 = vmul.f32 %v2127, %v2213
        %v2246 = vmul.f32 %v2128, %v2213
        %v2247 = vmul.f32 %v2129, %v2213
        %v2248 = vmul.f32 %v2207, %v2213
        %v2249 = vmul.f32 %v2208, %v2213
        %v2250 = vadd.f32 %v2171, %v2214
        %v2251 = vadd.f32 %v2172, %v2215
        %v2252 = vadd.f32 %v2173, %v2216
        %v2253 = vadd.f32 %v2174, %v2217
        %v2254 = vadd.f32 %v2175, %v2218
        %v2255 = vadd.f32 %v2176, %v2219
        %v2256 = vadd.f32 %v2177, %v2220
        %v2257 = vadd.f32 %v2178, %v2221
        %v2258 = vadd.f32 %v2179, %v2222
        %v2259 = vadd.f32 %v2180, %v2223
        %v2260 = vadd.f32 %v2181, %v2224
        %v2261 = vadd.f32 %v2182, %v2225
        %v2262 = vadd.f32 %v2183, %v2226
        %v2263 = vadd.f32 %v2184, %v2227
        %v2264 = vadd.f32 %v2185, %v2228
        %v2265 = vadd.f32 %v2186, %v2229
        %v2266 = vadd.f32 %v2187, %v2230
        %v2267 = vadd.f32 %v2188, %v2231
        %v2268 = vadd.f32 %v2189, %v2232
        %v2269 = vadd.f32 %v2190, %v2233
        %v2270 = vadd.f32 %v2191, %v2234
        %v2271 = vadd.f32 %v2192, %v2235
        %v2272 = vadd.f32 %v2193, %v2236
        %v2273 = vadd.f32 %v2194, %v2237
        %v2274 = vadd.f32 %v2195, %v2238
        %v2275 = vadd.f32 %v2196, %v2239
        %v2276 = vadd.f32 %v2197, %v2240
        %v2277 = vadd.f32 %v2198, %v2241
        %v2278 = vadd.f32 %v2199, %v2242
        %v2279 = vadd.f32 %v2200, %v2243
        %v2280 = vadd.f32 %v2201, %v2244
        %v2281 = vadd.f32 %v2202, %v2245
        %v2282 = vadd.f32 %v2203, %v2246
        %v2283 = vadd.f32 %v2204, %v2247
        %v2284 = vadd.f32 %v2205, %v2248
        %v2285 = vadd.f32 %v2206, %v2249
        %v2286 = vld [vmem:[#allocation2 + $0x25] sm:$0xff]
        %v2287 = vld [vmem:[#allocation2 + $0x2d] sm:$0xff]
        %v2288 = vld [vmem:[#allocation2 + $0x35] sm:$0xff]
        %v2289 = vld [vmem:[#allocation2 + $0x3d] sm:$0xff]
        %v2290 = vld [vmem:[#allocation2 + $0x45] sm:$0xff]
        %v2291 = vld [vmem:[#allocation2 + $0x4d] sm:$0xff]
        %v2292 = vld [vmem:[#allocation2 + $0x55] sm:$0xff]
        %v2293 = vld [vmem:[#allocation2 + $0x5d] sm:$0xff]
        %v2294 = vld [vmem:[#allocation2 + $0x65] sm:$0xff]
        %v2295 = vld [vmem:[#allocation2 + $0x6d] sm:$0xff]
        %v2296 = vld [vmem:[#allocation2 + $0x75] sm:$0xff]
        %v2297 = vld [vmem:[#allocation2 + $0x7d] sm:$0xff]
        %v2298 = vld [vmem:[#allocation2 + $0x85] sm:$0xff]
        %v2299 = vld [vmem:[#allocation2 + $0x8d] sm:$0xff]
        %v2300 = vld [vmem:[#allocation2 + $0x95] sm:$0xff]
        %v2301 = vld [vmem:[#allocation2 + $0x9d] sm:$0xff]
        %v2302 = vld [vmem:[#allocation2 + $0xa5] sm:$0xff]
        %v2303 = vld [vmem:[#allocation2 + $0xad] sm:$0xff]
        %v2304 = vld [vmem:[#allocation2 + $0xb5] sm:$0xff]
        %v2305 = vld [vmem:[#allocation2 + $0xbd] sm:$0xff]
        %v2306 = vld [vmem:[#allocation2 + $0xc5] sm:$0xff]
        %v2307 = vld [vmem:[#allocation2 + $0xcd] sm:$0xff]
        %v2308 = vld [vmem:[#allocation2 + $0xd5] sm:$0xff]
        %v2309 = vld [vmem:[#allocation2 + $0xdd] sm:$0xff]
        %v2310 = vld [vmem:[#allocation2 + $0xe5] sm:$0xff]
        %v2311 = vld [vmem:[#allocation2 + $0xed] sm:$0xff]
        %v2312 = vld [vmem:[#allocation2 + $0xf5] sm:$0xff]
        %v2313 = vld [vmem:[#allocation2 + $0xfd] sm:$0xff]
        %v2314 = vld [vmem:[#allocation2 + $0x105] sm:$0xff]
        %v2315 = vld [vmem:[#allocation2 + $0x10d] sm:$0xff]
        %v2316 = vld [vmem:[#allocation2 + $0x115] sm:$0xff]
        %v2317 = vld [vmem:[#allocation2 + $0x11d] sm:$0xff]
        %v2318 = vld [vmem:[#allocation2 + $0x125] sm:$0xff]
        %v2319 = vld [vmem:[#allocation2 + $0x12d] sm:$0xff]
        %v2320 = vld [vmem:[#allocation2 + $0x135] sm:$0xff]
        %v2321 = vld [vmem:[#allocation2 + $0x13d] sm:$0xff]
        %v2322 = vld [vmem:[%s3 + $0x7] sm:$0x1]
        %v2323 = vlaneseq
        %v2324 = vshrl.u32 %v2323, 7
        %v2325 = vsub.s32 0, %v2324
        %v2326 = vrot.slane %v2322, %v2325
        %v2327 = vmul.f32 %v2286, %v2326
        %v2328 = vmul.f32 %v2287, %v2326
        %v2329 = vmul.f32 %v2288, %v2326
        %v2330 = vmul.f32 %v2289, %v2326
        %v2331 = vmul.f32 %v2290, %v2326
        %v2332 = vmul.f32 %v2291, %v2326
        %v2333 = vmul.f32 %v2292, %v2326
        %v2334 = vmul.f32 %v2293, %v2326
        %v2335 = vmul.f32 %v2294, %v2326
        %v2336 = vmul.f32 %v2295, %v2326
        %v2337 = vmul.f32 %v2296, %v2326
        %v2338 = vmul.f32 %v2297, %v2326
        %v2339 = vmul.f32 %v2298, %v2326
        %v2340 = vmul.f32 %v2299, %v2326
        %v2341 = vmul.f32 %v2300, %v2326
        %v2342 = vmul.f32 %v2301, %v2326
        %v2343 = vmul.f32 %v2302, %v2326
        %v2344 = vmul.f32 %v2303, %v2326
        %v2345 = vmul.f32 %v2304, %v2326
        %v2346 = vmul.f32 %v2305, %v2326
        %v2347 = vmul.f32 %v2306, %v2326
        %v2348 = vmul.f32 %v2307, %v2326
        %v2349 = vmul.f32 %v2308, %v2326
        %v2350 = vmul.f32 %v2309, %v2326
        %v2351 = vmul.f32 %v2310, %v2326
        %v2352 = vmul.f32 %v2311, %v2326
        %v2353 = vmul.f32 %v2312, %v2326
        %v2354 = vmul.f32 %v2313, %v2326
        %v2355 = vmul.f32 %v2314, %v2326
        %v2356 = vmul.f32 %v2315, %v2326
        %v2357 = vmul.f32 %v2316, %v2326
        %v2358 = vmul.f32 %v2317, %v2326
        %v2359 = vmul.f32 %v2318, %v2326
        %v2360 = vmul.f32 %v2319, %v2326
        %v2361 = vmul.f32 %v2320, %v2326
        %v2362 = vmul.f32 %v2321, %v2326
        %v2363 = vadd.f32 %v2250, %v2327
        %v2364 = vadd.f32 %v2251, %v2328
        %v2365 = vadd.f32 %v2252, %v2329
        %v2366 = vadd.f32 %v2253, %v2330
        %v2367 = vadd.f32 %v2254, %v2331
        %v2368 = vadd.f32 %v2255, %v2332
        %v2369 = vadd.f32 %v2256, %v2333
        %v2370 = vadd.f32 %v2257, %v2334
        %v2371 = vadd.f32 %v2258, %v2335
        %v2372 = vadd.f32 %v2259, %v2336
        %v2373 = vadd.f32 %v2260, %v2337
        %v2374 = vadd.f32 %v2261, %v2338
        %v2375 = vadd.f32 %v2262, %v2339
        %v2376 = vadd.f32 %v2263, %v2340
        %v2377 = vadd.f32 %v2264, %v2341
        %v2378 = vadd.f32 %v2265, %v2342
        %v2379 = vadd.f32 %v2266, %v2343
        %v2380 = vadd.f32 %v2267, %v2344
        %v2381 = vadd.f32 %v2268, %v2345
        %v2382 = vadd.f32 %v2269, %v2346
        %v2383 = vadd.f32 %v2270, %v2347
        %v2384 = vadd.f32 %v2271, %v2348
        %v2385 = vadd.f32 %v2272, %v2349
        %v2386 = vadd.f32 %v2273, %v2350
        %v2387 = vadd.f32 %v2274, %v2351
        %v2388 = vadd.f32 %v2275, %v2352
        %v2389 = vadd.f32 %v2276, %v2353
        %v2390 = vadd.f32 %v2277, %v2354
        %v2391 = vadd.f32 %v2278, %v2355
        %v2392 = vadd.f32 %v2279, %v2356
        %v2393 = vadd.f32 %v2280, %v2357
        %v2394 = vadd.f32 %v2281, %v2358
        %v2395 = vadd.f32 %v2282, %v2359
        %v2396 = vadd.f32 %v2283, %v2360
        %v2397 = vadd.f32 %v2284, %v2361
        %v2398 = vadd.f32 %v2285, %v2362
        %v2399 = vld [vmem:[#allocation2 + $0x26] sm:$0xff]
        %v2400 = vld [vmem:[#allocation2 + $0x2e] sm:$0xff]
        %v2401 = vld [vmem:[#allocation2 + $0x36] sm:$0xff]
        %v2402 = vld [vmem:[#allocation2 + $0x3e] sm:$0xff]
        %v2403 = vld [vmem:[#allocation2 + $0x46] sm:$0xff]
        %v2404 = vld [vmem:[#allocation2 + $0x4e] sm:$0xff]
        %v2405 = vld [vmem:[#allocation2 + $0x56] sm:$0xff]
        %v2406 = vld [vmem:[#allocation2 + $0x5e] sm:$0xff]
        %v2407 = vld [vmem:[#allocation2 + $0x66] sm:$0xff]
        %v2408 = vld [vmem:[#allocation2 + $0x6e] sm:$0xff]
        %v2409 = vld [vmem:[#allocation2 + $0x76] sm:$0xff]
        %v2410 = vld [vmem:[#allocation2 + $0x7e] sm:$0xff]
        %v2411 = vld [vmem:[#allocation2 + $0x86] sm:$0xff]
        %v2412 = vld [vmem:[#allocation2 + $0x8e] sm:$0xff]
        %v2413 = vld [vmem:[#allocation2 + $0x96] sm:$0xff]
        %v2414 = vld [vmem:[#allocation2 + $0x9e] sm:$0xff]
        %v2415 = vld [vmem:[#allocation2 + $0xa6] sm:$0xff]
        %v2416 = vld [vmem:[#allocation2 + $0xae] sm:$0xff]
        %v2417 = vld [vmem:[#allocation2 + $0xb6] sm:$0xff]
        %v2418 = vld [vmem:[#allocation2 + $0xbe] sm:$0xff]
        %v2419 = vld [vmem:[#allocation2 + $0xc6] sm:$0xff]
        %v2420 = vld [vmem:[#allocation2 + $0xce] sm:$0xff]
        %v2421 = vld [vmem:[#allocation2 + $0xd6] sm:$0xff]
        %v2422 = vld [vmem:[#allocation2 + $0xde] sm:$0xff]
        %v2423 = vld [vmem:[#allocation2 + $0xe6] sm:$0xff]
        %v2424 = vld [vmem:[#allocation2 + $0xee] sm:$0xff]
        %v2425 = vld [vmem:[#allocation2 + $0xf6] sm:$0xff]
        %v2426 = vld [vmem:[#allocation2 + $0xfe] sm:$0xff]
        %v2427 = vld [vmem:[#allocation2 + $0x106] sm:$0xff]
        %v2428 = vld [vmem:[#allocation2 + $0x10e] sm:$0xff]
        %v2429 = vld [vmem:[#allocation2 + $0x116] sm:$0xff]
        %v2430 = vld [vmem:[#allocation2 + $0x11e] sm:$0xff]
        %v2431 = vld [vmem:[#allocation2 + $0x126] sm:$0xff]
        %v2432 = vld [vmem:[#allocation2 + $0x12e] sm:$0xff]
        %v2433 = vld [vmem:[#allocation2 + $0x136] sm:$0xff]
        %v2434 = vld [vmem:[#allocation2 + $0x13e] sm:$0xff]
        %v2435 = vld [vmem:[%s3 + $0x8] sm:$0x1]
        %v2436 = vlaneseq
        %v2437 = vshrl.u32 %v2436, 7
        %v2438 = vsub.s32 0, %v2437
        %v2439 = vrot.slane %v2435, %v2438
        %v2440 = vmul.f32 %v2399, %v2439
        %v2441 = vmul.f32 %v2400, %v2439
        %v2442 = vmul.f32 %v2401, %v2439
        %v2443 = vmul.f32 %v2402, %v2439
        %v2444 = vmul.f32 %v2403, %v2439
        %v2445 = vmul.f32 %v2404, %v2439
        %v2446 = vmul.f32 %v2405, %v2439
        %v2447 = vmul.f32 %v2406, %v2439
        %v2448 = vmul.f32 %v2407, %v2439
        %v2449 = vmul.f32 %v2408, %v2439
        %v2450 = vmul.f32 %v2409, %v2439
        %v2451 = vmul.f32 %v2410, %v2439
        %v2452 = vmul.f32 %v2411, %v2439
        %v2453 = vmul.f32 %v2412, %v2439
        %v2454 = vmul.f32 %v2413, %v2439
        %v2455 = vmul.f32 %v2414, %v2439
        %v2456 = vmul.f32 %v2415, %v2439
        %v2457 = vmul.f32 %v2416, %v2439
        %v2458 = vmul.f32 %v2417, %v2439
        %v2459 = vmul.f32 %v2418, %v2439
        %v2460 = vmul.f32 %v2419, %v2439
        %v2461 = vmul.f32 %v2420, %v2439
        %v2462 = vmul.f32 %v2421, %v2439
        %v2463 = vmul.f32 %v2422, %v2439
        %v2464 = vmul.f32 %v2423, %v2439
        %v2465 = vmul.f32 %v2424, %v2439
        %v2466 = vmul.f32 %v2425, %v2439
        %v2467 = vmul.f32 %v2426, %v2439
        %v2468 = vmul.f32 %v2427, %v2439
        %v2469 = vmul.f32 %v2428, %v2439
        %v2470 = vmul.f32 %v2429, %v2439
        %v2471 = vmul.f32 %v2430, %v2439
        %v2472 = vmul.f32 %v2431, %v2439
        %v2473 = vmul.f32 %v2432, %v2439
        %v2474 = vmul.f32 %v2433, %v2439
        %v2475 = vmul.f32 %v2434, %v2439
        %v2476 = vadd.f32 %v2363, %v2440
        %v2477 = vadd.f32 %v2364, %v2441
        %v2478 = vadd.f32 %v2365, %v2442
        %v2479 = vadd.f32 %v2366, %v2443
        %v2480 = vadd.f32 %v2367, %v2444
        %v2481 = vadd.f32 %v2368, %v2445
        %v2482 = vadd.f32 %v2369, %v2446
        %v2483 = vadd.f32 %v2370, %v2447
        %v2484 = vadd.f32 %v2371, %v2448
        %v2485 = vadd.f32 %v2372, %v2449
        %v2486 = vadd.f32 %v2373, %v2450
        %v2487 = vadd.f32 %v2374, %v2451
        %v2488 = vadd.f32 %v2375, %v2452
        %v2489 = vadd.f32 %v2376, %v2453
        %v2490 = vadd.f32 %v2377, %v2454
        %v2491 = vadd.f32 %v2378, %v2455
        %v2492 = vadd.f32 %v2379, %v2456
        %v2493 = vadd.f32 %v2380, %v2457
        %v2494 = vadd.f32 %v2381, %v2458
        %v2495 = vadd.f32 %v2382, %v2459
        %v2496 = vadd.f32 %v2383, %v2460
        %v2497 = vadd.f32 %v2384, %v2461
        %v2498 = vadd.f32 %v2385, %v2462
        %v2499 = vadd.f32 %v2386, %v2463
        %v2500 = vadd.f32 %v2387, %v2464
        %v2501 = vadd.f32 %v2388, %v2465
        %v2502 = vadd.f32 %v2389, %v2466
        %v2503 = vadd.f32 %v2390, %v2467
        %v2504 = vadd.f32 %v2391, %v2468
        %v2505 = vadd.f32 %v2392, %v2469
        %v2506 = vadd.f32 %v2393, %v2470
        %v2507 = vadd.f32 %v2394, %v2471
        %v2508 = vadd.f32 %v2395, %v2472
        %v2509 = vadd.f32 %v2396, %v2473
        %v2510 = vadd.f32 %v2397, %v2474
        %v2511 = vadd.f32 %v2398, %v2475
        %v2512 = vld [vmem:[%s4] sm:$0x1]
        %v2514 = vlaneseq
        %v2515 = vshrl.u32 %v2514, 7
        %v2516 = vsub.s32 0, %v2515
        %v2517 = vrot.slane %v2512, %v2516
        %v2519 = vadd.f32 %v2476, %v2517
        %v2520 = vadd.f32 %v2477, %v2517
        %v2521 = vadd.f32 %v2478, %v2517
        %v2522 = vadd.f32 %v2479, %v2517
        %v2523 = vadd.f32 %v2480, %v2517
        %v2524 = vadd.f32 %v2481, %v2517
        %v2525 = vadd.f32 %v2482, %v2517
        %v2526 = vadd.f32 %v2483, %v2517
        %v2527 = vadd.f32 %v2484, %v2517
        %v2528 = vadd.f32 %v2485, %v2517
        %v2529 = vadd.f32 %v2486, %v2517
        %v2530 = vadd.f32 %v2487, %v2517
        %v2531 = vadd.f32 %v2488, %v2517
        %v2532 = vadd.f32 %v2489, %v2517
        %v2533 = vadd.f32 %v2490, %v2517
        %v2534 = vadd.f32 %v2491, %v2517
        %v2535 = vadd.f32 %v2492, %v2517
        %v2536 = vadd.f32 %v2493, %v2517
        %v2537 = vadd.f32 %v2494, %v2517
        %v2538 = vadd.f32 %v2495, %v2517
        %v2539 = vadd.f32 %v2496, %v2517
        %v2540 = vadd.f32 %v2497, %v2517
        %v2541 = vadd.f32 %v2498, %v2517
        %v2542 = vadd.f32 %v2499, %v2517
        %v2543 = vadd.f32 %v2500, %v2517
        %v2544 = vadd.f32 %v2501, %v2517
        %v2545 = vadd.f32 %v2502, %v2517
        %v2546 = vadd.f32 %v2503, %v2517
        %v2547 = vadd.f32 %v2504, %v2517
        %v2548 = vadd.f32 %v2505, %v2517
        %v2549 = vadd.f32 %v2506, %v2517
        %v2550 = vadd.f32 %v2507, %v2517
        %v2551 = vadd.f32 %v2508, %v2517
        %v2552 = vadd.f32 %v2509, %v2517
        %v2553 = vadd.f32 %v2510, %v2517
        %v2554 = vadd.f32 %v2511, %v2517
        %v2555 = vmax.f32 %v2519, 0.0
        %v2556 = vmax.f32 %v2520, 0.0
        %v2557 = vmax.f32 %v2521, 0.0
        %v2558 = vmax.f32 %v2522, 0.0
        %v2559 = vmax.f32 %v2523, 0.0
        %v2560 = vmax.f32 %v2524, 0.0
        %v2561 = vmax.f32 %v2525, 0.0
        %v2562 = vmax.f32 %v2526, 0.0
        %v2563 = vmax.f32 %v2527, 0.0
        %v2564 = vmax.f32 %v2528, 0.0
        %v2565 = vmax.f32 %v2529, 0.0
        %v2566 = vmax.f32 %v2530, 0.0
        %v2567 = vmax.f32 %v2531, 0.0
        %v2568 = vmax.f32 %v2532, 0.0
        %v2569 = vmax.f32 %v2533, 0.0
        %v2570 = vmax.f32 %v2534, 0.0
        %v2571 = vmax.f32 %v2535, 0.0
        %v2572 = vmax.f32 %v2536, 0.0
        %v2573 = vmax.f32 %v2537, 0.0
        %v2574 = vmax.f32 %v2538, 0.0
        %v2575 = vmax.f32 %v2539, 0.0
        %v2576 = vmax.f32 %v2540, 0.0
        %v2577 = vmax.f32 %v2541, 0.0
        %v2578 = vmax.f32 %v2542, 0.0
        %v2579 = vmax.f32 %v2543, 0.0
        %v2580 = vmax.f32 %v2544, 0.0
        %v2581 = vmax.f32 %v2545, 0.0
        %v2582 = vmax.f32 %v2546, 0.0
        %v2583 = vmax.f32 %v2547, 0.0
        %v2584 = vmax.f32 %v2548, 0.0
        %v2585 = vmax.f32 %v2549, 0.0
        %v2586 = vmax.f32 %v2550, 0.0
        %v2587 = vmax.f32 %v2551, 0.0
        %v2588 = vmax.f32 %v2552, 0.0
        %v2589 = vmax.f32 %v2553, 0.0
        %v2590 = vmax.f32 %v2554, 0.0
        %v2591 = vmin.f32 %v2555, 6.0
        %v2592 = vmin.f32 %v2556, 6.0
        %v2593 = vmin.f32 %v2557, 6.0
        %v2594 = vmin.f32 %v2558, 6.0
        %v2595 = vmin.f32 %v2559, 6.0
        %v2596 = vmin.f32 %v2560, 6.0
        %v2597 = vmin.f32 %v2561, 6.0
        %v2598 = vmin.f32 %v2562, 6.0
        %v2599 = vmin.f32 %v2563, 6.0
        %v2600 = vmin.f32 %v2564, 6.0
        %v2601 = vmin.f32 %v2565, 6.0
        %v2602 = vmin.f32 %v2566, 6.0
        %v2603 = vmin.f32 %v2567, 6.0
        %v2604 = vmin.f32 %v2568, 6.0
        %v2605 = vmin.f32 %v2569, 6.0
        %v2606 = vmin.f32 %v2570, 6.0
        %v2607 = vmin.f32 %v2571, 6.0
        %v2608 = vmin.f32 %v2572, 6.0
        %v2609 = vmin.f32 %v2573, 6.0
        %v2610 = vmin.f32 %v2574, 6.0
        %v2611 = vmin.f32 %v2575, 6.0
        %v2612 = vmin.f32 %v2576, 6.0
        %v2613 = vmin.f32 %v2577, 6.0
        %v2614 = vmin.f32 %v2578, 6.0
        %v2615 = vmin.f32 %v2579, 6.0
        %v2616 = vmin.f32 %v2580, 6.0
        %v2617 = vmin.f32 %v2581, 6.0
        %v2618 = vmin.f32 %v2582, 6.0
        %v2619 = vmin.f32 %v2583, 6.0
        %v2620 = vmin.f32 %v2584, 6.0
        %v2621 = vmin.f32 %v2585, 6.0
        %v2622 = vmin.f32 %v2586, 6.0
        %v2623 = vmin.f32 %v2587, 6.0
        %v2624 = vmin.f32 %v2588, 6.0
        %v2625 = vmin.f32 %v2589, 6.0
        %v2626 = vmin.f32 %v2590, 6.0
        %v2627 = vld [vmem:[%s5] sm:$0xff]
        %v2628 = vld [vmem:[%s5 + $0x8] sm:$0xff]
        %v2629 = vld [vmem:[%s5 + $0x10] sm:$0xff]
        %v2630 = vld [vmem:[%s6] sm:$0x1]
        %v2632 = vlaneseq
        %v2633 = vshrl.u32 %v2632, 7
        %v2634 = vsub.s32 0, %v2633
        %v2635 = vrot.slane %v2630, %v2634
        %v2638 = vsel %vm1519, %v2591, 0
        %v2641 = vsel %vm1519, %v2592, 0
        %v2644 = vsel %vm1519, %v2593, 0
        %v2647 = vsel %vm1519, %v2594, 0
        %v2650 = vsel %vm1519, %v2595, 0
        %v2653 = vsel %vm1519, %v2596, 0
        %v2656 = vsel %vm1519, %v2597, 0
        %v2659 = vsel %vm1519, %v2598, 0
        %v2662 = vsel %vm1519, %v2599, 0
        %v2665 = vsel %vm1519, %v2600, 0
        %v2668 = vsel %vm1519, %v2601, 0
        %v2671 = vsel %vm1519, %v2602, 0
        %v2674 = vsel %vm1519, %v2603, 0
        %v2677 = vsel %vm1519, %v2604, 0
        %v2680 = vsel %vm1519, %v2605, 0
        %v2683 = vsel %vm1519, %v2606, 0
        %v2686 = vsel %vm1519, %v2607, 0
        %v2689 = vsel %vm1519, %v2608, 0
        %v2692 = vsel %vm1519, %v2609, 0
        %v2695 = vsel %vm1519, %v2610, 0
        %v2698 = vsel %vm1519, %v2611, 0
        %v2701 = vsel %vm1519, %v2612, 0
        %v2704 = vsel %vm1519, %v2613, 0
        %v2707 = vsel %vm1519, %v2614, 0
        %v2710 = vsel %vm1519, %v2615, 0
        %v2713 = vsel %vm1519, %v2616, 0
        %v2716 = vsel %vm1519, %v2617, 0
        %v2719 = vsel %vm1519, %v2618, 0
        %v2722 = vsel %vm1519, %v2619, 0
        %v2725 = vsel %vm1519, %v2620, 0
        %v2728 = vsel %vm1519, %v2621, 0
        %v2731 = vsel %vm1519, %v2622, 0
        %v2734 = vsel %vm1519, %v2623, 0
        %v2737 = vsel %vm1519, %v2624, 0
        %v2740 = vsel %vm1519, %v2625, 0
        %v2743 = vsel %vm1519, %v2626, 0
        %2745 = vmatprep.subr.mxu0 0.0
        %2746 = vmatpush1.msra.mxu0 %v2627
        %2747 = vmatprep.subr.mxu0 0.0
        %2748 = vmatpush1.msra.mxu0 %v2628
        %2749 = vmatprep.subr.mxu0 0.0
        %2750 = vmatpush1.msra.mxu0 %v2629
        %2751 = vmatprep.subr.mxu0 0.0
        %2752 = vmatpush1.msra.mxu0 0.0
        %2753 = vmatprep.subr.mxu0 0.0
        %2754 = vmatpush1.msra.mxu0 0.0
        %2755 = vmatprep.subr.mxu0 0.0
        %2756 = vmatpush1.msra.mxu0 0.0
        %2757 = vmatprep.subr.mxu0 0.0
        %2758 = vmatpush1.msra.mxu0 0.0
        %2759 = vmatprep.subr.mxu0 0.0
        %2760 = vmatpush1.msra.mxu0 0.0
        %2761 = vmatprep.subr.mxu0 0.0
        %2762 = vmatpush1.msra.mxu0 0.0
        %2763 = vmatprep.subr.mxu0 0.0
        %2764 = vmatpush1.msra.mxu0 0.0
        %2765 = vmatprep.subr.mxu0 0.0
        %2766 = vmatpush1.msra.mxu0 0.0
        %2767 = vmatprep.subr.mxu0 0.0
        %2768 = vmatpush1.msra.mxu0 0.0
        %2769 = vmatprep.subr.mxu0 0.0
        %2770 = vmatpush1.msra.mxu0 0.0
        %2771 = vmatprep.subr.mxu0 0.0
        %2772 = vmatpush1.msra.mxu0 0.0
        %2773 = vmatprep.subr.mxu0 0.0
        %2774 = vmatpush1.msra.mxu0 0.0
        %2775 = vmatprep.subr.mxu0 0.0
        %2776 = vmatpush1.msra.mxu0 0.0
        %2777 = vmatprep.subr.mxu0 0.0
        %2778 = vmatpush1.msra.mxu0 0.0
        %2779 = vmatprep.subr.mxu0 0.0
        %2780 = vmatpush1.msra.mxu0 0.0
        %2781 = vmatprep.subr.mxu0 0.0
        %2782 = vmatpush1.msra.mxu0 0.0
        %2783 = vmatprep.subr.mxu0 0.0
        %2784 = vmatpush1.msra.mxu0 0.0
        %2785 = vmatprep.subr.mxu0 0.0
        %2786 = vmatpush1.msra.mxu0 0.0
        %2787 = vmatprep.subr.mxu0 0.0
        %2788 = vmatpush1.msra.mxu0 0.0
        %2789 = vmatprep.subr.mxu0 0.0
        %2790 = vmatpush1.msra.mxu0 0.0
        %2791 = vmatprep.subr.mxu0 0.0
        %2792 = vmatpush1.msra.mxu0 0.0
        %2793 = vmatprep.subr.mxu0 0.0
        %2794 = vmatpush1.msra.mxu0 0.0
        %2795 = vmatprep.subr.mxu0 0.0
        %2796 = vmatpush1.msra.mxu0 0.0
        %2797 = vmatprep.subr.mxu0 0.0
        %2798 = vmatpush1.msra.mxu0 0.0
        %2799 = vmatprep.subr.mxu0 0.0
        %2800 = vmatpush1.msra.mxu0 0.0
        %2801 = vmatprep.subr.mxu0 0.0
        %2802 = vmatpush1.msra.mxu0 0.0
        %2803 = vmatprep.subr.mxu0 0.0
        %2804 = vmatpush1.msra.mxu0 0.0
        %2805 = vmatprep.subr.mxu0 0.0
        %2806 = vmatpush1.msra.mxu0 0.0
        %2807 = vmatprep.subr.mxu0 0.0
        %2808 = vmatpush1.msra.mxu0 0.0
        %2809 = vmatprep.mubr.f32.mxu0 0.0
        %2810 = vmatmul.mubr.f32.gmra.mrb[0].mxu0 %v2638
        %v2811 = vpop.f32.mrb[0].mxu0
        %v2812 = vadd.f32 %v2635, %v2811
        %v2813 = vpop.f32.mrb[0].mxu0
        %2814 = vmatprep.mubr.f32.mxu0 0.0
        %2815 = vmatmul.mubr.f32.gmra.mrb[0].mxu0 %v2641
        %v2816 = vpop.f32.mrb[0].mxu0
        %v2817 = vadd.f32 %v2635, %v2816
        %v2818 = vpop.f32.mrb[0].mxu0
        %2819 = vmatprep.mubr.f32.mxu0 0.0
        %2820 = vmatmul.mubr.f32.gmra.mrb[0].mxu0 %v2644
        %v2821 = vpop.f32.mrb[0].mxu0
        %v2822 = vadd.f32 %v2635, %v2821
        %v2823 = vpop.f32.mrb[0].mxu0
        %2824 = vmatprep.mubr.f32.mxu0 0.0
        %2825 = vmatmul.mubr.f32.gmra.mrb[0].mxu0 %v2647
        %v2826 = vpop.f32.mrb[0].mxu0
        %v2827 = vadd.f32 %v2635, %v2826
        %v2828 = vpop.f32.mrb[0].mxu0
        %2829 = vmatprep.mubr.f32.mxu0 0.0
        %2830 = vmatmul.mubr.f32.gmra.mrb[0].mxu0 %v2650
        %v2831 = vpop.f32.mrb[0].mxu0
        %v2832 = vadd.f32 %v2635, %v2831
        %v2833 = vpop.f32.mrb[0].mxu0
        %2834 = vmatprep.mubr.f32.mxu0 0.0
        %2835 = vmatmul.mubr.f32.gmra.mrb[0].mxu0 %v2653
        %v2836 = vpop.f32.mrb[0].mxu0
        %v2837 = vadd.f32 %v2635, %v2836
        %v2838 = vpop.f32.mrb[0].mxu0
        %2839 = vmatprep.mubr.f32.mxu0 0.0
        %2840 = vmatmul.mubr.f32.gmra.mrb[0].mxu0 %v2656
        %v2841 = vpop.f32.mrb[0].mxu0
        %v2842 = vadd.f32 %v2635, %v2841
        %v2843 = vpop.f32.mrb[0].mxu0
        %2844 = vmatprep.mubr.f32.mxu0 0.0
        %2845 = vmatmul.mubr.f32.gmra.mrb[0].mxu0 %v2659
        %v2846 = vpop.f32.mrb[0].mxu0
        %v2847 = vadd.f32 %v2635, %v2846
        %v2848 = vpop.f32.mrb[0].mxu0
        %2849 = vmatprep.mubr.f32.mxu0 0.0
        %2850 = vmatmul.mubr.f32.gmra.mrb[0].mxu0 %v2662
        %v2851 = vpop.f32.mrb[0].mxu0
        %v2852 = vadd.f32 %v2635, %v2851
        %v2853 = vpop.f32.mrb[0].mxu0
        %2854 = vmatprep.mubr.f32.mxu0 0.0
        %2855 = vmatmul.mubr.f32.gmra.mrb[0].mxu0 %v2665
        %v2856 = vpop.f32.mrb[0].mxu0
        %v2857 = vadd.f32 %v2635, %v2856
        %v2858 = vpop.f32.mrb[0].mxu0
        %2859 = vmatprep.mubr.f32.mxu0 0.0
        %2860 = vmatmul.mubr.f32.gmra.mrb[0].mxu0 %v2668
        %v2861 = vpop.f32.mrb[0].mxu0
        %v2862 = vadd.f32 %v2635, %v2861
        %v2863 = vpop.f32.mrb[0].mxu0
        %2864 = vmatprep.mubr.f32.mxu0 0.0
        %2865 = vmatmul.mubr.f32.gmra.mrb[0].mxu0 %v2671
        %v2866 = vpop.f32.mrb[0].mxu0
        %v2867 = vadd.f32 %v2635, %v2866
        %v2868 = vpop.f32.mrb[0].mxu0
        %2869 = vmatprep.mubr.f32.mxu0 0.0
        %2870 = vmatmul.mubr.f32.gmra.mrb[0].mxu0 %v2674
        %v2871 = vpop.f32.mrb[0].mxu0
        %v2872 = vadd.f32 %v2635, %v2871
        %v2873 = vpop.f32.mrb[0].mxu0
        %2874 = vmatprep.mubr.f32.mxu0 0.0
        %2875 = vmatmul.mubr.f32.gmra.mrb[0].mxu0 %v2677
        %v2876 = vpop.f32.mrb[0].mxu0
        %v2877 = vadd.f32 %v2635, %v2876
        %v2878 = vpop.f32.mrb[0].mxu0
        %2879 = vmatprep.mubr.f32.mxu0 0.0
        %2880 = vmatmul.mubr.f32.gmra.mrb[0].mxu0 %v2680
        %v2881 = vpop.f32.mrb[0].mxu0
        %v2882 = vadd.f32 %v2635, %v2881
        %v2883 = vpop.f32.mrb[0].mxu0
        %2884 = vmatprep.mubr.f32.mxu0 0.0
        %2885 = vmatmul.mubr.f32.gmra.mrb[0].mxu0 %v2683
        %v2886 = vpop.f32.mrb[0].mxu0
        %v2887 = vadd.f32 %v2635, %v2886
        %v2888 = vpop.f32.mrb[0].mxu0
        %2889 = vmatprep.mubr.f32.mxu0 0.0
        %2890 = vmatmul.mubr.f32.gmra.mrb[0].mxu0 %v2686
        %v2891 = vpop.f32.mrb[0].mxu0
        %v2892 = vadd.f32 %v2635, %v2891
        %v2893 = vpop.f32.mrb[0].mxu0
        %2894 = vmatprep.mubr.f32.mxu0 0.0
        %2895 = vmatmul.mubr.f32.gmra.mrb[0].mxu0 %v2689
        %v2896 = vpop.f32.mrb[0].mxu0
        %v2897 = vadd.f32 %v2635, %v2896
        %v2898 = vpop.f32.mrb[0].mxu0
        %2899 = vmatprep.mubr.f32.mxu0 0.0
        %2900 = vmatmul.mubr.f32.gmra.mrb[0].mxu0 %v2692
        %v2901 = vpop.f32.mrb[0].mxu0
        %v2902 = vadd.f32 %v2635, %v2901
        %v2903 = vpop.f32.mrb[0].mxu0
        %2904 = vmatprep.mubr.f32.mxu0 0.0
        %2905 = vmatmul.mubr.f32.gmra.mrb[0].mxu0 %v2695
        %v2906 = vpop.f32.mrb[0].mxu0
        %v2907 = vadd.f32 %v2635, %v2906
        %v2908 = vpop.f32.mrb[0].mxu0
        %2909 = vmatprep.mubr.f32.mxu0 0.0
        %2910 = vmatmul.mubr.f32.gmra.mrb[0].mxu0 %v2698
        %v2911 = vpop.f32.mrb[0].mxu0
        %v2912 = vadd.f32 %v2635, %v2911
        %v2913 = vpop.f32.mrb[0].mxu0
        %2914 = vmatprep.mubr.f32.mxu0 0.0
        %2915 = vmatmul.mubr.f32.gmra.mrb[0].mxu0 %v2701
        %v2916 = vpop.f32.mrb[0].mxu0
        %v2917 = vadd.f32 %v2635, %v2916
        %v2918 = vpop.f32.mrb[0].mxu0
        %2919 = vmatprep.mubr.f32.mxu0 0.0
        %2920 = vmatmul.mubr.f32.gmra.mrb[0].mxu0 %v2704
        %v2921 = vpop.f32.mrb[0].mxu0
        %v2922 = vadd.f32 %v2635, %v2921
        %v2923 = vpop.f32.mrb[0].mxu0
        %2924 = vmatprep.mubr.f32.mxu0 0.0
        %2925 = vmatmul.mubr.f32.gmra.mrb[0].mxu0 %v2707
        %v2926 = vpop.f32.mrb[0].mxu0
        %v2927 = vadd.f32 %v2635, %v2926
        %v2928 = vpop.f32.mrb[0].mxu0
        %2929 = vmatprep.mubr.f32.mxu0 0.0
        %2930 = vmatmul.mubr.f32.gmra.mrb[0].mxu0 %v2710
        %v2931 = vpop.f32.mrb[0].mxu0
        %v2932 = vadd.f32 %v2635, %v2931
        %v2933 = vpop.f32.mrb[0].mxu0
        %2934 = vmatprep.mubr.f32.mxu0 0.0
        %2935 = vmatmul.mubr.f32.gmra.mrb[0].mxu0 %v2713
        %v2936 = vpop.f32.mrb[0].mxu0
        %v2937 = vadd.f32 %v2635, %v2936
        %v2938 = vpop.f32.mrb[0].mxu0
        %2939 = vmatprep.mubr.f32.mxu0 0.0
        %2940 = vmatmul.mubr.f32.gmra.mrb[0].mxu0 %v2716
        %v2941 = vpop.f32.mrb[0].mxu0
        %v2942 = vadd.f32 %v2635, %v2941
        %v2943 = vpop.f32.mrb[0].mxu0
        %2944 = vmatprep.mubr.f32.mxu0 0.0
        %2945 = vmatmul.mubr.f32.gmra.mrb[0].mxu0 %v2719
        %v2946 = vpop.f32.mrb[0].mxu0
        %v2947 = vadd.f32 %v2635, %v2946
        %v2948 = vpop.f32.mrb[0].mxu0
        %2949 = vmatprep.mubr.f32.mxu0 0.0
        %2950 = vmatmul.mubr.f32.gmra.mrb[0].mxu0 %v2722
        %v2951 = vpop.f32.mrb[0].mxu0
        %v2952 = vadd.f32 %v2635, %v2951
        %v2953 = vpop.f32.mrb[0].mxu0
        %2954 = vmatprep.mubr.f32.mxu0 0.0
        %2955 = vmatmul.mubr.f32.gmra.mrb[0].mxu0 %v2725
        %v2956 = vpop.f32.mrb[0].mxu0
        %v2957 = vadd.f32 %v2635, %v2956
        %v2958 = vpop.f32.mrb[0].mxu0
        %2959 = vmatprep.mubr.f32.mxu0 0.0
        %2960 = vmatmul.mubr.f32.gmra.mrb[0].mxu0 %v2728
        %v2961 = vpop.f32.mrb[0].mxu0
        %v2962 = vadd.f32 %v2635, %v2961
        %v2963 = vpop.f32.mrb[0].mxu0
        %2964 = vmatprep.mubr.f32.mxu0 0.0
        %2965 = vmatmul.mubr.f32.gmra.mrb[0].mxu0 %v2731
        %v2966 = vpop.f32.mrb[0].mxu0
        %v2967 = vadd.f32 %v2635, %v2966
        %v2968 = vpop.f32.mrb[0].mxu0
        %2969 = vmatprep.mubr.f32.mxu0 0.0
        %2970 = vmatmul.mubr.f32.gmra.mrb[0].mxu0 %v2734
        %v2971 = vpop.f32.mrb[0].mxu0
        %v2972 = vadd.f32 %v2635, %v2971
        %v2973 = vpop.f32.mrb[0].mxu0
        %2974 = vmatprep.mubr.f32.mxu0 0.0
        %2975 = vmatmul.mubr.f32.gmra.mrb[0].mxu0 %v2737
        %v2976 = vpop.f32.mrb[0].mxu0
        %v2977 = vadd.f32 %v2635, %v2976
        %v2978 = vpop.f32.mrb[0].mxu0
        %2979 = vmatprep.mubr.f32.mxu0 0.0
        %2980 = vmatmul.mubr.f32.gmra.mrb[0].mxu0 %v2740
        %v2981 = vpop.f32.mrb[0].mxu0
        %v2982 = vadd.f32 %v2635, %v2981
        %v2983 = vpop.f32.mrb[0].mxu0
        %2984 = vmatprep.mubr.f32.mxu0 0.0
        %2985 = vmatmul.mubr.f32.gmra.mrb[0].mxu0 %v2743
        %v2986 = vpop.f32.mrb[0].mxu0
        %v2987 = vadd.f32 %v2635, %v2986
        %v2988 = vpop.f32.mrb[0].mxu0
        %2989 = vdwg.mxu0
        %vm2990 = vcmask 1044480
        %v2991 = vrot.slane %v294, 3
        %v2992 = vrot.slane %v295, 3
        %v2993 = vsel %vm2990, %v2991, %v2992
        %v2994 = vrot.slane %v296, 3
        %v2995 = vsel %vm2990, %v2992, %v2994
        %v2996 = vrot.slane %v297, 3
        %v2997 = vsel %vm2990, %v2994, %v2996
        %v2998 = vrot.slane %v298, 3
        %v2999 = vsel %vm2990, %v2996, %v2998
        %v3000 = vrot.slane %v299, 3
        %v3001 = vsel %vm2990, %v2998, %v3000
        %v3002 = vrot.slane %v300, 3
        %v3003 = vsel %vm2990, %v3000, %v3002
        %v3004 = vrot.slane %v301, 3
        %v3005 = vsel %vm2990, %v3002, %v3004
        %v3006 = vrot.slane %v302, 3
        %v3007 = vsel %vm2990, %v3004, %v3006
        %v3008 = vrot.slane %v303, 3
        %v3009 = vsel %vm2990, %v3006, %v3008
        %v3010 = vrot.slane %v304, 3
        %v3011 = vsel %vm2990, %v3008, %v3010
        %v3012 = vrot.slane %v305, 3
        %v3013 = vsel %vm2990, %v3010, %v3012
        %v3014 = vrot.slane %v306, 3
        %v3015 = vsel %vm2990, %v3012, %v3014
        %v3016 = vrot.slane %v307, 3
        %v3017 = vsel %vm2990, %v3014, %v3016
        %v3018 = vrot.slane %v308, 3
        %v3019 = vsel %vm2990, %v3016, %v3018
        %v3020 = vrot.slane %v309, 3
        %v3021 = vsel %vm2990, %v3018, %v3020
        %v3022 = vrot.slane %v310, 3
        %v3023 = vsel %vm2990, %v3020, %v3022
        %v3024 = vrot.slane %v311, 3
        %v3025 = vsel %vm2990, %v3022, %v3024
        %v3026 = vrot.slane %v312, 3
        %v3027 = vsel %vm2990, %v3024, %v3026
        %v3028 = vrot.slane %v313, 3
        %v3029 = vsel %vm2990, %v3026, %v3028
        %v3030 = vrot.slane %v314, 3
        %v3031 = vsel %vm2990, %v3028, %v3030
        %v3032 = vrot.slane %v315, 3
        %v3033 = vsel %vm2990, %v3030, %v3032
        %v3034 = vrot.slane %v316, 3
        %v3035 = vsel %vm2990, %v3032, %v3034
        %v3036 = vrot.slane %v317, 3
        %v3037 = vsel %vm2990, %v3034, %v3036
        %v3038 = vrot.slane %v318, 3
        %v3039 = vsel %vm2990, %v3036, %v3038
        %v3040 = vrot.slane %v319, 3
        %v3041 = vsel %vm2990, %v3038, %v3040
        %v3042 = vrot.slane %v320, 3
        %v3043 = vsel %vm2990, %v3040, %v3042
        %v3044 = vrot.slane %v321, 3
        %v3045 = vsel %vm2990, %v3042, %v3044
        %v3046 = vrot.slane %v322, 3
        %v3047 = vsel %vm2990, %v3044, %v3046
        %v3048 = vrot.slane %v323, 3
        %v3049 = vsel %vm2990, %v3046, %v3048
        %v3050 = vrot.slane %v324, 3
        %v3051 = vsel %vm2990, %v3048, %v3050
        %v3052 = vrot.slane %v325, 3
        %v3053 = vsel %vm2990, %v3050, %v3052
        %v3054 = vrot.slane %v326, 3
        %v3055 = vsel %vm2990, %v3052, %v3054
        %v3056 = vrot.slane %v327, 3
        %v3057 = vsel %vm2990, %v3054, %v3056
        %v3058 = vrot.slane %v328, 3
        %v3059 = vsel %vm2990, %v3056, %v3058
        %v3060 = vrot.slane %v329, 3
        %v3061 = vsel %vm2990, %v3058, %v3060
        %v3062 = vrot.slane %v330, 3
        %v3063 = vsel %vm2990, %v3060, %v3062
        %v3100 = vadd.f32 %v2812, %v2993
        %v3101 = vadd.f32 %v2817, %v2995
        %v3102 = vadd.f32 %v2822, %v2997
        %v3103 = vadd.f32 %v2827, %v2999
        %v3104 = vadd.f32 %v2832, %v3001
        %v3105 = vadd.f32 %v2837, %v3003
        %v3106 = vadd.f32 %v2842, %v3005
        %v3107 = vadd.f32 %v2847, %v3007
        %v3108 = vadd.f32 %v2852, %v3009
        %v3109 = vadd.f32 %v2857, %v3011
        %v3110 = vadd.f32 %v2862, %v3013
        %v3111 = vadd.f32 %v2867, %v3015
        %v3112 = vadd.f32 %v2872, %v3017
        %v3113 = vadd.f32 %v2877, %v3019
        %v3114 = vadd.f32 %v2882, %v3021
        %v3115 = vadd.f32 %v2887, %v3023
        %v3116 = vadd.f32 %v2892, %v3025
        %v3117 = vadd.f32 %v2897, %v3027
        %v3118 = vadd.f32 %v2902, %v3029
        %v3119 = vadd.f32 %v2907, %v3031
        %v3120 = vadd.f32 %v2912, %v3033
        %v3121 = vadd.f32 %v2917, %v3035
        %v3122 = vadd.f32 %v2922, %v3037
        %v3123 = vadd.f32 %v2927, %v3039
        %v3124 = vadd.f32 %v2932, %v3041
        %v3125 = vadd.f32 %v2937, %v3043
        %v3126 = vadd.f32 %v2942, %v3045
        %v3127 = vadd.f32 %v2947, %v3047
        %v3128 = vadd.f32 %v2952, %v3049
        %v3129 = vadd.f32 %v2957, %v3051
        %v3130 = vadd.f32 %v2962, %v3053
        %v3131 = vadd.f32 %v2967, %v3055
        %v3132 = vadd.f32 %v2972, %v3057
        %v3133 = vadd.f32 %v2977, %v3059
        %v3134 = vadd.f32 %v2982, %v3061
        %v3135 = vadd.f32 %v2987, %v3063
        %3136 = vxpose.xlu0.b32.start [1/16] %v3100, 128
        %3137 = vxpose.xlu0.b32.cont [2/16] %v3101, 128
        %3138 = vxpose.xlu0.b32.cont [3/16] %v3102, 128
        %3139 = vxpose.xlu0.b32.cont [4/16] %v3103, 128
        %3140 = vxpose.xlu0.b32.cont [5/16] %v3104, 128
        %3141 = vxpose.xlu0.b32.cont [6/16] %v3105, 128
        %3142 = vxpose.xlu0.b32.cont [7/16] %v3106, 128
        %3143 = vxpose.xlu0.b32.cont [8/16] %v3107, 128
        %3144 = vxpose.xlu0.b32.cont [9/16] %v3108, 128
        %3145 = vxpose.xlu0.b32.cont [10/16] %v3109, 128
        %3146 = vxpose.xlu0.b32.cont [11/16] %v3110, 128
        %3147 = vxpose.xlu0.b32.cont [12/16] %v3111, 128
        %3148 = vxpose.xlu0.b32.cont [13/16] %v3112, 128
        %3149 = vxpose.xlu0.b32.cont [14/16] %v3113, 128
        %3150 = vxpose.xlu0.b32.cont [15/16] %v3114, 128
        %3151 = vxpose.xlu0.b32.end [16/16] %v3115, 128
        %v3152 = vpop.trf.xlu0
        %v3153 = vpop.trf.xlu0
        %v3154 = vpop.trf.xlu0
        %v3155 = vpop.trf.xlu0
        %v3156 = vpop.trf.xlu0
        %v3157 = vpop.trf.xlu0
        %v3158 = vpop.trf.xlu0
        %v3159 = vpop.trf.xlu0
        %v3160 = vpop.trf.xlu0
        %v3161 = vpop.trf.xlu0
        %v3162 = vpop.trf.xlu0
        %v3163 = vpop.trf.xlu0
        %v3164 = vpop.trf.xlu0
        %v3165 = vpop.trf.xlu0
        %v3166 = vpop.trf.xlu0
        %v3167 = vpop.trf.xlu0
        %3168 = vxpose.xlu0.b32.start [1/16] %v3116, 128
        %3169 = vxpose.xlu0.b32.cont [2/16] %v3117, 128
        %3170 = vxpose.xlu0.b32.cont [3/16] %v3118, 128
        %3171 = vxpose.xlu0.b32.cont [4/16] %v3119, 128
        %3172 = vxpose.xlu0.b32.cont [5/16] %v3120, 128
        %3173 = vxpose.xlu0.b32.cont [6/16] %v3121, 128
        %3174 = vxpose.xlu0.b32.cont [7/16] %v3122, 128
        %3175 = vxpose.xlu0.b32.cont [8/16] %v3123, 128
        %3176 = vxpose.xlu0.b32.cont [9/16] %v3124, 128
        %3177 = vxpose.xlu0.b32.cont [10/16] %v3125, 128
        %3178 = vxpose.xlu0.b32.cont [11/16] %v3126, 128
        %3179 = vxpose.xlu0.b32.cont [12/16] %v3127, 128
        %3180 = vxpose.xlu0.b32.cont [13/16] %v3128, 128
        %3181 = vxpose.xlu0.b32.cont [14/16] %v3129, 128
        %3182 = vxpose.xlu0.b32.cont [15/16] %v3130, 128
        %3183 = vxpose.xlu0.b32.end [16/16] %v3131, 128
        %v3184 = vpop.trf.xlu0
        %v3185 = vpop.trf.xlu0
        %v3186 = vpop.trf.xlu0
        %v3187 = vpop.trf.xlu0
        %v3188 = vpop.trf.xlu0
        %v3189 = vpop.trf.xlu0
        %v3190 = vpop.trf.xlu0
        %v3191 = vpop.trf.xlu0
        %v3192 = vpop.trf.xlu0
        %v3193 = vpop.trf.xlu0
        %v3194 = vpop.trf.xlu0
        %v3195 = vpop.trf.xlu0
        %v3196 = vpop.trf.xlu0
        %v3197 = vpop.trf.xlu0
        %v3198 = vpop.trf.xlu0
        %v3199 = vpop.trf.xlu0
        %3200 = vxpose.xlu0.b32.start [1/16] %v3132, 128
        %3201 = vxpose.xlu0.b32.cont [2/16] %v3133, 128
        %3202 = vxpose.xlu0.b32.cont [3/16] %v3134, 128
        %3203 = vxpose.xlu0.b32.cont [4/16] %v3135, 128
        %3204 = vxpose.xlu0.b32.cont [5/16] 0.0, 128
        %3205 = vxpose.xlu0.b32.cont [6/16] 0.0, 128
        %3206 = vxpose.xlu0.b32.cont [7/16] 0.0, 128
        %3207 = vxpose.xlu0.b32.cont [8/16] 0.0, 128
        %3208 = vxpose.xlu0.b32.cont [9/16] 0.0, 128
        %3209 = vxpose.xlu0.b32.cont [10/16] 0.0, 128
        %3210 = vxpose.xlu0.b32.cont [11/16] 0.0, 128
        %3211 = vxpose.xlu0.b32.cont [12/16] 0.0, 128
        %3212 = vxpose.xlu0.b32.cont [13/16] 0.0, 128
        %3213 = vxpose.xlu0.b32.cont [14/16] 0.0, 128
        %3214 = vxpose.xlu0.b32.cont [15/16] 0.0, 128
        %3215 = vxpose.xlu0.b32.end [16/16] 0.0, 128
        %v3216 = vpop.trf.xlu0
        %v3217 = vpop.trf.xlu0
        %v3218 = vpop.trf.xlu0
        %v3219 = vpop.trf.xlu0
        %v3220 = vpop.trf.xlu0
        %v3221 = vpop.trf.xlu0
        %v3222 = vpop.trf.xlu0
        %v3223 = vpop.trf.xlu0
        %v3224 = vpop.trf.xlu0
        %v3225 = vpop.trf.xlu0
        %v3226 = vpop.trf.xlu0
        %v3227 = vpop.trf.xlu0
        %v3228 = vpop.trf.xlu0
        %v3229 = vpop.trf.xlu0
        %v3230 = vpop.trf.xlu0
        %v3231 = vpop.trf.xlu0
        %v3234 = vcombine.low %v3152, %v3184
        %3236 = vst [vmem:[%s285] sm:$0xff] %v3234
        %vm3237 = vcmask 257024
        %3238 = vst.msk [vmem:[%s285 + $0x8] sm:$0xf] %vm3237, %v3216
        %s3239 = sand.u32 %s195, 1
        %s3240 = scalar_lea.sflag [#allocation4], %s3239
        %s3241 = sand.u32 %s195, 1
        %s3242 = smul.addr %s3241, 12
        %s3243 = scalar_lea.vmem [#allocation3], %s3242
        // Predicated region
        $region49: #{tpu_custom_call.1} parent=47 // pred_check
          %p3244 = pneg %p205
        $region50: #{tpu_custom_call.1} parent=47 // pred_check_branch
          %3246 = sbr.rel (%p3244) target = $region52
        $region51: #{tpu_custom_call.1} parent=47 // pred_region
          %s3247 = smul.u32 3, %s26
          %s3249 = ssub.s32 192, 192
          %3250 = vsyncadd %s3240, %s3249
          %s3251 = smul.addr %s25, 3
          %s3252 = sadd.s32 %s3247, %s3251
          %s3253 = smul.addr %s3252, 64
          %s3254 = scalar_lea.hbm %s7, %s3253
          %s3256 = sshll.u32 %s3243, 4
          %s3257 = int_to_ptr.vmem [resolvable:$true] %s3256
          %3259 = dma.vmem_to_hbm [thread:$0]  %s3257, 192, %s3254, %s3240
        $region52: #{tpu_custom_call.1} parent=47 // pred_fallthru
          _
      $region48: #{tpu_custom_call.1} parent=5 // pred_fallthru
        _
      %p3260 = scmp.le.s32.totalorder 2, %s16
      // Predicated region
      $region53: #{tpu_custom_call.1} parent=5 // pred_check
        %p3261 = pneg %p3260
      $region54: #{tpu_custom_call.1} parent=5 // pred_check_branch
        %3263 = sbr.rel (%p3261) target = $region56
      $region55: #{tpu_custom_call.1} parent=5 // pred_region
        %s3264 = ssub.s32 %s16, 2
        // Predicated region
        $region57: #{tpu_custom_call.1} parent=55 // pred_check
          %p3265 = pneg %p211
        $region58: #{tpu_custom_call.1} parent=55 // pred_check_branch
          %3267 = sbr.rel (%p3265) target = $region60
        $region59: #{tpu_custom_call.1} parent=55 // pred_region
          %s3268 = sand.u32 %s196, 1
          %s3269 = scalar_lea.sflag [#allocation4], %s3268
          %s3270 = sand.u32 %s196, 1
          %s3271 = smul.addr %s3270, 12
          %s3272 = scalar_lea.vmem [#allocation3], %s3271
          %3273 = dma.done %s3269, 192
        $region60: #{tpu_custom_call.1} parent=55 // pred_fallthru
          _
      $region56: #{tpu_custom_call.1} parent=5 // pred_fallthru
        _
    $region6: #{tpu_custom_call.1} parent=1 // loop_footer
      %s20 = sadd.s32 1, %s16
    $region7: #{tpu_custom_call.1} parent=1 // loop_footer_branch
      %15 = sbr.rel target = $region3
    $region8: #{tpu_custom_call.1} parent=1 // loop_exit
      _
    %3274 = vsyncpa [#allocation4], 1
    %s3275 = scalar_lea.sflag [#allocation4], 1
    %3276 = vsyncpa %s3275, 1

</llo_original>
